<compile_context>
chip_gen: v7x
topology: tpu7x:2x2x1
jax: 0.10.0
libtpu: 0.0.40
codegen_flags: <defaults>
</compile_context>

<pallas_src>
import jax
import jax.numpy as jnp
from jax import lax
from jax.experimental import pallas as pl
from jax.experimental.pallas import tpu as pltpu

D_WORD = 768      # BERT word-embedding width (hard-wired in the module)
D_HID = 1024      # recipe_embedding hidden width (hard-wired in the module)
EMB_DIM = 128     # opts.embDim (lane-aligned)
BN_EPS = 1e-5     # PyTorch BatchNorm1d default eps
NORM_EPS = 1e-12  # norm() clamp
UNROLL = 8        # manual unroll of the per-token issue/wait loops


def _round_up(x, m):
    return (x + m - 1) // m * m


def _make_kernel(TB, TL):
    """Kernel for a (TB batch rows x TL tokens) grid tile.  TB, TL multiples of 8."""

    def kernel(ids_ref,                       # SMEM (B_pad, L_pad) int32   (prefetch)
               tcnt_ref,                      # SMEM (B_pad * n_l,) int32   (prefetch)
               tbl_ref,                       # HBM  (V+1, 768) f32         (pl.ANY)
               rcnt_ref,                      # VMEM (TB, 1) f32  per-row valid counts
               bn1s_ref, bn1b_ref,            # VMEM (1, 768) resident
               w1_ref, b1_ref,                # VMEM (768, 1024), (1, 1024) resident
               w2_ref, b2_ref,                # VMEM (1024, 128), (1, 128) resident
               bn2s_ref, bn2b_ref,            # VMEM (1, 128) resident
               out_ref,                       # VMEM (TB, 128)
               stage_ref,                     # VMEM (2, TL, 768) gather ping-pong
               acc_ref,                       # VMEM (TB, 768) masked-sum accumulator
               sem):                          # DMA sems (2,), one per staging slot
        bi = pl.program_id(0)
        li = pl.program_id(1)
        n_l = pl.num_programs(1)
        l_base = li * TL

        # ---- init accumulator at the first seq tile of every batch tile ------
        @pl.when(li == 0)
        def _init():
            acc_ref[...] = jnp.zeros_like(acc_ref)

        # hoisted constants (don't re-broadcast inside the loops)
        ones_row = jnp.ones((1, TL), jnp.float32)

        def tile_count(r):
            # number of valid (id > 0) tokens of batch row r inside this seq tile
            return tcnt_ref[(bi * TB + r) * n_l + li]

        def issue_row(r, slot):
            """Start TL row-gather DMAs for batch row r into stage_ref[slot].

            Padded positions were remapped (wrapper) to the all-zero table row, so
            every position is fetched with no per-token branch.  Fully padded tiles
            are skipped entirely."""
            gb = bi * TB + r

            @pl.when(tile_count(r) > 0)
            def _issue():
                def chunk(cc, c):
                    base = pl.multiple_of(cc * UNROLL, UNROLL)
                    for u in range(UNROLL):                       # static unroll
                        tok = ids_ref[gb, l_base + base + u]
                        pltpu.make_async_copy(
                            tbl_ref.at[pl.ds(tok, 1)],
                            stage_ref.at[slot, pl.ds(base + u, 1)],
                            sem.at[slot]).start()
                    return c
                lax.fori_loop(0, TL // UNROLL, chunk, 0)

        def consume_row(r, slot):
            """Wait batch row r's DMAs, then masked-sum via one MXU matmul."""
            @pl.when(tile_count(r) > 0)
            def _consume():
                def chunk(cc, c):
                    for _ in range(UNROLL):                       # static unroll
                        # Only the semaphore and the byte count matter for wait();
                        # shape (1, 768) matches every copy started above exactly.
                        pltpu.make_async_copy(
                            tbl_ref.at[pl.ds(0, 1)],
                            stage_ref.at[slot, pl.ds(0, 1)],
                            sem.at[slot]).wait()
                    return c
                lax.fori_loop(0, TL // UNROLL, chunk, 0)

                # masked sum of this row's tile on the MXU (padded rows are zeros)
                partial = jnp.dot(ones_row, stage_ref[slot],
                                  preferred_element_type=jnp.float32)
                acc_ref[pl.ds(r, 1), :] = acc_ref[pl.ds(r, 1), :] + partial

        # ---- row-level double-buffered gather: issue row lb+1, consume row lb ----
        issue_row(0, 0)                         # prime slot 0

        def row_body(lb, c):
            slot = lb % 2

            @pl.when(lb + 1 < TB)
            def _prefetch():                    # issue before wait: keeps ~2*TL DMAs
                issue_row(lb + 1, 1 - slot)     # in flight, scalar reads before waits

            consume_row(lb, slot)
            return c

        lax.fori_loop(0, TB, row_body, 0)

        # ---- epilogue: masked mean + MLP head + L2 norm -----------------------
        @pl.when(li == n_l - 1)
        def _finish():
            # masked mean; counts clamped >= 1 (original code NaNs on all-pad rows)
            inv = 1.0 / jnp.maximum(rcnt_ref[...], 1.0)            # (TB, 1)
            pooled = acc_ref[...] * inv                            # (TB, 768)

            # recipe_embedding: BN(768) -> Linear(768, 1024) -> Tanh
            h = pooled * bn1s_ref[...] + bn1b_ref[...]
            h = jnp.dot(h, w1_ref[...], preferred_element_type=jnp.float32) + b1_ref[...]
            h = jnp.tanh(h)
            # align: Linear(1024, embDim)
            h = jnp.dot(h, w2_ref[...], preferred_element_type=jnp.float32) + b2_ref[...]
            # align_rec: BN(embDim) -> Tanh
            h = jnp.tanh(h * bn2s_ref[...] + bn2b_ref[...])
            # L2 normalize: rsqrt (EUP); clamping ss at eps^2 == clamping the norm at eps
            ss = jnp.sum(h * h, axis=1, keepdims=True)
            out_ref[...] = h * lax.rsqrt(jnp.maximum(ss, jnp.float32(NORM_EPS * NORM_EPS)))

    return kernel


def food_space_text_encoder(ids, params, *, batch_tile=128, seq_tile=128):
    """ids: (B, L) int32 token ids -> (B, EMB_DIM) float32 unit-norm embeddings."""
    B, L = ids.shape

    # ---- tile sizes -------------------------------------------------------
    B8 = _round_up(B, 8)
    TB = _round_up(min(batch_tile, B8), 8)
    if B8 // TB < 2 and B8 >= 16:      # keep >= 2 batch tiles for v7x megacore
        TB = _round_up(B8 // 2, 8)
    B_pad = _round_up(B, TB)
    TL = _round_up(min(seq_tile, L), 8)
    L_pad = _round_up(L, TL)
    n_b = B_pad // TB
    n_l = L_pad // TL

    # ---- padding, masking and pad-token remap -----------------------------
    ids32 = ids.astype(jnp.int32)
    ids_p = jnp.zeros((B_pad, L_pad), jnp.int32).at[:B, :L].set(ids32)
    valid = ids_p > 0
    V = params["emb_table"].shape[0]
    # remap every invalid (id <= 0) token to the all-zero row appended below so the
    # kernel's unmasked ones-matmul reproduces the masked sum exactly.
    ids_remap = jnp.where(valid, ids_p, jnp.int32(V))
    # NOTE: in production append the zero row to the table once, outside the step.
    tbl_aug = jnp.concatenate(
        [params["emb_table"].astype(jnp.float32),
         jnp.zeros((1, D_WORD), jnp.float32)], axis=0)

    # per-(row, seq-tile) valid counts -> whole-tile skip inside the kernel
    tile_cnt = (valid.astype(jnp.int32)
                .reshape(B_pad, n_l, TL).sum(axis=2).reshape(-1))
    # per-row valid counts (masked-mean denominator), vectorized divide in-kernel
    row_cnt = valid.astype(jnp.float32).sum(axis=1, keepdims=True)   # (B_pad, 1)

    # ---- fold eval-mode BatchNorm running stats into scale & bias ----------
    bn1s = (params["bn1_gamma"] / jnp.sqrt(params["bn1_var"] + BN_EPS)).reshape(1, D_WORD)
    bn1b = params["bn1_beta"].reshape(1, D_WORD) - params["bn1_mean"].reshape(1, D_WORD) * bn1s
    bn2s = (params["bn2_gamma"] / jnp.sqrt(params["bn2_var"] + BN_EPS)).reshape(1, EMB_DIM)
    bn2b = params["bn2_beta"].reshape(1, EMB_DIM) - params["bn2_mean"].reshape(1, EMB_DIM) * bn2s

    const = lambda bi, li, *_: (0, 0)          # weights resident across the grid

    grid_spec = pltpu.PrefetchScalarGridSpec(
        num_scalar_prefetch=2,                 # ids + per-tile counts -> SMEM
        grid=(n_b, n_l),
        in_specs=[
            pl.BlockSpec(memory_space=pl.ANY),                    # emb table (HBM)
            pl.BlockSpec((TB, 1), lambda bi, li, *_: (bi, 0)),    # per-row counts
            pl.BlockSpec((1, D_WORD), const),                     # bn1 scale
            pl.BlockSpec((1, D_WORD), const),                     # bn1 bias
            pl.BlockSpec((D_WORD, D_HID), const),                 # w1
            pl.BlockSpec((1, D_HID), const),                      # b1
            pl.BlockSpec((D_HID, EMB_DIM), const),                # w2
            pl.BlockSpec((1, EMB_DIM), const),                    # b2
            pl.BlockSpec((1, EMB_DIM), const),                    # bn2 scale
            pl.BlockSpec((1, EMB_DIM), const),                    # bn2 bias
        ],
        out_specs=pl.BlockSpec((TB, EMB_DIM), lambda bi, li, *_: (bi, 0)),
        scratch_shapes=[
            pltpu.VMEM((2, TL, D_WORD), jnp.float32),   # gather ping-pong staging
            pltpu.VMEM((TB, D_WORD), jnp.float32),      # masked-sum accumulator
            pltpu.SemaphoreType.DMA((2,)),              # one DMA sem per staging slot
        ],
    )

    out = pl.pallas_call(
        _make_kernel(TB, TL),
        grid_spec=grid_spec,
        out_shape=jax.ShapeDtypeStruct((B_pad, EMB_DIM), jnp.float32),
        compiler_params=pltpu.CompilerParams(
            dimension_semantics=("parallel", "arbitrary"),
            vmem_limit_bytes=32 * 1024 * 1024,          # ~9 MiB actually used
        ),
    )(ids_remap, tile_cnt, tbl_aug, row_cnt, bn1s, bn1b,
      params["w1"], params["b1"].reshape(1, D_HID),
      params["w2"], params["b2"].reshape(1, EMB_DIM),
      bn2s, bn2b)
    return out[:B]


def _reference(ids, params):
    """Pure-JAX reference of the same forward (for correctness check)."""
    emb = jnp.take(params["emb_table"], ids, axis=0).astype(jnp.float32)
    mask = (ids > 0).astype(jnp.float32)
    counts = jnp.maximum(jnp.sum(mask, axis=1, keepdims=True), 1.0)
    pooled = jnp.sum(emb * mask[:, :, None], axis=1) / counts
    bn1s = params["bn1_gamma"] / jnp.sqrt(params["bn1_var"] + BN_EPS)
    bn1b = params["bn1_beta"] - params["bn1_mean"] * bn1s
    h = pooled * bn1s + bn1b
    h = jnp.tanh(h @ params["w1"] + params["b1"])
    h = h @ params["w2"] + params["b2"]
    bn2s = params["bn2_gamma"] / jnp.sqrt(params["bn2_var"] + BN_EPS)
    bn2b = params["bn2_beta"] - params["bn2_mean"] * bn2s
    h = jnp.tanh(h * bn2s + bn2b)
    n = jnp.maximum(jnp.sqrt(jnp.sum(h * h, axis=1, keepdims=True)), NORM_EPS)
    return h / n


def init_params(key, vocab_size):
    ks = jax.random.split(key, 12)
    f32 = jnp.float32
    return {
        "emb_table": 0.02 * jax.random.normal(ks[0], (vocab_size, D_WORD), f32),
        # BatchNorm1d(768)
        "bn1_gamma": 1.0 + 0.1 * jax.random.normal(ks[1], (D_WORD,), f32),
        "bn1_beta": 0.1 * jax.random.normal(ks[2], (D_WORD,), f32),
        "bn1_mean": 0.05 * jax.random.normal(ks[3], (D_WORD,), f32),
        "bn1_var": 1.0 + 0.1 * jnp.abs(jax.random.normal(ks[4], (D_WORD,), f32)),
        # Linear(768, 1024)
        "w1": 0.02 * jax.random.normal(ks[5], (D_WORD, D_HID), f32),
        "b1": 0.02 * jax.random.normal(ks[6], (D_HID,), f32),
        # align: Linear(1024, embDim)
        "w2": 0.02 * jax.random.normal(ks[7], (D_HID, EMB_DIM), f32),
        "b2": 0.02 * jax.random.normal(ks[8], (EMB_DIM,), f32),
        # align_rec: BatchNorm1d(embDim)
        "bn2_gamma": 1.0 + 0.1 * jax.random.normal(ks[9], (EMB_DIM,), f32),
        "bn2_beta": 0.1 * jax.random.normal(ks[10], (EMB_DIM,), f32),
        "bn2_mean": 0.05 * jax.random.normal(ks[11], (EMB_DIM,), f32),
        "bn2_var": jnp.ones((EMB_DIM,), f32),
    }


if __name__ == "__main__":
    key = jax.random.PRNGKey(0)
    k_ids, k_params = jax.random.split(key)

    B, L, V = 10, 20, 64
    ids = jax.random.randint(k_ids, (B, L), 1, V, dtype=jnp.int32)
    # zero-pad some positions (and one full row) to exercise mask / tile-skip / clamp
    ids = ids.at[0, -3:].set(0)
    ids = ids.at[1, 5:].set(0)
    ids = ids.at[2, :].set(0)

    params = init_params(k_params, V)
    ref = jax.block_until_ready(_reference(ids, params))

    # config 1: small tiles -> multi-step sequence reduction (n_l = 3), two batch
    # tiles (B=10 -> B_pad=16, n_b=2), tile-level padding skips exercised.
    out_a = jax.block_until_ready(
        food_space_text_encoder(ids, params, batch_tile=8, seq_tile=8))
    # config 2: default tiles -> single seq tile (init + finalize in one grid step),
    # batch tile auto-capped so n_b stays >= 2.
    out_b = jax.block_until_ready(food_space_text_encoder(ids, params))

    for out in (out_a, out_b):
        assert out.shape == (B, EMB_DIM)
        assert bool(jnp.all(jnp.isfinite(out)))
        err = float(jnp.max(jnp.abs(out - ref)))
        assert bool(jnp.allclose(out, ref, atol=1e-4, rtol=1e-4)), err

    print("KERNEL_OK")
</pallas_src>

<mosaic_0001>
module attributes {stable_mosaic.version = 11 : i64} {
  func.func @kernel(%arg0: i32, %arg1: i32, %arg2: memref<16x24xi32, #tpu.memory_space<smem>>, %arg3: memref<48xi32, #tpu.memory_space<smem>>, %arg4: memref<65x768xf32, #tpu.memory_space<any>>, %arg5: memref<8x1xf32, #tpu.memory_space<vmem>>, %arg6: memref<1x768xf32, #tpu.memory_space<vmem>>, %arg7: memref<1x768xf32, #tpu.memory_space<vmem>>, %arg8: memref<768x1024xf32, #tpu.memory_space<vmem>>, %arg9: memref<1x1024xf32, #tpu.memory_space<vmem>>, %arg10: memref<1024x128xf32, #tpu.memory_space<vmem>>, %arg11: memref<1x128xf32, #tpu.memory_space<vmem>>, %arg12: memref<1x128xf32, #tpu.memory_space<vmem>>, %arg13: memref<1x128xf32, #tpu.memory_space<vmem>>, %arg14: memref<8x128xf32, #tpu.memory_space<vmem>>, %arg15: memref<2x8x768xf32, #tpu.memory_space<vmem>>, %arg16: memref<8x768xf32, #tpu.memory_space<vmem>>, %arg17: memref<2x!tpu.dma_semaphore, #tpu.memory_space<semaphore_mem>>) attributes {dimension_semantics = [#tpu.dimension_semantics<parallel>, #tpu.dimension_semantics<arbitrary>], iteration_bounds = array<i64: 2, 3>, scalar_prefetch = 2 : i64, scratch_operands = 3 : i64, tpu.core_type = #tpu.core_type<tc>, window_params = [{}, {transform_indices = @transform_1, window_bounds = array<i64: 8, 1>}, {pipeline_mode = #tpu.pipeline_mode<synchronous>, transform_indices = @transform_2, window_bounds = array<i64: 1, 768>}, {pipeline_mode = #tpu.pipeline_mode<synchronous>, transform_indices = @transform_3, window_bounds = array<i64: 1, 768>}, {pipeline_mode = #tpu.pipeline_mode<synchronous>, transform_indices = @transform_4, window_bounds = array<i64: 768, 1024>}, {pipeline_mode = #tpu.pipeline_mode<synchronous>, transform_indices = @transform_5, window_bounds = array<i64: 1, 1024>}, {pipeline_mode = #tpu.pipeline_mode<synchronous>, transform_indices = @transform_6, window_bounds = array<i64: 1024, 128>}, {pipeline_mode = #tpu.pipeline_mode<synchronous>, transform_indices = @transform_7, window_bounds = array<i64: 1, 128>}, {pipeline_mode = #tpu.pipeline_mode<synchronous>, transform_indices = @transform_8, window_bounds = array<i64: 1, 128>}, {pipeline_mode = #tpu.pipeline_mode<synchronous>, transform_indices = @transform_9, window_bounds = array<i64: 1, 128>}, {transform_indices = @transform_10, window_bounds = array<i64: 8, 128>}]} {
    %c8_i32 = arith.constant 8 : i32
    %0 = arith.muli %arg1, %c8_i32 : i32
    %c0_i32 = arith.constant 0 : i32
    %1 = arith.cmpi eq, %arg1, %c0_i32 : i32
    %2 = arith.extui %1 : i1 to i32
    %c0_i32_0 = arith.constant 0 : i32
    %3 = arith.cmpi ne, %2, %c0_i32_0 : i32
    scf.if %3 {
      %cst_11 = arith.constant 0.000000e+00 : f32
      %20 = vector.broadcast %cst_11 : f32 to vector<8x768xf32>
      %c0 = arith.constant 0 : index
      %c0_12 = arith.constant 0 : index
      %21 = vector.load %arg16[%c0, %c0_12] : memref<8x768xf32, #tpu.memory_space<vmem>>, vector<8x768xf32>
      tpu.vector_store %arg16[%c0, %c0_12], %20 {strides = array<i32>} : memref<8x768xf32, #tpu.memory_space<vmem>>, vector<8x768xf32>,
    } else {
    }
    %cst = arith.constant 1.000000e+00 : f32
    %4 = vector.broadcast %cst : f32 to vector<1x8xf32>
    %c8_i32_1 = arith.constant 8 : i32
    %5 = arith.muli %arg0, %c8_i32_1 : i32
    %c0_i32_2 = arith.constant 0 : i32
    %6 = arith.addi %5, %c0_i32_2 : i32
    %c8_i32_3 = arith.constant 8 : i32
    %7 = arith.muli %arg0, %c8_i32_3 : i32
    %c0_i32_4 = arith.constant 0 : i32
    %8 = arith.addi %7, %c0_i32_4 : i32
    %c3_i32 = arith.constant 3 : i32
    %9 = arith.muli %8, %c3_i32 : i32
    %10 = arith.addi %9, %arg1 : i32
    %11 = arith.index_cast %10 : i32 to index
    %12 = memref.load %arg3[%11] : memref<48xi32, #tpu.memory_space<smem>>
    %c0_i32_5 = arith.constant 0 : i32
    %13 = arith.cmpi sgt, %12, %c0_i32_5 : i32
    %14 = arith.extui %13 : i1 to i32
    %c0_i32_6 = arith.constant 0 : i32
    %15 = arith.cmpi ne, %14, %c0_i32_6 : i32
    scf.if %15 {
      %c0_i32_11 = arith.constant 0 : i32
      %c8_i32_12 = arith.constant 8 : i32
      %20 = arith.muli %c0_i32_11, %c8_i32_12 : i32
      %21 = tpu.assume_multiple %20, 8 : i32
      %22 = arith.addi %0, %21 : i32
      %c0_i32_13 = arith.constant 0 : i32
      %23 = arith.addi %22, %c0_i32_13 : i32
      %24 = arith.index_cast %6 : i32 to index
      %25 = arith.index_cast %23 : i32 to index
      %26 = memref.load %arg2[%24, %25] : memref<16x24xi32, #tpu.memory_space<smem>>
      %c0_i32_14 = arith.constant 0 : i32
      %27 = arith.addi %21, %c0_i32_14 : i32
      %c0_i32_15 = arith.constant 0 : i32
      %c0_i32_16 = arith.constant 0 : i32
      %c0_i32_17 = arith.constant 0 : i32
      %28 = tpu.memref_slice %arg4[%26, %c0_i32_17] : memref<65x768xf32, #tpu.memory_space<any>> -> memref<1x768xf32, #tpu.memory_space<any>>
      %c0_i32_18 = arith.constant 0 : i32
      %29 = tpu.memref_slice %arg15[%c0_i32_15, %27, %c0_i32_18] : memref<2x8x768xf32, #tpu.memory_space<vmem>> -> memref<1x1x768xf32, #tpu.memory_space<vmem>>
      %30 = tpu.memref_squeeze %29 : memref<1x1x768xf32, #tpu.memory_space<vmem>> -> memref<1x768xf32, #tpu.memory_space<vmem>>
      %31 = tpu.memref_slice %arg17[%c0_i32_16] : memref<2x!tpu.dma_semaphore, #tpu.memory_space<semaphore_mem>> -> memref<1x!tpu.dma_semaphore, #tpu.memory_space<semaphore_mem>>
      %32 = tpu.memref_squeeze %31 : memref<1x!tpu.dma_semaphore, #tpu.memory_space<semaphore_mem>> -> memref<!tpu.dma_semaphore, #tpu.memory_space<semaphore_mem>>
      tpu.enqueue_dma source(%28 : memref<1x768xf32, #tpu.memory_space<any>>) target(%30 : memref<1x768xf32, #tpu.memory_space<vmem>>) target_semaphore(%32 : memref<!tpu.dma_semaphore, #tpu.memory_space<semaphore_mem>>)
      %33 = arith.addi %0, %21 : i32
      %c1_i32_19 = arith.constant 1 : i32
      %34 = arith.addi %33, %c1_i32_19 : i32
      %35 = arith.index_cast %6 : i32 to index
      %36 = arith.index_cast %34 : i32 to index
      %37 = memref.load %arg2[%35, %36] : memref<16x24xi32, #tpu.memory_space<smem>>
      %c1_i32_20 = arith.constant 1 : i32
      %38 = arith.addi %21, %c1_i32_20 : i32
      %c0_i32_21 = arith.constant 0 : i32
      %c0_i32_22 = arith.constant 0 : i32
      %c0_i32_23 = arith.constant 0 : i32
      %39 = tpu.memref_slice %arg4[%37, %c0_i32_23] : memref<65x768xf32, #tpu.memory_space<any>> -> memref<1x768xf32, #tpu.memory_space<any>>
      %c0_i32_24 = arith.constant 0 : i32
      %40 = tpu.memref_slice %arg15[%c0_i32_21, %38, %c0_i32_24] : memref<2x8x768xf32, #tpu.memory_space<vmem>> -> memref<1x1x768xf32, #tpu.memory_space<vmem>>
      %41 = tpu.memref_squeeze %40 : memref<1x1x768xf32, #tpu.memory_space<vmem>> -> memref<1x768xf32, #tpu.memory_space<vmem>>
      %42 = tpu.memref_slice %arg17[%c0_i32_22] : memref<2x!tpu.dma_semaphore, #tpu.memory_space<semaphore_mem>> -> memref<1x!tpu.dma_semaphore, #tpu.memory_space<semaphore_mem>>
      %43 = tpu.memref_squeeze %42 : memref<1x!tpu.dma_semaphore, #tpu.memory_space<semaphore_mem>> -> memref<!tpu.dma_semaphore, #tpu.memory_space<semaphore_mem>>
      tpu.enqueue_dma source(%39 : memref<1x768xf32, #tpu.memory_space<any>>) target(%41 : memref<1x768xf32, #tpu.memory_space<vmem>>) target_semaphore(%43 : memref<!tpu.dma_semaphore, #tpu.memory_space<semaphore_mem>>)
      %44 = arith.addi %0, %21 : i32
      %c2_i32_25 = arith.constant 2 : i32
      %45 = arith.addi %44, %c2_i32_25 : i32
      %46 = arith.index_cast %6 : i32 to index
      %47 = arith.index_cast %45 : i32 to index
      %48 = memref.load %arg2[%46, %47] : memref<16x24xi32, #tpu.memory_space<smem>>
      %c2_i32_26 = arith.constant 2 : i32
      %49 = arith.addi %21, %c2_i32_26 : i32
      %c0_i32_27 = arith.constant 0 : i32
      %c0_i32_28 = arith.constant 0 : i32
      %c0_i32_29 = arith.constant 0 : i32
      %50 = tpu.memref_slice %arg4[%48, %c0_i32_29] : memref<65x768xf32, #tpu.memory_space<any>> -> memref<1x768xf32, #tpu.memory_space<any>>
      %c0_i32_30 = arith.constant 0 : i32
      %51 = tpu.memref_slice %arg15[%c0_i32_27, %49, %c0_i32_30] : memref<2x8x768xf32, #tpu.memory_space<vmem>> -> memref<1x1x768xf32, #tpu.memory_space<vmem>>
      %52 = tpu.memref_squeeze %51 : memref<1x1x768xf32, #tpu.memory_space<vmem>> -> memref<1x768xf32, #tpu.memory_space<vmem>>
      %53 = tpu.memref_slice %arg17[%c0_i32_28] : memref<2x!tpu.dma_semaphore, #tpu.memory_space<semaphore_mem>> -> memref<1x!tpu.dma_semaphore, #tpu.memory_space<semaphore_mem>>
      %54 = tpu.memref_squeeze %53 : memref<1x!tpu.dma_semaphore, #tpu.memory_space<semaphore_mem>> -> memref<!tpu.dma_semaphore, #tpu.memory_space<semaphore_mem>>
      tpu.enqueue_dma source(%50 : memref<1x768xf32, #tpu.memory_space<any>>) target(%52 : memref<1x768xf32, #tpu.memory_space<vmem>>) target_semaphore(%54 : memref<!tpu.dma_semaphore, #tpu.memory_space<semaphore_mem>>)
      %55 = arith.addi %0, %21 : i32
      %c3_i32_31 = arith.constant 3 : i32
      %56 = arith.addi %55, %c3_i32_31 : i32
      %57 = arith.index_cast %6 : i32 to index
      %58 = arith.index_cast %56 : i32 to index
      %59 = memref.load %arg2[%57, %58] : memref<16x24xi32, #tpu.memory_space<smem>>
      %c3_i32_32 = arith.constant 3 : i32
      %60 = arith.addi %21, %c3_i32_32 : i32
      %c0_i32_33 = arith.constant 0 : i32
      %c0_i32_34 = arith.constant 0 : i32
      %c0_i32_35 = arith.constant 0 : i32
      %61 = tpu.memref_slice %arg4[%59, %c0_i32_35] : memref<65x768xf32, #tpu.memory_space<any>> -> memref<1x768xf32, #tpu.memory_space<any>>
      %c0_i32_36 = arith.constant 0 : i32
      %62 = tpu.memref_slice %arg15[%c0_i32_33, %60, %c0_i32_36] : memref<2x8x768xf32, #tpu.memory_space<vmem>> -> memref<1x1x768xf32, #tpu.memory_space<vmem>>
      %63 = tpu.memref_squeeze %62 : memref<1x1x768xf32, #tpu.memory_space<vmem>> -> memref<1x768xf32, #tpu.memory_space<vmem>>
      %64 = tpu.memref_slice %arg17[%c0_i32_34] : memref<2x!tpu.dma_semaphore, #tpu.memory_space<semaphore_mem>> -> memref<1x!tpu.dma_semaphore, #tpu.memory_space<semaphore_mem>>
      %65 = tpu.memref_squeeze %64 : memref<1x!tpu.dma_semaphore, #tpu.memory_space<semaphore_mem>> -> memref<!tpu.dma_semaphore, #tpu.memory_space<semaphore_mem>>
      tpu.enqueue_dma source(%61 : memref<1x768xf32, #tpu.memory_space<any>>) target(%63 : memref<1x768xf32, #tpu.memory_space<vmem>>) target_semaphore(%65 : memref<!tpu.dma_semaphore, #tpu.memory_space<semaphore_mem>>)
      %66 = arith.addi %0, %21 : i32
      %c4_i32 = arith.constant 4 : i32
      %67 = arith.addi %66, %c4_i32 : i32
      %68 = arith.index_cast %6 : i32 to index
      %69 = arith.index_cast %67 : i32 to index
      %70 = memref.load %arg2[%68, %69] : memref<16x24xi32, #tpu.memory_space<smem>>
      %c4_i32_37 = arith.constant 4 : i32
      %71 = arith.addi %21, %c4_i32_37 : i32
      %c0_i32_38 = arith.constant 0 : i32
      %c0_i32_39 = arith.constant 0 : i32
      %c0_i32_40 = arith.constant 0 : i32
      %72 = tpu.memref_slice %arg4[%70, %c0_i32_40] : memref<65x768xf32, #tpu.memory_space<any>> -> memref<1x768xf32, #tpu.memory_space<any>>
      %c0_i32_41 = arith.constant 0 : i32
      %73 = tpu.memref_slice %arg15[%c0_i32_38, %71, %c0_i32_41] : memref<2x8x768xf32, #tpu.memory_space<vmem>> -> memref<1x1x768xf32, #tpu.memory_space<vmem>>
      %74 = tpu.memref_squeeze %73 : memref<1x1x768xf32, #tpu.memory_space<vmem>> -> memref<1x768xf32, #tpu.memory_space<vmem>>
      %75 = tpu.memref_slice %arg17[%c0_i32_39] : memref<2x!tpu.dma_semaphore, #tpu.memory_space<semaphore_mem>> -> memref<1x!tpu.dma_semaphore, #tpu.memory_space<semaphore_mem>>
      %76 = tpu.memref_squeeze %75 : memref<1x!tpu.dma_semaphore, #tpu.memory_space<semaphore_mem>> -> memref<!tpu.dma_semaphore, #tpu.memory_space<semaphore_mem>>
      tpu.enqueue_dma source(%72 : memref<1x768xf32, #tpu.memory_space<any>>) target(%74 : memref<1x768xf32, #tpu.memory_space<vmem>>) target_semaphore(%76 : memref<!tpu.dma_semaphore, #tpu.memory_space<semaphore_mem>>)
      %77 = arith.addi %0, %21 : i32
      %c5_i32 = arith.constant 5 : i32
      %78 = arith.addi %77, %c5_i32 : i32
      %79 = arith.index_cast %6 : i32 to index
      %80 = arith.index_cast %78 : i32 to index
      %81 = memref.load %arg2[%79, %80] : memref<16x24xi32, #tpu.memory_space<smem>>
      %c5_i32_42 = arith.constant 5 : i32
      %82 = arith.addi %21, %c5_i32_42 : i32
      %c0_i32_43 = arith.constant 0 : i32
      %c0_i32_44 = arith.constant 0 : i32
      %c0_i32_45 = arith.constant 0 : i32
      %83 = tpu.memref_slice %arg4[%81, %c0_i32_45] : memref<65x768xf32, #tpu.memory_space<any>> -> memref<1x768xf32, #tpu.memory_space<any>>
      %c0_i32_46 = arith.constant 0 : i32
      %84 = tpu.memref_slice %arg15[%c0_i32_43, %82, %c0_i32_46] : memref<2x8x768xf32, #tpu.memory_space<vmem>> -> memref<1x1x768xf32, #tpu.memory_space<vmem>>
      %85 = tpu.memref_squeeze %84 : memref<1x1x768xf32, #tpu.memory_space<vmem>> -> memref<1x768xf32, #tpu.memory_space<vmem>>
      %86 = tpu.memref_slice %arg17[%c0_i32_44] : memref<2x!tpu.dma_semaphore, #tpu.memory_space<semaphore_mem>> -> memref<1x!tpu.dma_semaphore, #tpu.memory_space<semaphore_mem>>
      %87 = tpu.memref_squeeze %86 : memref<1x!tpu.dma_semaphore, #tpu.memory_space<semaphore_mem>> -> memref<!tpu.dma_semaphore, #tpu.memory_space<semaphore_mem>>
      tpu.enqueue_dma source(%83 : memref<1x768xf32, #tpu.memory_space<any>>) target(%85 : memref<1x768xf32, #tpu.memory_space<vmem>>) target_semaphore(%87 : memref<!tpu.dma_semaphore, #tpu.memory_space<semaphore_mem>>)
      %88 = arith.addi %0, %21 : i32
      %c6_i32 = arith.constant 6 : i32
      %89 = arith.addi %88, %c6_i32 : i32
      %90 = arith.index_cast %6 : i32 to index
      %91 = arith.index_cast %89 : i32 to index
      %92 = memref.load %arg2[%90, %91] : memref<16x24xi32, #tpu.memory_space<smem>>
      %c6_i32_47 = arith.constant 6 : i32
      %93 = arith.addi %21, %c6_i32_47 : i32
      %c0_i32_48 = arith.constant 0 : i32
      %c0_i32_49 = arith.constant 0 : i32
      %c0_i32_50 = arith.constant 0 : i32
      %94 = tpu.memref_slice %arg4[%92, %c0_i32_50] : memref<65x768xf32, #tpu.memory_space<any>> -> memref<1x768xf32, #tpu.memory_space<any>>
      %c0_i32_51 = arith.constant 0 : i32
      %95 = tpu.memref_slice %arg15[%c0_i32_48, %93, %c0_i32_51] : memref<2x8x768xf32, #tpu.memory_space<vmem>> -> memref<1x1x768xf32, #tpu.memory_space<vmem>>
      %96 = tpu.memref_squeeze %95 : memref<1x1x768xf32, #tpu.memory_space<vmem>> -> memref<1x768xf32, #tpu.memory_space<vmem>>
      %97 = tpu.memref_slice %arg17[%c0_i32_49] : memref<2x!tpu.dma_semaphore, #tpu.memory_space<semaphore_mem>> -> memref<1x!tpu.dma_semaphore, #tpu.memory_space<semaphore_mem>>
      %98 = tpu.memref_squeeze %97 : memref<1x!tpu.dma_semaphore, #tpu.memory_space<semaphore_mem>> -> memref<!tpu.dma_semaphore, #tpu.memory_space<semaphore_mem>>
      tpu.enqueue_dma source(%94 : memref<1x768xf32, #tpu.memory_space<any>>) target(%96 : memref<1x768xf32, #tpu.memory_space<vmem>>) target_semaphore(%98 : memref<!tpu.dma_semaphore, #tpu.memory_space<semaphore_mem>>)
      %99 = arith.addi %0, %21 : i32
      %c7_i32 = arith.constant 7 : i32
      %100 = arith.addi %99, %c7_i32 : i32
      %101 = arith.index_cast %6 : i32 to index
      %102 = arith.index_cast %100 : i32 to index
      %103 = memref.load %arg2[%101, %102] : memref<16x24xi32, #tpu.memory_space<smem>>
      %c7_i32_52 = arith.constant 7 : i32
      %104 = arith.addi %21, %c7_i32_52 : i32
      %c0_i32_53 = arith.constant 0 : i32
      %c0_i32_54 = arith.constant 0 : i32
      %c0_i32_55 = arith.constant 0 : i32
      %105 = tpu.memref_slice %arg4[%103, %c0_i32_55] : memref<65x768xf32, #tpu.memory_space<any>> -> memref<1x768xf32, #tpu.memory_space<any>>
      %c0_i32_56 = arith.constant 0 : i32
      %106 = tpu.memref_slice %arg15[%c0_i32_53, %104, %c0_i32_56] : memref<2x8x768xf32, #tpu.memory_space<vmem>> -> memref<1x1x768xf32, #tpu.memory_space<vmem>>
      %107 = tpu.memref_squeeze %106 : memref<1x1x768xf32, #tpu.memory_space<vmem>> -> memref<1x768xf32, #tpu.memory_space<vmem>>
      %108 = tpu.memref_slice %arg17[%c0_i32_54] : memref<2x!tpu.dma_semaphore, #tpu.memory_space<semaphore_mem>> -> memref<1x!tpu.dma_semaphore, #tpu.memory_space<semaphore_mem>>
      %109 = tpu.memref_squeeze %108 : memref<1x!tpu.dma_semaphore, #tpu.memory_space<semaphore_mem>> -> memref<!tpu.dma_semaphore, #tpu.memory_space<semaphore_mem>>
      tpu.enqueue_dma source(%105 : memref<1x768xf32, #tpu.memory_space<any>>) target(%107 : memref<1x768xf32, #tpu.memory_space<vmem>>) target_semaphore(%109 : memref<!tpu.dma_semaphore, #tpu.memory_space<semaphore_mem>>)
      %c1_i32_57 = arith.constant 1 : i32
    } else {
    }
    %c0_i32_7 = arith.constant 0 : i32
    %c8_i32_8 = arith.constant 8 : i32
    %16 = arith.addi %c0_i32_7, %c8_i32_8 : i32
    %c1_i32 = arith.constant 1 : i32
    scf.for %arg18 = %c0_i32_7 to %16 step %c1_i32  : i32 {
      %c2_i32_11 = arith.constant 2 : i32
      %c0_i32_12 = arith.constant 0 : i32
      %20 = arith.cmpi eq, %c2_i32_11, %c0_i32_12 : i32
      %c1_i32_13 = arith.constant 1 : i32
      %21 = arith.select %20, %c1_i32_13, %c2_i32_11 : i32
      %22 = arith.remsi %arg18, %21 : i32
      %c0_i32_14 = arith.constant 0 : i32
      %23 = arith.cmpi ne, %22, %c0_i32_14 : i32
      %c0_i32_15 = arith.constant 0 : i32
      %24 = arith.cmpi slt, %22, %c0_i32_15 : i32
      %c0_i32_16 = arith.constant 0 : i32
      %25 = arith.cmpi slt, %21, %c0_i32_16 : i32
      %26 = arith.xori %24, %25 : i1
      %27 = arith.andi %26, %23 : i1
      %28 = arith.addi %22, %21 : i32
      %29 = arith.select %27, %28, %22 : i32
      %c1_i32_17 = arith.constant 1 : i32
      %30 = arith.addi %arg18, %c1_i32_17 : i32
      %c8_i32_18 = arith.constant 8 : i32
      %31 = arith.cmpi slt, %30, %c8_i32_18 : i32
      %32 = arith.extui %31 : i1 to i32
      %c0_i32_19 = arith.constant 0 : i32
      %33 = arith.cmpi ne, %32, %c0_i32_19 : i32
      scf.if %33 {
        %c1_i32_24 = arith.constant 1 : i32
        %43 = arith.addi %arg18, %c1_i32_24 : i32
        %c1_i32_25 = arith.constant 1 : i32
        %44 = arith.subi %c1_i32_25, %29 : i32
        %c8_i32_26 = arith.constant 8 : i32
        %45 = arith.muli %arg0, %c8_i32_26 : i32
        %46 = arith.addi %45, %43 : i32
        %c8_i32_27 = arith.constant 8 : i32
        %47 = arith.muli %arg0, %c8_i32_27 : i32
        %48 = arith.addi %47, %43 : i32
        %c3_i32_28 = arith.constant 3 : i32
        %49 = arith.muli %48, %c3_i32_28 : i32
        %50 = arith.addi %49, %arg1 : i32
        %51 = arith.index_cast %50 : i32 to index
        %52 = memref.load %arg3[%51] : memref<48xi32, #tpu.memory_space<smem>>
        %c0_i32_29 = arith.constant 0 : i32
        %53 = arith.cmpi sgt, %52, %c0_i32_29 : i32
        %54 = arith.extui %53 : i1 to i32
        %c0_i32_30 = arith.constant 0 : i32
        %55 = arith.cmpi ne, %54, %c0_i32_30 : i32
        scf.if %55 {
          %c0_i32_31 = arith.constant 0 : i32
          %c8_i32_32 = arith.constant 8 : i32
          %56 = arith.muli %c0_i32_31, %c8_i32_32 : i32
          %57 = tpu.assume_multiple %56, 8 : i32
          %58 = arith.addi %0, %57 : i32
          %c0_i32_33 = arith.constant 0 : i32
          %59 = arith.addi %58, %c0_i32_33 : i32
          %60 = arith.index_cast %46 : i32 to index
          %61 = arith.index_cast %59 : i32 to index
          %62 = memref.load %arg2[%60, %61] : memref<16x24xi32, #tpu.memory_space<smem>>
          %c0_i32_34 = arith.constant 0 : i32
          %63 = arith.addi %57, %c0_i32_34 : i32
          %c0_i32_35 = arith.constant 0 : i32
          %64 = tpu.memref_slice %arg4[%62, %c0_i32_35] : memref<65x768xf32, #tpu.memory_space<any>> -> memref<1x768xf32, #tpu.memory_space<any>>
          %c0_i32_36 = arith.constant 0 : i32
          %65 = tpu.memref_slice %arg15[%44, %63, %c0_i32_36] : memref<2x8x768xf32, #tpu.memory_space<vmem>> -> memref<1x1x768xf32, #tpu.memory_space<vmem>>
          %66 = tpu.memref_squeeze %65 : memref<1x1x768xf32, #tpu.memory_space<vmem>> -> memref<1x768xf32, #tpu.memory_space<vmem>>
          %67 = tpu.memref_slice %arg17[%44] : memref<2x!tpu.dma_semaphore, #tpu.memory_space<semaphore_mem>> -> memref<1x!tpu.dma_semaphore, #tpu.memory_space<semaphore_mem>>
          %68 = tpu.memref_squeeze %67 : memref<1x!tpu.dma_semaphore, #tpu.memory_space<semaphore_mem>> -> memref<!tpu.dma_semaphore, #tpu.memory_space<semaphore_mem>>
          tpu.enqueue_dma source(%64 : memref<1x768xf32, #tpu.memory_space<any>>) target(%66 : memref<1x768xf32, #tpu.memory_space<vmem>>) target_semaphore(%68 : memref<!tpu.dma_semaphore, #tpu.memory_space<semaphore_mem>>)
          %69 = arith.addi %0, %57 : i32
          %c1_i32_37 = arith.constant 1 : i32
          %70 = arith.addi %69, %c1_i32_37 : i32
          %71 = arith.index_cast %46 : i32 to index
          %72 = arith.index_cast %70 : i32 to index
          %73 = memref.load %arg2[%71, %72] : memref<16x24xi32, #tpu.memory_space<smem>>
          %c1_i32_38 = arith.constant 1 : i32
          %74 = arith.addi %57, %c1_i32_38 : i32
          %c0_i32_39 = arith.constant 0 : i32
          %75 = tpu.memref_slice %arg4[%73, %c0_i32_39] : memref<65x768xf32, #tpu.memory_space<any>> -> memref<1x768xf32, #tpu.memory_space<any>>
          %c0_i32_40 = arith.constant 0 : i32
          %76 = tpu.memref_slice %arg15[%44, %74, %c0_i32_40] : memref<2x8x768xf32, #tpu.memory_space<vmem>> -> memref<1x1x768xf32, #tpu.memory_space<vmem>>
          %77 = tpu.memref_squeeze %76 : memref<1x1x768xf32, #tpu.memory_space<vmem>> -> memref<1x768xf32, #tpu.memory_space<vmem>>
          %78 = tpu.memref_slice %arg17[%44] : memref<2x!tpu.dma_semaphore, #tpu.memory_space<semaphore_mem>> -> memref<1x!tpu.dma_semaphore, #tpu.memory_space<semaphore_mem>>
          %79 = tpu.memref_squeeze %78 : memref<1x!tpu.dma_semaphore, #tpu.memory_space<semaphore_mem>> -> memref<!tpu.dma_semaphore, #tpu.memory_space<semaphore_mem>>
          tpu.enqueue_dma source(%75 : memref<1x768xf32, #tpu.memory_space<any>>) target(%77 : memref<1x768xf32, #tpu.memory_space<vmem>>) target_semaphore(%79 : memref<!tpu.dma_semaphore, #tpu.memory_space<semaphore_mem>>)
          %80 = arith.addi %0, %57 : i32
          %c2_i32_41 = arith.constant 2 : i32
          %81 = arith.addi %80, %c2_i32_41 : i32
          %82 = arith.index_cast %46 : i32 to index
          %83 = arith.index_cast %81 : i32 to index
          %84 = memref.load %arg2[%82, %83] : memref<16x24xi32, #tpu.memory_space<smem>>
          %c2_i32_42 = arith.constant 2 : i32
          %85 = arith.addi %57, %c2_i32_42 : i32
          %c0_i32_43 = arith.constant 0 : i32
          %86 = tpu.memref_slice %arg4[%84, %c0_i32_43] : memref<65x768xf32, #tpu.memory_space<any>> -> memref<1x768xf32, #tpu.memory_space<any>>
          %c0_i32_44 = arith.constant 0 : i32
          %87 = tpu.memref_slice %arg15[%44, %85, %c0_i32_44] : memref<2x8x768xf32, #tpu.memory_space<vmem>> -> memref<1x1x768xf32, #tpu.memory_space<vmem>>
          %88 = tpu.memref_squeeze %87 : memref<1x1x768xf32, #tpu.memory_space<vmem>> -> memref<1x768xf32, #tpu.memory_space<vmem>>
          %89 = tpu.memref_slice %arg17[%44] : memref<2x!tpu.dma_semaphore, #tpu.memory_space<semaphore_mem>> -> memref<1x!tpu.dma_semaphore, #tpu.memory_space<semaphore_mem>>
          %90 = tpu.memref_squeeze %89 : memref<1x!tpu.dma_semaphore, #tpu.memory_space<semaphore_mem>> -> memref<!tpu.dma_semaphore, #tpu.memory_space<semaphore_mem>>
          tpu.enqueue_dma source(%86 : memref<1x768xf32, #tpu.memory_space<any>>) target(%88 : memref<1x768xf32, #tpu.memory_space<vmem>>) target_semaphore(%90 : memref<!tpu.dma_semaphore, #tpu.memory_space<semaphore_mem>>)
          %91 = arith.addi %0, %57 : i32
          %c3_i32_45 = arith.constant 3 : i32
          %92 = arith.addi %91, %c3_i32_45 : i32
          %93 = arith.index_cast %46 : i32 to index
          %94 = arith.index_cast %92 : i32 to index
          %95 = memref.load %arg2[%93, %94] : memref<16x24xi32, #tpu.memory_space<smem>>
          %c3_i32_46 = arith.constant 3 : i32
          %96 = arith.addi %57, %c3_i32_46 : i32
          %c0_i32_47 = arith.constant 0 : i32
          %97 = tpu.memref_slice %arg4[%95, %c0_i32_47] : memref<65x768xf32, #tpu.memory_space<any>> -> memref<1x768xf32, #tpu.memory_space<any>>
          %c0_i32_48 = arith.constant 0 : i32
          %98 = tpu.memref_slice %arg15[%44, %96, %c0_i32_48] : memref<2x8x768xf32, #tpu.memory_space<vmem>> -> memref<1x1x768xf32, #tpu.memory_space<vmem>>
          %99 = tpu.memref_squeeze %98 : memref<1x1x768xf32, #tpu.memory_space<vmem>> -> memref<1x768xf32, #tpu.memory_space<vmem>>
          %100 = tpu.memref_slice %arg17[%44] : memref<2x!tpu.dma_semaphore, #tpu.memory_space<semaphore_mem>> -> memref<1x!tpu.dma_semaphore, #tpu.memory_space<semaphore_mem>>
          %101 = tpu.memref_squeeze %100 : memref<1x!tpu.dma_semaphore, #tpu.memory_space<semaphore_mem>> -> memref<!tpu.dma_semaphore, #tpu.memory_space<semaphore_mem>>
          tpu.enqueue_dma source(%97 : memref<1x768xf32, #tpu.memory_space<any>>) target(%99 : memref<1x768xf32, #tpu.memory_space<vmem>>) target_semaphore(%101 : memref<!tpu.dma_semaphore, #tpu.memory_space<semaphore_mem>>)
          %102 = arith.addi %0, %57 : i32
          %c4_i32 = arith.constant 4 : i32
          %103 = arith.addi %102, %c4_i32 : i32
          %104 = arith.index_cast %46 : i32 to index
          %105 = arith.index_cast %103 : i32 to index
          %106 = memref.load %arg2[%104, %105] : memref<16x24xi32, #tpu.memory_space<smem>>
          %c4_i32_49 = arith.constant 4 : i32
          %107 = arith.addi %57, %c4_i32_49 : i32
          %c0_i32_50 = arith.constant 0 : i32
          %108 = tpu.memref_slice %arg4[%106, %c0_i32_50] : memref<65x768xf32, #tpu.memory_space<any>> -> memref<1x768xf32, #tpu.memory_space<any>>
          %c0_i32_51 = arith.constant 0 : i32
          %109 = tpu.memref_slice %arg15[%44, %107, %c0_i32_51] : memref<2x8x768xf32, #tpu.memory_space<vmem>> -> memref<1x1x768xf32, #tpu.memory_space<vmem>>
          %110 = tpu.memref_squeeze %109 : memref<1x1x768xf32, #tpu.memory_space<vmem>> -> memref<1x768xf32, #tpu.memory_space<vmem>>
          %111 = tpu.memref_slice %arg17[%44] : memref<2x!tpu.dma_semaphore, #tpu.memory_space<semaphore_mem>> -> memref<1x!tpu.dma_semaphore, #tpu.memory_space<semaphore_mem>>
          %112 = tpu.memref_squeeze %111 : memref<1x!tpu.dma_semaphore, #tpu.memory_space<semaphore_mem>> -> memref<!tpu.dma_semaphore, #tpu.memory_space<semaphore_mem>>
          tpu.enqueue_dma source(%108 : memref<1x768xf32, #tpu.memory_space<any>>) target(%110 : memref<1x768xf32, #tpu.memory_space<vmem>>) target_semaphore(%112 : memref<!tpu.dma_semaphore, #tpu.memory_space<semaphore_mem>>)
          %113 = arith.addi %0, %57 : i32
          %c5_i32 = arith.constant 5 : i32
          %114 = arith.addi %113, %c5_i32 : i32
          %115 = arith.index_cast %46 : i32 to index
          %116 = arith.index_cast %114 : i32 to index
          %117 = memref.load %arg2[%115, %116] : memref<16x24xi32, #tpu.memory_space<smem>>
          %c5_i32_52 = arith.constant 5 : i32
          %118 = arith.addi %57, %c5_i32_52 : i32
          %c0_i32_53 = arith.constant 0 : i32
          %119 = tpu.memref_slice %arg4[%117, %c0_i32_53] : memref<65x768xf32, #tpu.memory_space<any>> -> memref<1x768xf32, #tpu.memory_space<any>>
          %c0_i32_54 = arith.constant 0 : i32
          %120 = tpu.memref_slice %arg15[%44, %118, %c0_i32_54] : memref<2x8x768xf32, #tpu.memory_space<vmem>> -> memref<1x1x768xf32, #tpu.memory_space<vmem>>
          %121 = tpu.memref_squeeze %120 : memref<1x1x768xf32, #tpu.memory_space<vmem>> -> memref<1x768xf32, #tpu.memory_space<vmem>>
          %122 = tpu.memref_slice %arg17[%44] : memref<2x!tpu.dma_semaphore, #tpu.memory_space<semaphore_mem>> -> memref<1x!tpu.dma_semaphore, #tpu.memory_space<semaphore_mem>>
          %123 = tpu.memref_squeeze %122 : memref<1x!tpu.dma_semaphore, #tpu.memory_space<semaphore_mem>> -> memref<!tpu.dma_semaphore, #tpu.memory_space<semaphore_mem>>
          tpu.enqueue_dma source(%119 : memref<1x768xf32, #tpu.memory_space<any>>) target(%121 : memref<1x768xf32, #tpu.memory_space<vmem>>) target_semaphore(%123 : memref<!tpu.dma_semaphore, #tpu.memory_space<semaphore_mem>>)
          %124 = arith.addi %0, %57 : i32
          %c6_i32 = arith.constant 6 : i32
          %125 = arith.addi %124, %c6_i32 : i32
          %126 = arith.index_cast %46 : i32 to index
          %127 = arith.index_cast %125 : i32 to index
          %128 = memref.load %arg2[%126, %127] : memref<16x24xi32, #tpu.memory_space<smem>>
          %c6_i32_55 = arith.constant 6 : i32
          %129 = arith.addi %57, %c6_i32_55 : i32
          %c0_i32_56 = arith.constant 0 : i32
          %130 = tpu.memref_slice %arg4[%128, %c0_i32_56] : memref<65x768xf32, #tpu.memory_space<any>> -> memref<1x768xf32, #tpu.memory_space<any>>
          %c0_i32_57 = arith.constant 0 : i32
          %131 = tpu.memref_slice %arg15[%44, %129, %c0_i32_57] : memref<2x8x768xf32, #tpu.memory_space<vmem>> -> memref<1x1x768xf32, #tpu.memory_space<vmem>>
          %132 = tpu.memref_squeeze %131 : memref<1x1x768xf32, #tpu.memory_space<vmem>> -> memref<1x768xf32, #tpu.memory_space<vmem>>
          %133 = tpu.memref_slice %arg17[%44] : memref<2x!tpu.dma_semaphore, #tpu.memory_space<semaphore_mem>> -> memref<1x!tpu.dma_semaphore, #tpu.memory_space<semaphore_mem>>
          %134 = tpu.memref_squeeze %133 : memref<1x!tpu.dma_semaphore, #tpu.memory_space<semaphore_mem>> -> memref<!tpu.dma_semaphore, #tpu.memory_space<semaphore_mem>>
          tpu.enqueue_dma source(%130 : memref<1x768xf32, #tpu.memory_space<any>>) target(%132 : memref<1x768xf32, #tpu.memory_space<vmem>>) target_semaphore(%134 : memref<!tpu.dma_semaphore, #tpu.memory_space<semaphore_mem>>)
          %135 = arith.addi %0, %57 : i32
          %c7_i32 = arith.constant 7 : i32
          %136 = arith.addi %135, %c7_i32 : i32
          %137 = arith.index_cast %46 : i32 to index
          %138 = arith.index_cast %136 : i32 to index
          %139 = memref.load %arg2[%137, %138] : memref<16x24xi32, #tpu.memory_space<smem>>
          %c7_i32_58 = arith.constant 7 : i32
          %140 = arith.addi %57, %c7_i32_58 : i32
          %c0_i32_59 = arith.constant 0 : i32
          %141 = tpu.memref_slice %arg4[%139, %c0_i32_59] : memref<65x768xf32, #tpu.memory_space<any>> -> memref<1x768xf32, #tpu.memory_space<any>>
          %c0_i32_60 = arith.constant 0 : i32
          %142 = tpu.memref_slice %arg15[%44, %140, %c0_i32_60] : memref<2x8x768xf32, #tpu.memory_space<vmem>> -> memref<1x1x768xf32, #tpu.memory_space<vmem>>
          %143 = tpu.memref_squeeze %142 : memref<1x1x768xf32, #tpu.memory_space<vmem>> -> memref<1x768xf32, #tpu.memory_space<vmem>>
          %144 = tpu.memref_slice %arg17[%44] : memref<2x!tpu.dma_semaphore, #tpu.memory_space<semaphore_mem>> -> memref<1x!tpu.dma_semaphore, #tpu.memory_space<semaphore_mem>>
          %145 = tpu.memref_squeeze %144 : memref<1x!tpu.dma_semaphore, #tpu.memory_space<semaphore_mem>> -> memref<!tpu.dma_semaphore, #tpu.memory_space<semaphore_mem>>
          tpu.enqueue_dma source(%141 : memref<1x768xf32, #tpu.memory_space<any>>) target(%143 : memref<1x768xf32, #tpu.memory_space<vmem>>) target_semaphore(%145 : memref<!tpu.dma_semaphore, #tpu.memory_space<semaphore_mem>>)
          %c1_i32_61 = arith.constant 1 : i32
        } else {
        }
      } else {
      }
      %c8_i32_20 = arith.constant 8 : i32
      %34 = arith.muli %arg0, %c8_i32_20 : i32
      %35 = arith.addi %34, %arg18 : i32
      %c3_i32_21 = arith.constant 3 : i32
      %36 = arith.muli %35, %c3_i32_21 : i32
      %37 = arith.addi %36, %arg1 : i32
      %38 = arith.index_cast %37 : i32 to index
      %39 = memref.load %arg3[%38] : memref<48xi32, #tpu.memory_space<smem>>
      %c0_i32_22 = arith.constant 0 : i32
      %40 = arith.cmpi sgt, %39, %c0_i32_22 : i32
      %41 = arith.extui %40 : i1 to i32
      %c0_i32_23 = arith.constant 0 : i32
      %42 = arith.cmpi ne, %41, %c0_i32_23 : i32
      scf.if %42 {
        %c0_i32_24 = arith.constant 0 : i32
        %c0_i32_25 = arith.constant 0 : i32
        %c0_i32_26 = arith.constant 0 : i32
        %43 = tpu.memref_slice %arg4[%c0_i32_25, %c0_i32_26] : memref<65x768xf32, #tpu.memory_space<any>> -> memref<1x768xf32, #tpu.memory_space<any>>
        %c0_i32_27 = arith.constant 0 : i32
        %c0_i32_28 = arith.constant 0 : i32
        %44 = tpu.memref_slice %arg15[%29, %c0_i32_27, %c0_i32_28] : memref<2x8x768xf32, #tpu.memory_space<vmem>> -> memref<1x1x768xf32, #tpu.memory_space<vmem>>
        %45 = tpu.memref_squeeze %44 : memref<1x1x768xf32, #tpu.memory_space<vmem>> -> memref<1x768xf32, #tpu.memory_space<vmem>>
        %46 = tpu.memref_slice %arg17[%29] : memref<2x!tpu.dma_semaphore, #tpu.memory_space<semaphore_mem>> -> memref<1x!tpu.dma_semaphore, #tpu.memory_space<semaphore_mem>>
        %47 = tpu.memref_squeeze %46 : memref<1x!tpu.dma_semaphore, #tpu.memory_space<semaphore_mem>> -> memref<!tpu.dma_semaphore, #tpu.memory_space<semaphore_mem>>
        tpu.wait_dma2 semaphore(%47 : memref<!tpu.dma_semaphore, #tpu.memory_space<semaphore_mem>>) src(%43 : memref<1x768xf32, #tpu.memory_space<any>>) dst(%45 : memref<1x768xf32, #tpu.memory_space<vmem>>)
        %c0_i32_29 = arith.constant 0 : i32
        %c0_i32_30 = arith.constant 0 : i32
        %48 = tpu.memref_slice %arg4[%c0_i32_29, %c0_i32_30] : memref<65x768xf32, #tpu.memory_space<any>> -> memref<1x768xf32, #tpu.memory_space<any>>
        %c0_i32_31 = arith.constant 0 : i32
        %c0_i32_32 = arith.constant 0 : i32
        %49 = tpu.memref_slice %arg15[%29, %c0_i32_31, %c0_i32_32] : memref<2x8x768xf32, #tpu.memory_space<vmem>> -> memref<1x1x768xf32, #tpu.memory_space<vmem>>
        %50 = tpu.memref_squeeze %49 : memref<1x1x768xf32, #tpu.memory_space<vmem>> -> memref<1x768xf32, #tpu.memory_space<vmem>>
        %51 = tpu.memref_slice %arg17[%29] : memref<2x!tpu.dma_semaphore, #tpu.memory_space<semaphore_mem>> -> memref<1x!tpu.dma_semaphore, #tpu.memory_space<semaphore_mem>>
        %52 = tpu.memref_squeeze %51 : memref<1x!tpu.dma_semaphore, #tpu.memory_space<semaphore_mem>> -> memref<!tpu.dma_semaphore, #tpu.memory_space<semaphore_mem>>
        tpu.wait_dma2 semaphore(%52 : memref<!tpu.dma_semaphore, #tpu.memory_space<semaphore_mem>>) src(%48 : memref<1x768xf32, #tpu.memory_space<any>>) dst(%50 : memref<1x768xf32, #tpu.memory_space<vmem>>)
        %c0_i32_33 = arith.constant 0 : i32
        %c0_i32_34 = arith.constant 0 : i32
        %53 = tpu.memref_slice %arg4[%c0_i32_33, %c0_i32_34] : memref<65x768xf32, #tpu.memory_space<any>> -> memref<1x768xf32, #tpu.memory_space<any>>
        %c0_i32_35 = arith.constant 0 : i32
        %c0_i32_36 = arith.constant 0 : i32
        %54 = tpu.memref_slice %arg15[%29, %c0_i32_35, %c0_i32_36] : memref<2x8x768xf32, #tpu.memory_space<vmem>> -> memref<1x1x768xf32, #tpu.memory_space<vmem>>
        %55 = tpu.memref_squeeze %54 : memref<1x1x768xf32, #tpu.memory_space<vmem>> -> memref<1x768xf32, #tpu.memory_space<vmem>>
        %56 = tpu.memref_slice %arg17[%29] : memref<2x!tpu.dma_semaphore, #tpu.memory_space<semaphore_mem>> -> memref<1x!tpu.dma_semaphore, #tpu.memory_space<semaphore_mem>>
        %57 = tpu.memref_squeeze %56 : memref<1x!tpu.dma_semaphore, #tpu.memory_space<semaphore_mem>> -> memref<!tpu.dma_semaphore, #tpu.memory_space<semaphore_mem>>
        tpu.wait_dma2 semaphore(%57 : memref<!tpu.dma_semaphore, #tpu.memory_space<semaphore_mem>>) src(%53 : memref<1x768xf32, #tpu.memory_space<any>>) dst(%55 : memref<1x768xf32, #tpu.memory_space<vmem>>)
        %c0_i32_37 = arith.constant 0 : i32
        %c0_i32_38 = arith.constant 0 : i32
        %58 = tpu.memref_slice %arg4[%c0_i32_37, %c0_i32_38] : memref<65x768xf32, #tpu.memory_space<any>> -> memref<1x768xf32, #tpu.memory_space<any>>
        %c0_i32_39 = arith.constant 0 : i32
        %c0_i32_40 = arith.constant 0 : i32
        %59 = tpu.memref_slice %arg15[%29, %c0_i32_39, %c0_i32_40] : memref<2x8x768xf32, #tpu.memory_space<vmem>> -> memref<1x1x768xf32, #tpu.memory_space<vmem>>
        %60 = tpu.memref_squeeze %59 : memref<1x1x768xf32, #tpu.memory_space<vmem>> -> memref<1x768xf32, #tpu.memory_space<vmem>>
        %61 = tpu.memref_slice %arg17[%29] : memref<2x!tpu.dma_semaphore, #tpu.memory_space<semaphore_mem>> -> memref<1x!tpu.dma_semaphore, #tpu.memory_space<semaphore_mem>>
        %62 = tpu.memref_squeeze %61 : memref<1x!tpu.dma_semaphore, #tpu.memory_space<semaphore_mem>> -> memref<!tpu.dma_semaphore, #tpu.memory_space<semaphore_mem>>
        tpu.wait_dma2 semaphore(%62 : memref<!tpu.dma_semaphore, #tpu.memory_space<semaphore_mem>>) src(%58 : memref<1x768xf32, #tpu.memory_space<any>>) dst(%60 : memref<1x768xf32, #tpu.memory_space<vmem>>)
        %c0_i32_41 = arith.constant 0 : i32
        %c0_i32_42 = arith.constant 0 : i32
        %63 = tpu.memref_slice %arg4[%c0_i32_41, %c0_i32_42] : memref<65x768xf32, #tpu.memory_space<any>> -> memref<1x768xf32, #tpu.memory_space<any>>
        %c0_i32_43 = arith.constant 0 : i32
        %c0_i32_44 = arith.constant 0 : i32
        %64 = tpu.memref_slice %arg15[%29, %c0_i32_43, %c0_i32_44] : memref<2x8x768xf32, #tpu.memory_space<vmem>> -> memref<1x1x768xf32, #tpu.memory_space<vmem>>
        %65 = tpu.memref_squeeze %64 : memref<1x1x768xf32, #tpu.memory_space<vmem>> -> memref<1x768xf32, #tpu.memory_space<vmem>>
        %66 = tpu.memref_slice %arg17[%29] : memref<2x!tpu.dma_semaphore, #tpu.memory_space<semaphore_mem>> -> memref<1x!tpu.dma_semaphore, #tpu.memory_space<semaphore_mem>>
        %67 = tpu.memref_squeeze %66 : memref<1x!tpu.dma_semaphore, #tpu.memory_space<semaphore_mem>> -> memref<!tpu.dma_semaphore, #tpu.memory_space<semaphore_mem>>
        tpu.wait_dma2 semaphore(%67 : memref<!tpu.dma_semaphore, #tpu.memory_space<semaphore_mem>>) src(%63 : memref<1x768xf32, #tpu.memory_space<any>>) dst(%65 : memref<1x768xf32, #tpu.memory_space<vmem>>)
        %c0_i32_45 = arith.constant 0 : i32
        %c0_i32_46 = arith.constant 0 : i32
        %68 = tpu.memref_slice %arg4[%c0_i32_45, %c0_i32_46] : memref<65x768xf32, #tpu.memory_space<any>> -> memref<1x768xf32, #tpu.memory_space<any>>
        %c0_i32_47 = arith.constant 0 : i32
        %c0_i32_48 = arith.constant 0 : i32
        %69 = tpu.memref_slice %arg15[%29, %c0_i32_47, %c0_i32_48] : memref<2x8x768xf32, #tpu.memory_space<vmem>> -> memref<1x1x768xf32, #tpu.memory_space<vmem>>
        %70 = tpu.memref_squeeze %69 : memref<1x1x768xf32, #tpu.memory_space<vmem>> -> memref<1x768xf32, #tpu.memory_space<vmem>>
        %71 = tpu.memref_slice %arg17[%29] : memref<2x!tpu.dma_semaphore, #tpu.memory_space<semaphore_mem>> -> memref<1x!tpu.dma_semaphore, #tpu.memory_space<semaphore_mem>>
        %72 = tpu.memref_squeeze %71 : memref<1x!tpu.dma_semaphore, #tpu.memory_space<semaphore_mem>> -> memref<!tpu.dma_semaphore, #tpu.memory_space<semaphore_mem>>
        tpu.wait_dma2 semaphore(%72 : memref<!tpu.dma_semaphore, #tpu.memory_space<semaphore_mem>>) src(%68 : memref<1x768xf32, #tpu.memory_space<any>>) dst(%70 : memref<1x768xf32, #tpu.memory_space<vmem>>)
        %c0_i32_49 = arith.constant 0 : i32
        %c0_i32_50 = arith.constant 0 : i32
        %73 = tpu.memref_slice %arg4[%c0_i32_49, %c0_i32_50] : memref<65x768xf32, #tpu.memory_space<any>> -> memref<1x768xf32, #tpu.memory_space<any>>
        %c0_i32_51 = arith.constant 0 : i32
        %c0_i32_52 = arith.constant 0 : i32
        %74 = tpu.memref_slice %arg15[%29, %c0_i32_51, %c0_i32_52] : memref<2x8x768xf32, #tpu.memory_space<vmem>> -> memref<1x1x768xf32, #tpu.memory_space<vmem>>
        %75 = tpu.memref_squeeze %74 : memref<1x1x768xf32, #tpu.memory_space<vmem>> -> memref<1x768xf32, #tpu.memory_space<vmem>>
        %76 = tpu.memref_slice %arg17[%29] : memref<2x!tpu.dma_semaphore, #tpu.memory_space<semaphore_mem>> -> memref<1x!tpu.dma_semaphore, #tpu.memory_space<semaphore_mem>>
        %77 = tpu.memref_squeeze %76 : memref<1x!tpu.dma_semaphore, #tpu.memory_space<semaphore_mem>> -> memref<!tpu.dma_semaphore, #tpu.memory_space<semaphore_mem>>
        tpu.wait_dma2 semaphore(%77 : memref<!tpu.dma_semaphore, #tpu.memory_space<semaphore_mem>>) src(%73 : memref<1x768xf32, #tpu.memory_space<any>>) dst(%75 : memref<1x768xf32, #tpu.memory_space<vmem>>)
        %c0_i32_53 = arith.constant 0 : i32
        %c0_i32_54 = arith.constant 0 : i32
        %78 = tpu.memref_slice %arg4[%c0_i32_53, %c0_i32_54] : memref<65x768xf32, #tpu.memory_space<any>> -> memref<1x768xf32, #tpu.memory_space<any>>
        %c0_i32_55 = arith.constant 0 : i32
        %c0_i32_56 = arith.constant 0 : i32
        %79 = tpu.memref_slice %arg15[%29, %c0_i32_55, %c0_i32_56] : memref<2x8x768xf32, #tpu.memory_space<vmem>> -> memref<1x1x768xf32, #tpu.memory_space<vmem>>
        %80 = tpu.memref_squeeze %79 : memref<1x1x768xf32, #tpu.memory_space<vmem>> -> memref<1x768xf32, #tpu.memory_space<vmem>>
        %81 = tpu.memref_slice %arg17[%29] : memref<2x!tpu.dma_semaphore, #tpu.memory_space<semaphore_mem>> -> memref<1x!tpu.dma_semaphore, #tpu.memory_space<semaphore_mem>>
        %82 = tpu.memref_squeeze %81 : memref<1x!tpu.dma_semaphore, #tpu.memory_space<semaphore_mem>> -> memref<!tpu.dma_semaphore, #tpu.memory_space<semaphore_mem>>
        tpu.wait_dma2 semaphore(%82 : memref<!tpu.dma_semaphore, #tpu.memory_space<semaphore_mem>>) src(%78 : memref<1x768xf32, #tpu.memory_space<any>>) dst(%80 : memref<1x768xf32, #tpu.memory_space<vmem>>)
        %83 = arith.index_cast %29 : i32 to index
        %c0 = arith.constant 0 : index
        %c0_57 = arith.constant 0 : index
        %84 = vector.load %arg15[%83, %c0, %c0_57] : memref<2x8x768xf32, #tpu.memory_space<vmem>>, vector<1x8x768xf32>
        %85 = vector.shape_cast %84 : vector<1x8x768xf32> to vector<8x768xf32>
        %cst_58 = arith.constant dense<0.000000e+00> : vector<1x768xf32>
        %86 = tpu.matmul %4, %85, %cst_58 {dimension_numbers = #tpu.dot_dimension_numbers<[1], [0], [0], [1], [0, 0, 1, 1], [], []>} : vector<1x8xf32>, vector<8x768xf32>, vector<1x768xf32> -> vector<1x768xf32>
        %87 = arith.index_cast %arg18 : i32 to index
        %c0_59 = arith.constant 0 : index
        %88 = vector.load %arg16[%87, %c0_59] : memref<8x768xf32, #tpu.memory_space<vmem>>, vector<1x768xf32>
        %89 = arith.addf %88, %86 : vector<1x768xf32>
        %90 = arith.index_cast %arg18 : i32 to index
        %c0_60 = arith.constant 0 : index
        %91 = vector.load %arg16[%90, %c0_60] : memref<8x768xf32, #tpu.memory_space<vmem>>, vector<1x768xf32>
        tpu.vector_store %arg16[%90, %c0_60], %89 {strides = array<i32>} : memref<8x768xf32, #tpu.memory_space<vmem>>, vector<1x768xf32>,
      } else {
      }
    }
    %c8_i32_9 = arith.constant 8 : i32
    %c2_i32 = arith.constant 2 : i32
    %17 = arith.cmpi eq, %arg1, %c2_i32 : i32
    %18 = arith.extui %17 : i1 to i32
    %c0_i32_10 = arith.constant 0 : i32
    %19 = arith.cmpi ne, %18, %c0_i32_10 : i32
    scf.if %19 {
      %c0 = arith.constant 0 : index
      %c0_11 = arith.constant 0 : index
      %20 = vector.load %arg5[%c0, %c0_11] : memref<8x1xf32, #tpu.memory_space<vmem>>, vector<8x1xf32>
      %cst_12 = arith.constant 1.000000e+00 : f32
      %21 = vector.broadcast %cst_12 : f32 to vector<8x1xf32>
      %22 = arith.maximumf %20, %21 : vector<8x1xf32>
      %cst_13 = arith.constant 1.000000e+00 : f32
      %23 = vector.broadcast %cst_13 : f32 to vector<8x1xf32>
      %24 = arith.divf %23, %22 : vector<8x1xf32>
      %c0_14 = arith.constant 0 : index
      %c0_15 = arith.constant 0 : index
      %25 = vector.load %arg16[%c0_14, %c0_15] : memref<8x768xf32, #tpu.memory_space<vmem>>, vector<8x768xf32>
      %26 = vector.broadcast %24 : vector<8x1xf32> to vector<8x768xf32>
      %27 = arith.mulf %25, %26 : vector<8x768xf32>
      %c0_16 = arith.constant 0 : index
      %c0_17 = arith.constant 0 : index
      %28 = vector.load %arg6[%c0_16, %c0_17] : memref<1x768xf32, #tpu.memory_space<vmem>>, vector<1x768xf32>
      %29 = vector.broadcast %28 : vector<1x768xf32> to vector<8x768xf32>
      %30 = arith.mulf %27, %29 : vector<8x768xf32>
      %c0_18 = arith.constant 0 : index
      %c0_19 = arith.constant 0 : index
      %31 = vector.load %arg7[%c0_18, %c0_19] : memref<1x768xf32, #tpu.memory_space<vmem>>, vector<1x768xf32>
      %32 = vector.broadcast %31 : vector<1x768xf32> to vector<8x768xf32>
      %33 = arith.addf %30, %32 : vector<8x768xf32>
      %c0_20 = arith.constant 0 : index
      %c0_21 = arith.constant 0 : index
      %34 = vector.load %arg8[%c0_20, %c0_21] : memref<768x1024xf32, #tpu.memory_space<vmem>>, vector<768x1024xf32>
      %cst_22 = arith.constant dense<0.000000e+00> : vector<8x1024xf32>
      %35 = tpu.matmul %33, %34, %cst_22 {dimension_numbers = #tpu.dot_dimension_numbers<[1], [0], [0], [1], [0, 0, 1, 1], [], []>} : vector<8x768xf32>, vector<768x1024xf32>, vector<8x1024xf32> -> vector<8x1024xf32>
      %c0_23 = arith.constant 0 : index
      %c0_24 = arith.constant 0 : index
      %36 = vector.load %arg9[%c0_23, %c0_24] : memref<1x1024xf32, #tpu.memory_space<vmem>>, vector<1x1024xf32>
      %37 = vector.broadcast %36 : vector<1x1024xf32> to vector<8x1024xf32>
      %38 = arith.addf %35, %37 : vector<8x1024xf32>
      %39 = math.tanh %38 : vector<8x1024xf32>
      %c0_25 = arith.constant 0 : index
      %c0_26 = arith.constant 0 : index
      %40 = vector.load %arg10[%c0_25, %c0_26] : memref<1024x128xf32, #tpu.memory_space<vmem>>, vector<1024x128xf32>
      %cst_27 = arith.constant dense<0.000000e+00> : vector<8x128xf32>
      %41 = tpu.matmul %39, %40, %cst_27 {dimension_numbers = #tpu.dot_dimension_numbers<[1], [0], [0], [1], [0, 0, 1, 1], [], []>} : vector<8x1024xf32>, vector<1024x128xf32>, vector<8x128xf32> -> vector<8x128xf32>
      %c0_28 = arith.constant 0 : index
      %c0_29 = arith.constant 0 : index
      %42 = vector.load %arg11[%c0_28, %c0_29] : memref<1x128xf32, #tpu.memory_space<vmem>>, vector<1x128xf32>
      %43 = vector.broadcast %42 : vector<1x128xf32> to vector<8x128xf32>
      %44 = arith.addf %41, %43 : vector<8x128xf32>
      %c0_30 = arith.constant 0 : index
      %c0_31 = arith.constant 0 : index
      %45 = vector.load %arg12[%c0_30, %c0_31] : memref<1x128xf32, #tpu.memory_space<vmem>>, vector<1x128xf32>
      %46 = vector.broadcast %45 : vector<1x128xf32> to vector<8x128xf32>
      %47 = arith.mulf %44, %46 : vector<8x128xf32>
      %c0_32 = arith.constant 0 : index
      %c0_33 = arith.constant 0 : index
      %48 = vector.load %arg13[%c0_32, %c0_33] : memref<1x128xf32, #tpu.memory_space<vmem>>, vector<1x128xf32>
      %49 = vector.broadcast %48 : vector<1x128xf32> to vector<8x128xf32>
      %50 = arith.addf %47, %49 : vector<8x128xf32>
      %51 = math.tanh %50 : vector<8x128xf32>
      %52 = arith.mulf %51, %51 : vector<8x128xf32>
      %cst_34 = arith.constant dense<0.000000e+00> : vector<8xf32>
      %53 = vector.multi_reduction <add>, %52, %cst_34 [1] : vector<8x128xf32> to vector<8xf32>
      %54 = vector.shape_cast %53 : vector<8xf32> to vector<8x1xf32>
      %cst_35 = arith.constant 1.000000e-24 : f32
      %55 = vector.broadcast %cst_35 : f32 to vector<8x1xf32>
      %56 = arith.maximumf %54, %55 : vector<8x1xf32>
      %57 = math.rsqrt %56 : vector<8x1xf32>
      %58 = vector.broadcast %57 : vector<8x1xf32> to vector<8x128xf32>
      %59 = arith.mulf %51, %58 : vector<8x128xf32>
      %c0_36 = arith.constant 0 : index
      %c0_37 = arith.constant 0 : index
      %60 = vector.load %arg14[%c0_36, %c0_37] : memref<8x128xf32, #tpu.memory_space<vmem>>, vector<8x128xf32>
      tpu.vector_store %arg14[%c0_36, %c0_37], %59 {strides = array<i32>} : memref<8x128xf32, #tpu.memory_space<vmem>>, vector<8x128xf32>,
    } else {
    }
    return
  }
  func.func @transform_1(%arg0: i32, %arg1: i32, %arg2: memref<16x24xi32, #tpu.memory_space<smem>>, %arg3: memref<48xi32, #tpu.memory_space<smem>>) -> (i32, i32) {
    %c0_i32 = arith.constant 0 : i32
    %c0_i32_0 = arith.constant 0 : i32
    return %arg0, %c0_i32 : i32, i32
  }
  func.func @transform_2(%arg0: i32, %arg1: i32, %arg2: memref<16x24xi32, #tpu.memory_space<smem>>, %arg3: memref<48xi32, #tpu.memory_space<smem>>) -> (i32, i32) {
    %c0_i32 = arith.constant 0 : i32
    %c0_i32_0 = arith.constant 0 : i32
    %c0_i32_1 = arith.constant 0 : i32
    return %c0_i32, %c0_i32_0 : i32, i32
  }
  func.func @transform_3(%arg0: i32, %arg1: i32, %arg2: memref<16x24xi32, #tpu.memory_space<smem>>, %arg3: memref<48xi32, #tpu.memory_space<smem>>) -> (i32, i32) {
    %c0_i32 = arith.constant 0 : i32
    %c0_i32_0 = arith.constant 0 : i32
    %c0_i32_1 = arith.constant 0 : i32
    return %c0_i32, %c0_i32_0 : i32, i32
  }
  func.func @transform_4(%arg0: i32, %arg1: i32, %arg2: memref<16x24xi32, #tpu.memory_space<smem>>, %arg3: memref<48xi32, #tpu.memory_space<smem>>) -> (i32, i32) {
    %c0_i32 = arith.constant 0 : i32
    %c0_i32_0 = arith.constant 0 : i32
    %c0_i32_1 = arith.constant 0 : i32
    return %c0_i32, %c0_i32_0 : i32, i32
  }
  func.func @transform_5(%arg0: i32, %arg1: i32, %arg2: memref<16x24xi32, #tpu.memory_space<smem>>, %arg3: memref<48xi32, #tpu.memory_space<smem>>) -> (i32, i32) {
    %c0_i32 = arith.constant 0 : i32
    %c0_i32_0 = arith.constant 0 : i32
    %c0_i32_1 = arith.constant 0 : i32
    return %c0_i32, %c0_i32_0 : i32, i32
  }
  func.func @transform_6(%arg0: i32, %arg1: i32, %arg2: memref<16x24xi32, #tpu.memory_space<smem>>, %arg3: memref<48xi32, #tpu.memory_space<smem>>) -> (i32, i32) {
    %c0_i32 = arith.constant 0 : i32
    %c0_i32_0 = arith.constant 0 : i32
    %c0_i32_1 = arith.constant 0 : i32
    return %c0_i32, %c0_i32_0 : i32, i32
  }
  func.func @transform_7(%arg0: i32, %arg1: i32, %arg2: memref<16x24xi32, #tpu.memory_space<smem>>, %arg3: memref<48xi32, #tpu.memory_space<smem>>) -> (i32, i32) {
    %c0_i32 = arith.constant 0 : i32
    %c0_i32_0 = arith.constant 0 : i32
    %c0_i32_1 = arith.constant 0 : i32
    return %c0_i32, %c0_i32_0 : i32, i32
  }
  func.func @transform_8(%arg0: i32, %arg1: i32, %arg2: memref<16x24xi32, #tpu.memory_space<smem>>, %arg3: memref<48xi32, #tpu.memory_space<smem>>) -> (i32, i32) {
    %c0_i32 = arith.constant 0 : i32
    %c0_i32_0 = arith.constant 0 : i32
    %c0_i32_1 = arith.constant 0 : i32
    return %c0_i32, %c0_i32_0 : i32, i32
  }
  func.func @transform_9(%arg0: i32, %arg1: i32, %arg2: memref<16x24xi32, #tpu.memory_space<smem>>, %arg3: memref<48xi32, #tpu.memory_space<smem>>) -> (i32, i32) {
    %c0_i32 = arith.constant 0 : i32
    %c0_i32_0 = arith.constant 0 : i32
    %c0_i32_1 = arith.constant 0 : i32
    return %c0_i32, %c0_i32_0 : i32, i32
  }
  func.func @transform_10(%arg0: i32, %arg1: i32, %arg2: memref<16x24xi32, #tpu.memory_space<smem>>, %arg3: memref<48xi32, #tpu.memory_space<smem>>) -> (i32, i32) {
    %c0_i32 = arith.constant 0 : i32
    %c0_i32_0 = arith.constant 0 : i32
    return %arg0, %c0_i32 : i32, i32
  }
}

</mosaic_0001>

<llo_original>
// kernel: tpu_custom_call.1
$region0: #{tpu_custom_call.1}
  #allocation0 [shape = 'u32[]', space=smem, size = 0x4, offset = 0x4, fixed_abs, tag = 'smem constant byte address 0x4 - core index']
  #allocation1 [shape = 'u32[144,128]{1,0:T(1,128)}', space=vmem, size = 0x12000, scoped, tag = 'internal scratch']
  #allocation2 [shape = 'f32[2,8,768]{2,1,0:T(8,128)}', space=vmem, size = 0xc000, scoped, tag = 'scratch operand']
  #allocation3 [shape = 'f32[8,768]{1,0:T(8,128)}', space=vmem, size = 0x6000, scoped, tag = 'scratch operand']
  #allocation4 [shape = 's32[2]{0}', space=sflag, size = 0x8, scoped, tag = 'scratch operand']
  #allocation5 [shape = 's32[1]{0}', space=sflag, size = 0x4, scoped, tag = 'scoped memory for tpu_custom_call.1']
  #allocation6 [shape = 'u8[8192]{0}', space=smem, size = 0x2000, scoped, tag = 'prefetched SMEM operand 0']
  #allocation7 [shape = 'u8[512]{0}', space=smem, size = 0x200, scoped, tag = 'prefetched SMEM operand 1']
  #allocation23 [shape = 's32[]', space=sflag, size = 0x4, offset = 0, fixed_abs, tag = 'sflag constant byte address 0x0 - dummy sync flag']
  #allocation24 [shape = 's32[]', space=sflag, size = 0x4, offset = 0, fixed_abs, tag = 'sflag constant byte address 0x0 - dummy sync flag']
  #allocation25 [shape = 's32[]', space=sflag, size = 0x4, offset = 0, fixed_abs, tag = 'sflag constant byte address 0x0 - dummy sync flag']
  #allocation26 [shape = 's32[]', space=sflag, size = 0x4, offset = 0, fixed_abs, tag = 'sflag constant byte address 0x0 - dummy sync flag']
  #allocation27 [shape = 's32[]', space=sflag, size = 0x4, offset = 0, fixed_abs, tag = 'sflag constant byte address 0x0 - dummy sync flag']
  #allocation28 [shape = 's32[]', space=sflag, size = 0x4, offset = 0, fixed_abs, tag = 'sflag constant byte address 0x0 - dummy sync flag']
  #allocation29 [shape = 's32[]', space=sflag, size = 0x4, offset = 0, fixed_abs, tag = 'sflag constant byte address 0x0 - dummy sync flag']
  #allocation30 [shape = 's32[]', space=sflag, size = 0x4, offset = 0, fixed_abs, tag = 'sflag constant byte address 0x0 - dummy sync flag']
  #allocation31 [shape = 's32[]', space=sflag, size = 0x4, offset = 0, fixed_abs, tag = 'sflag constant byte address 0x0 - dummy sync flag']
  #allocation32 [shape = 's32[]', space=sflag, size = 0x4, offset = 0, fixed_abs, tag = 'sflag constant byte address 0x0 - dummy sync flag']
  #allocation33 [shape = 's32[]', space=sflag, size = 0x4, offset = 0, fixed_abs, tag = 'sflag constant byte address 0x0 - dummy sync flag']
  #allocation34 [shape = 's32[]', space=sflag, size = 0x4, offset = 0, fixed_abs, tag = 'sflag constant byte address 0x0 - dummy sync flag']
  #allocation35 [shape = 's32[]', space=sflag, size = 0x4, offset = 0, fixed_abs, tag = 'sflag constant byte address 0x0 - dummy sync flag']
  #allocation36 [shape = 's32[]', space=sflag, size = 0x4, offset = 0, fixed_abs, tag = 'sflag constant byte address 0x0 - dummy sync flag']
  #allocation37 [shape = 's32[]', space=sflag, size = 0x4, offset = 0, fixed_abs, tag = 'sflag constant byte address 0x0 - dummy sync flag']
  #allocation38 [shape = 's32[]', space=sflag, size = 0x4, offset = 0, fixed_abs, tag = 'sflag constant byte address 0x0 - dummy sync flag']
  %s0 = inlined_call_operand.hbm [shape: s32[16,24], index: 0, kind: input, shape index: {}]
  %s1 = inlined_call_operand.hbm [shape: s32[48], index: 1, kind: input, shape index: {}]
  %s2 = inlined_call_operand.hbm [shape: f32[65,768], index: 2, kind: input, shape index: {}]
  %s3 = inlined_call_operand.vmem [shape: f32[16,1], index: 3, kind: input, shape index: {}]
  %s4 = inlined_call_operand.hbm [shape: f32[1,768], index: 4, kind: input, shape index: {}]
  %s5 = inlined_call_operand.hbm [shape: f32[1,768], index: 5, kind: input, shape index: {}]
  %s6 = inlined_call_operand.hbm [shape: f32[768,1024], index: 6, kind: input, shape index: {}]
  %s7 = inlined_call_operand.hbm [shape: f32[1,1024], index: 7, kind: input, shape index: {}]
  %s8 = inlined_call_operand.hbm [shape: f32[1024,128], index: 8, kind: input, shape index: {}]
  %s9 = inlined_call_operand.hbm [shape: f32[1,128], index: 9, kind: input, shape index: {}]
  %s10 = inlined_call_operand.hbm [shape: f32[1,128], index: 10, kind: input, shape index: {}]
  %s11 = inlined_call_operand.hbm [shape: f32[1,128], index: 11, kind: input, shape index: {}]
  %s12 = inlined_call_operand.hbm [shape: f32[16,128], index: 12, kind: output, shape index: {}]
  %s13 = sld [smem:[#allocation0]]
  $region132: #{tpu_custom_call.1} parent=0
    _
  %s15 = ssub.s32 1, %s13
  %s16 = scalar_select 0, %s15, %s13
  %18 = dma.hbm_to_smem %s0, 256, [#allocation6], [#allocation5]
  %20 = dma.hbm_to_smem %s1, 16, [#allocation7], [#allocation5]
  %21 = dma.done [#allocation5], 272
  %22 = sfence
  $region1: #{tpu_custom_call.1} parent=0
    #allocation8 [shape = 'u8[3072]{0}', space=vmem, size = 0xc00, scoped, tag = 'input window, operand 4, single buffered']
    #allocation9 [shape = 's32[2]{0}', space=sflag, size = 0x8, scoped, tag = 'scoped memory for tpu_custom_call.1']
    #allocation10 [shape = 's32[2]{0}', space=sflag, size = 0x8, scoped, tag = 'scoped memory for tpu_custom_call.1']
    #allocation11 [shape = 'u8[3072]{0}', space=vmem, size = 0xc00, scoped, tag = 'input window, operand 5, single buffered']
    #allocation12 [shape = 's32[1]{0}', space=sflag, size = 0x4, scoped, tag = 'scoped memory for tpu_custom_call.1']
    #allocation13 [shape = 'u8[3145728]{0}', space=vmem, size = 0x300000, scoped, tag = 'input window, operand 6, single buffered']
    #allocation14 [shape = 'u8[4096]{0}', space=vmem, size = 0x1000, scoped, tag = 'input window, operand 7, single buffered']
    #allocation15 [shape = 's32[1]{0}', space=sflag, size = 0x4, scoped, tag = 'scoped memory for tpu_custom_call.1']
    #allocation16 [shape = 'u8[524288]{0}', space=vmem, size = 0x80000, scoped, tag = 'input window, operand 8, single buffered']
    #allocation17 [shape = 'u8[512]{0}', space=vmem, size = 0x400, scoped, tag = 'input window, operand 9, single buffered']
    #allocation18 [shape = 's32[1]{0}', space=sflag, size = 0x4, scoped, tag = 'scoped memory for tpu_custom_call.1']
    #allocation19 [shape = 'u8[512]{0}', space=vmem, size = 0x400, scoped, tag = 'input window, operand 10, single buffered']
    #allocation20 [shape = 'u8[512]{0}', space=vmem, size = 0x400, scoped, tag = 'input window, operand 11, single buffered']
    #allocation21 [shape = 's32[1]{0}', space=sflag, size = 0x4, scoped, tag = 'scoped memory for tpu_custom_call.1']
    #allocation22 [shape = 'u8[8192]{0}', space=vmem, size = 0x2000, scoped, tag = 'output window, operand 0']
    %23 = vsyncpa [#allocation9], 0
    %24 = vsyncpa [#allocation12], 0
    %25 = vsyncpa [#allocation15], 0
    %26 = vsyncpa [#allocation18], 0
    %27 = vsyncpa [#allocation21], 0
    %28 = vsyncpa [#allocation10], 0
    %s29 = scalar_lea.sflag [#allocation10], 1
    %30 = vsyncpa %s29, 0
    loop: start=0, step=1, limit=8
    $region2: #{tpu_custom_call.1} parent=1 // loop_pre_header
      _
    $region3: #{tpu_custom_call.1} parent=1 // loop_header
      %s32 = sphi 0, %s36
      %p33 = scmp.ge.s32.totalorder %s32, 8
      %s39 = sphi 0, %s51
      %s40 = sphi 0, %s47
      %s41 = sphi 0, %s39
      %s42 = sphi 0, %s40
      %s43 = sphi 0, %s41
      %s44 = sphi 0, %s42
      %s54 = sphi 0, %s56
      %s57 = sphi 0, %s54
      %s58 = sphi 0, %s57
      %s74 = sphi 0, %s58
      %s78 = sphi 0, %s78
      %s80 = sphi 0, %s78
      %s81 = sphi 0, %s80
      %s95 = sphi 0, %s81
      %s99 = sphi 0, %s99
      %s101 = sphi 0, %s99
      %s102 = sphi 0, %s101
      %s116 = sphi 0, %s102
      %s120 = sphi 0, %s120
      %s122 = sphi 0, %s120
      %s123 = sphi 0, %s122
      %s137 = sphi 0, %s123
      %s141 = sphi 0, %s141
      %s143 = sphi 0, %s141
      %s144 = sphi 0, %s143
      %s158 = sphi 0, %s144
      %s162 = sphi 0, %s162
      %s164 = sphi 0, %s162
      %s165 = sphi 0, %s164
      %s179 = sphi 0, %s165
      %s183 = sphi 0, %s183
      %s185 = sphi 0, %s183
      %s186 = sphi 0, %s185
      %s200 = sphi 0, %s186
      %s204 = sphi 0, %s204
      %s206 = sphi 0, %s204
      %s207 = sphi 0, %s206
      %s221 = sphi 0, %s207
      %s225 = sphi 0, %s225
      %s227 = sphi 0, %s225
      %s228 = sphi 0, %s227
      %s242 = sphi 0, %s228
      %s248 = sphi 0, %s250
      %s251 = sphi 0, %s248
      %s252 = sphi 0, %s251
      %s268 = sphi 0, %s252
    $region4: #{tpu_custom_call.1} parent=1 // loop_header_branch
      %35 = sbr.rel (%p33) target = $region8
    $region5: #{tpu_custom_call.1} parent=1 // loop_body
      %s37 = ssub.s32 %s32, 1
      %s38 = ssub.s32 %s32, 2
      %s45 = sadd.s32 1, %s40
      %p46 = scmp.ge.s32.totalorder %s45, 3
      %s47 = scalar_select %p46, 0, %s45
      %s48 = sadd.s32 1, %s39
      %s49 = scalar_select %p46, %s48, %s39
      %p50 = scmp.ge.s32.totalorder %s49, 2
      %s51 = scalar_select %p50, 0, %s49
      %s52 = ssub.s32 %s39, %s51
      %p53 = scmp.eq.s32.totalorder %s52, 0
      %s55 = sadd.s32 %s54, 1
      %s56 = scalar_select %p53, %s54, %s55
      %p59 = pneg %p53
      %p60 = scmp.eq.s32.totalorder %s32, 5
      %p61 = por %p59, %p60
      %p62 = scmp.ne.s32.totalorder %s54, %s57
      %p63 = scmp.eq.s32.totalorder %s32, 0
      %p64 = por %p62, %p63
      %p65 = scmp.ne.s32.totalorder %s54, %s57
      %p66 = scmp.eq.s32.totalorder %s37, 5
      %p67 = por %p65, %p66
      %p68 = scmp.ne.s32.totalorder %s57, %s58
      %p69 = scmp.eq.s32.totalorder %s37, 0
      %p70 = por %p68, %p69
      %p71 = scmp.ne.s32.totalorder %s57, %s58
      %p72 = scmp.eq.s32.totalorder %s38, 5
      %p73 = por %p71, %p72
      %p75 = scmp.ne.s32.totalorder %s58, %s74
      %p76 = scmp.eq.s32.totalorder %s38, 0
      %p77 = por %p75, %p76
      %s79 = sadd.s32 %s78, 1
      %p82 = scmp.eq.s32.totalorder %s32, 5
      %p83 = scmp.ne.s32.totalorder %s78, %s80
      %p84 = scmp.eq.s32.totalorder %s32, 0
      %p85 = por %p83, %p84
      %p86 = scmp.ne.s32.totalorder %s78, %s80
      %p87 = scmp.eq.s32.totalorder %s37, 5
      %p88 = por %p86, %p87
      %p89 = scmp.ne.s32.totalorder %s80, %s81
      %p90 = scmp.eq.s32.totalorder %s37, 0
      %p91 = por %p89, %p90
      %p92 = scmp.ne.s32.totalorder %s80, %s81
      %p93 = scmp.eq.s32.totalorder %s38, 5
      %p94 = por %p92, %p93
      %p96 = scmp.ne.s32.totalorder %s81, %s95
      %p97 = scmp.eq.s32.totalorder %s38, 0
      %p98 = por %p96, %p97
      %s100 = sadd.s32 %s99, 1
      %p103 = scmp.eq.s32.totalorder %s32, 5
      %p104 = scmp.ne.s32.totalorder %s99, %s101
      %p105 = scmp.eq.s32.totalorder %s32, 0
      %p106 = por %p104, %p105
      %p107 = scmp.ne.s32.totalorder %s99, %s101
      %p108 = scmp.eq.s32.totalorder %s37, 5
      %p109 = por %p107, %p108
      %p110 = scmp.ne.s32.totalorder %s101, %s102
      %p111 = scmp.eq.s32.totalorder %s37, 0
      %p112 = por %p110, %p111
      %p113 = scmp.ne.s32.totalorder %s101, %s102
      %p114 = scmp.eq.s32.totalorder %s38, 5
      %p115 = por %p113, %p114
      %p117 = scmp.ne.s32.totalorder %s102, %s116
      %p118 = scmp.eq.s32.totalorder %s38, 0
      %p119 = por %p117, %p118
      %s121 = sadd.s32 %s120, 1
      %p124 = scmp.eq.s32.totalorder %s32, 5
      %p125 = scmp.ne.s32.totalorder %s120, %s122
      %p126 = scmp.eq.s32.totalorder %s32, 0
      %p127 = por %p125, %p126
      %p128 = scmp.ne.s32.totalorder %s120, %s122
      %p129 = scmp.eq.s32.totalorder %s37, 5
      %p130 = por %p128, %p129
      %p131 = scmp.ne.s32.totalorder %s122, %s123
      %p132 = scmp.eq.s32.totalorder %s37, 0
      %p133 = por %p131, %p132
      %p134 = scmp.ne.s32.totalorder %s122, %s123
      %p135 = scmp.eq.s32.totalorder %s38, 5
      %p136 = por %p134, %p135
      %p138 = scmp.ne.s32.totalorder %s123, %s137
      %p139 = scmp.eq.s32.totalorder %s38, 0
      %p140 = por %p138, %p139
      %s142 = sadd.s32 %s141, 1
      %p145 = scmp.eq.s32.totalorder %s32, 5
      %p146 = scmp.ne.s32.totalorder %s141, %s143
      %p147 = scmp.eq.s32.totalorder %s32, 0
      %p148 = por %p146, %p147
      %p149 = scmp.ne.s32.totalorder %s141, %s143
      %p150 = scmp.eq.s32.totalorder %s37, 5
      %p151 = por %p149, %p150
      %p152 = scmp.ne.s32.totalorder %s143, %s144
      %p153 = scmp.eq.s32.totalorder %s37, 0
      %p154 = por %p152, %p153
      %p155 = scmp.ne.s32.totalorder %s143, %s144
      %p156 = scmp.eq.s32.totalorder %s38, 5
      %p157 = por %p155, %p156
      %p159 = scmp.ne.s32.totalorder %s144, %s158
      %p160 = scmp.eq.s32.totalorder %s38, 0
      %p161 = por %p159, %p160
      %s163 = sadd.s32 %s162, 1
      %p166 = scmp.eq.s32.totalorder %s32, 5
      %p167 = scmp.ne.s32.totalorder %s162, %s164
      %p168 = scmp.eq.s32.totalorder %s32, 0
      %p169 = por %p167, %p168
      %p170 = scmp.ne.s32.totalorder %s162, %s164
      %p171 = scmp.eq.s32.totalorder %s37, 5
      %p172 = por %p170, %p171
      %p173 = scmp.ne.s32.totalorder %s164, %s165
      %p174 = scmp.eq.s32.totalorder %s37, 0
      %p175 = por %p173, %p174
      %p176 = scmp.ne.s32.totalorder %s164, %s165
      %p177 = scmp.eq.s32.totalorder %s38, 5
      %p178 = por %p176, %p177
      %p180 = scmp.ne.s32.totalorder %s165, %s179
      %p181 = scmp.eq.s32.totalorder %s38, 0
      %p182 = por %p180, %p181
      %s184 = sadd.s32 %s183, 1
      %p187 = scmp.eq.s32.totalorder %s32, 5
      %p188 = scmp.ne.s32.totalorder %s183, %s185
      %p189 = scmp.eq.s32.totalorder %s32, 0
      %p190 = por %p188, %p189
      %p191 = scmp.ne.s32.totalorder %s183, %s185
      %p192 = scmp.eq.s32.totalorder %s37, 5
      %p193 = por %p191, %p192
      %p194 = scmp.ne.s32.totalorder %s185, %s186
      %p195 = scmp.eq.s32.totalorder %s37, 0
      %p196 = por %p194, %p195
      %p197 = scmp.ne.s32.totalorder %s185, %s186
      %p198 = scmp.eq.s32.totalorder %s38, 5
      %p199 = por %p197, %p198
      %p201 = scmp.ne.s32.totalorder %s186, %s200
      %p202 = scmp.eq.s32.totalorder %s38, 0
      %p203 = por %p201, %p202
      %s205 = sadd.s32 %s204, 1
      %p208 = scmp.eq.s32.totalorder %s32, 5
      %p209 = scmp.ne.s32.totalorder %s204, %s206
      %p210 = scmp.eq.s32.totalorder %s32, 0
      %p211 = por %p209, %p210
      %p212 = scmp.ne.s32.totalorder %s204, %s206
      %p213 = scmp.eq.s32.totalorder %s37, 5
      %p214 = por %p212, %p213
      %p215 = scmp.ne.s32.totalorder %s206, %s207
      %p216 = scmp.eq.s32.totalorder %s37, 0
      %p217 = por %p215, %p216
      %p218 = scmp.ne.s32.totalorder %s206, %s207
      %p219 = scmp.eq.s32.totalorder %s38, 5
      %p220 = por %p218, %p219
      %p222 = scmp.ne.s32.totalorder %s207, %s221
      %p223 = scmp.eq.s32.totalorder %s38, 0
      %p224 = por %p222, %p223
      %s226 = sadd.s32 %s225, 1
      %p229 = scmp.eq.s32.totalorder %s32, 5
      %p230 = scmp.ne.s32.totalorder %s225, %s227
      %p231 = scmp.eq.s32.totalorder %s32, 0
      %p232 = por %p230, %p231
      %p233 = scmp.ne.s32.totalorder %s225, %s227
      %p234 = scmp.eq.s32.totalorder %s37, 5
      %p235 = por %p233, %p234
      %p236 = scmp.ne.s32.totalorder %s227, %s228
      %p237 = scmp.eq.s32.totalorder %s37, 0
      %p238 = por %p236, %p237
      %p239 = scmp.ne.s32.totalorder %s227, %s228
      %p240 = scmp.eq.s32.totalorder %s38, 5
      %p241 = por %p239, %p240
      %p243 = scmp.ne.s32.totalorder %s228, %s242
      %p244 = scmp.eq.s32.totalorder %s38, 0
      %p245 = por %p243, %p244
      %s246 = ssub.s32 %s39, %s51
      %p247 = scmp.eq.s32.totalorder %s246, 0
      %s249 = sadd.s32 %s248, 1
      %s250 = scalar_select %p247, %s248, %s249
      %p253 = pneg %p247
      %p254 = scmp.eq.s32.totalorder %s32, 5
      %p255 = por %p253, %p254
      %p256 = scmp.ne.s32.totalorder %s248, %s251
      %p257 = scmp.eq.s32.totalorder %s32, 0
      %p258 = por %p256, %p257
      %p259 = scmp.ne.s32.totalorder %s248, %s251
      %p260 = scmp.eq.s32.totalorder %s37, 5
      %p261 = por %p259, %p260
      %p262 = scmp.ne.s32.totalorder %s251, %s252
      %p263 = scmp.eq.s32.totalorder %s37, 0
      %p264 = por %p262, %p263
      %p265 = scmp.ne.s32.totalorder %s251, %s252
      %p266 = scmp.eq.s32.totalorder %s38, 5
      %p267 = por %p265, %p266
      %p269 = scmp.ne.s32.totalorder %s252, %s268
      %p270 = scmp.eq.s32.totalorder %s38, 0
      %p271 = por %p269, %p270
      %p272 = scmp.le.s32.totalorder 1, %s32
      %p273 = scmp.lt.s32.totalorder %s32, 7
      %p274 = pnand %p272, %p273
      %p275 = pneg %p274
      // Predicated region
      $region9: #{tpu_custom_call.1} parent=5 // pred_check
        _
      $region10: #{tpu_custom_call.1} parent=5 // pred_check_branch
        %277 = sbr.rel (%p274) target = $region12
      $region11: #{tpu_custom_call.1} parent=5 // pred_region
        %s278 = ssub.s32 %s32, 1
        // Predicated region
        $region13: #{tpu_custom_call.1} parent=11 // pred_check
          %p279 = pneg %p91
        $region14: #{tpu_custom_call.1} parent=11 // pred_check_branch
          %281 = sbr.rel (%p279) target = $region16
        $region15: #{tpu_custom_call.1} parent=11 // pred_region
          %s283 = ssub.s32 96, 96
          %284 = vsyncadd [#allocation9], %s283
          %s286 = sshll.u32 [#allocation8], 4
          %s287 = int_to_ptr.vmem [resolvable:$true] %s286
          %289 = dma.hbm_to_vmem [thread:$0]  %s4, 96, %s287, [#allocation9]
        $region16: #{tpu_custom_call.1} parent=11 // pred_fallthru
          _
        // Predicated region
        $region17: #{tpu_custom_call.1} parent=11 // pred_check
          %p290 = pneg %p112
        $region18: #{tpu_custom_call.1} parent=11 // pred_check_branch
          %292 = sbr.rel (%p290) target = $region20
        $region19: #{tpu_custom_call.1} parent=11 // pred_region
          %s294 = ssub.s32 96, 96
          %295 = vsyncadd [#allocation12], %s294
          %s297 = sshll.u32 [#allocation11], 4
          %s298 = int_to_ptr.vmem [resolvable:$true] %s297
          %300 = dma.hbm_to_vmem [thread:$0]  %s5, 96, %s298, [#allocation12]
        $region20: #{tpu_custom_call.1} parent=11 // pred_fallthru
          _
        // Predicated region
        $region21: #{tpu_custom_call.1} parent=11 // pred_check
          %p301 = pneg %p133
        $region22: #{tpu_custom_call.1} parent=11 // pred_check_branch
          %303 = sbr.rel (%p301) target = $region24
        $region23: #{tpu_custom_call.1} parent=11 // pred_region
          %s305 = ssub.s32 98304, 98304
          %306 = vsyncadd [#allocation12], %s305
          %s307 = sshll.u32 [#allocation13], 4
          %s308 = int_to_ptr.vmem [resolvable:$true] %s307
          %313 = dma.hbm_to_vmem [thread:$0]  %s6, 98304, %s308, [#allocation12], 1024, 1024, 64
        $region24: #{tpu_custom_call.1} parent=11 // pred_fallthru
          _
        // Predicated region
        $region25: #{tpu_custom_call.1} parent=11 // pred_check
          %p314 = pneg %p154
        $region26: #{tpu_custom_call.1} parent=11 // pred_check_branch
          %316 = sbr.rel (%p314) target = $region28
        $region27: #{tpu_custom_call.1} parent=11 // pred_region
          %s318 = ssub.s32 128, 128
          %319 = vsyncadd [#allocation15], %s318
          %s321 = sshll.u32 [#allocation14], 4
          %s322 = int_to_ptr.vmem [resolvable:$true] %s321
          %324 = dma.hbm_to_vmem [thread:$0]  %s7, 128, %s322, [#allocation15]
        $region28: #{tpu_custom_call.1} parent=11 // pred_fallthru
          _
        // Predicated region
        $region29: #{tpu_custom_call.1} parent=11 // pred_check
          %p325 = pneg %p175
        $region30: #{tpu_custom_call.1} parent=11 // pred_check_branch
          %327 = sbr.rel (%p325) target = $region32
        $region31: #{tpu_custom_call.1} parent=11 // pred_region
          %s329 = ssub.s32 16384, 16384
          %330 = vsyncadd [#allocation15], %s329
          %s331 = sshll.u32 [#allocation16], 4
          %s332 = int_to_ptr.vmem [resolvable:$true] %s331
          %337 = dma.hbm_to_vmem [thread:$0]  %s8, 16384, %s332, [#allocation15], 128, 128, 8
        $region32: #{tpu_custom_call.1} parent=11 // pred_fallthru
          _
        // Predicated region
        $region33: #{tpu_custom_call.1} parent=11 // pred_check
          %p338 = pneg %p196
        $region34: #{tpu_custom_call.1} parent=11 // pred_check_branch
          %340 = sbr.rel (%p338) target = $region36
        $region35: #{tpu_custom_call.1} parent=11 // pred_region
          %s342 = ssub.s32 16, 16
          %343 = vsyncadd [#allocation18], %s342
          %s345 = sshll.u32 [#allocation17], 4
          %s346 = int_to_ptr.vmem [resolvable:$true] %s345
          %348 = dma.hbm_to_vmem [thread:$0]  %s9, 16, %s346, [#allocation18]
        $region36: #{tpu_custom_call.1} parent=11 // pred_fallthru
          _
        // Predicated region
        $region37: #{tpu_custom_call.1} parent=11 // pred_check
          %p349 = pneg %p217
        $region38: #{tpu_custom_call.1} parent=11 // pred_check_branch
          %351 = sbr.rel (%p349) target = $region40
        $region39: #{tpu_custom_call.1} parent=11 // pred_region
          %s353 = ssub.s32 16, 16
          %354 = vsyncadd [#allocation18], %s353
          %s356 = sshll.u32 [#allocation19], 4
          %s357 = int_to_ptr.vmem [resolvable:$true] %s356
          %359 = dma.hbm_to_vmem [thread:$0]  %s10, 16, %s357, [#allocation18]
        $region40: #{tpu_custom_call.1} parent=11 // pred_fallthru
          _
        // Predicated region
        $region41: #{tpu_custom_call.1} parent=11 // pred_check
          %p360 = pneg %p238
        $region42: #{tpu_custom_call.1} parent=11 // pred_check_branch
          %362 = sbr.rel (%p360) target = $region44
        $region43: #{tpu_custom_call.1} parent=11 // pred_region
          %s364 = ssub.s32 16, 16
          %365 = vsyncadd [#allocation21], %s364
          %s367 = sshll.u32 [#allocation20], 4
          %s368 = int_to_ptr.vmem [resolvable:$true] %s367
          %370 = dma.hbm_to_vmem [thread:$0]  %s11, 16, %s368, [#allocation21]
        $region44: #{tpu_custom_call.1} parent=11 // pred_fallthru
          _
      $region12: #{tpu_custom_call.1} parent=5 // pred_fallthru
        _
      %p371 = scmp.lt.s32.totalorder %s32, 6
      // Predicated region
      $region45: #{tpu_custom_call.1} parent=5 // pred_check
        %p372 = pneg %p371
      $region46: #{tpu_custom_call.1} parent=5 // pred_check_branch
        %374 = sbr.rel (%p372) target = $region48
      $region47: #{tpu_custom_call.1} parent=5 // pred_region
        // Predicated region
        $region49: #{tpu_custom_call.1} parent=47 // pred_check
          %p375 = pneg %p64
        $region50: #{tpu_custom_call.1} parent=47 // pred_check_branch
          %377 = sbr.rel (%p375) target = $region52
        $region51: #{tpu_custom_call.1} parent=47 // pred_region
          %p378 = scmp.lt.s32.totalorder %s39, 1
          %s379 = scalar_select %p378, %s39, 1
          %s380 = smul.addr %s379, 8
          %s381 = scalar_lea.vmem %s3, %s380
        $region52: #{tpu_custom_call.1} parent=47 // pred_fallthru
          _
      $region48: #{tpu_custom_call.1} parent=5 // pred_fallthru
        _
      %p382 = scmp.le.s32.totalorder 1, %s32
      %p383 = scmp.lt.s32.totalorder %s32, 7
      %p384 = pnand %p382, %p383
      %p385 = pneg %p384
      // Predicated region
      $region53: #{tpu_custom_call.1} parent=5 // pred_check
        _
      $region54: #{tpu_custom_call.1} parent=5 // pred_check_branch
        %387 = sbr.rel (%p384) target = $region56
      $region55: #{tpu_custom_call.1} parent=5 // pred_region
        %s388 = ssub.s32 %s32, 1
        // Predicated region
        $region57: #{tpu_custom_call.1} parent=55 // pred_check
          %p389 = pneg %p91
        $region58: #{tpu_custom_call.1} parent=55 // pred_check_branch
          %391 = sbr.rel (%p389) target = $region60
        $region59: #{tpu_custom_call.1} parent=55 // pred_region
          %392 = dma.done [#allocation9], 96
        $region60: #{tpu_custom_call.1} parent=55 // pred_fallthru
          _
        // Predicated region
        $region61: #{tpu_custom_call.1} parent=55 // pred_check
          %p393 = pneg %p112
        $region62: #{tpu_custom_call.1} parent=55 // pred_check_branch
          %395 = sbr.rel (%p393) target = $region64
        $region63: #{tpu_custom_call.1} parent=55 // pred_region
          %396 = dma.done [#allocation12], 96
        $region64: #{tpu_custom_call.1} parent=55 // pred_fallthru
          _
        // Predicated region
        $region65: #{tpu_custom_call.1} parent=55 // pred_check
          %p397 = pneg %p133
        $region66: #{tpu_custom_call.1} parent=55 // pred_check_branch
          %399 = sbr.rel (%p397) target = $region68
        $region67: #{tpu_custom_call.1} parent=55 // pred_region
          %400 = dma.done [#allocation12], 98304
        $region68: #{tpu_custom_call.1} parent=55 // pred_fallthru
          _
        // Predicated region
        $region69: #{tpu_custom_call.1} parent=55 // pred_check
          %p401 = pneg %p154
        $region70: #{tpu_custom_call.1} parent=55 // pred_check_branch
          %403 = sbr.rel (%p401) target = $region72
        $region71: #{tpu_custom_call.1} parent=55 // pred_region
          %404 = dma.done [#allocation15], 128
        $region72: #{tpu_custom_call.1} parent=55 // pred_fallthru
          _
        // Predicated region
        $region73: #{tpu_custom_call.1} parent=55 // pred_check
          %p405 = pneg %p175
        $region74: #{tpu_custom_call.1} parent=55 // pred_check_branch
          %407 = sbr.rel (%p405) target = $region76
        $region75: #{tpu_custom_call.1} parent=55 // pred_region
          %408 = dma.done [#allocation15], 16384
        $region76: #{tpu_custom_call.1} parent=55 // pred_fallthru
          _
        // Predicated region
        $region77: #{tpu_custom_call.1} parent=55 // pred_check
          %p409 = pneg %p196
        $region78: #{tpu_custom_call.1} parent=55 // pred_check_branch
          %411 = sbr.rel (%p409) target = $region80
        $region79: #{tpu_custom_call.1} parent=55 // pred_region
          %412 = dma.done [#allocation18], 16
        $region80: #{tpu_custom_call.1} parent=55 // pred_fallthru
          _
        // Predicated region
        $region81: #{tpu_custom_call.1} parent=55 // pred_check
          %p413 = pneg %p217
        $region82: #{tpu_custom_call.1} parent=55 // pred_check_branch
          %415 = sbr.rel (%p413) target = $region84
        $region83: #{tpu_custom_call.1} parent=55 // pred_region
          %416 = dma.done [#allocation18], 16
        $region84: #{tpu_custom_call.1} parent=55 // pred_fallthru
          _
        // Predicated region
        $region85: #{tpu_custom_call.1} parent=55 // pred_check
          %p417 = pneg %p238
        $region86: #{tpu_custom_call.1} parent=55 // pred_check_branch
          %419 = sbr.rel (%p417) target = $region88
        $region87: #{tpu_custom_call.1} parent=55 // pred_region
          %420 = dma.done [#allocation21], 16
        $region88: #{tpu_custom_call.1} parent=55 // pred_fallthru
          _
        %p421 = scmp.lt.s32.totalorder %s41, 1
        %s422 = scalar_select %p421, %s41, 1
        %s423 = smul.addr %s422, 8
        %s424 = scalar_lea.vmem %s3, %s423
        %p425 = pneg %p70
        %p426 = pneg %p67
        %p427 = pneg %p91
        %p428 = pneg %p88
        %p429 = pneg %p112
        %p430 = pneg %p109
        %p431 = pneg %p133
        %p432 = pneg %p130
        %p433 = pneg %p154
        %p434 = pneg %p151
        %p435 = pneg %p175
        %p436 = pneg %p172
        %p437 = pneg %p196
        %p438 = pneg %p193
        %p439 = pneg %p217
        %p440 = pneg %p214
        %p441 = pneg %p238
        %p442 = pneg %p235
        %p443 = pneg %p264
        %p444 = pneg %p261
        %s445 = sand.u32 %s251, 1
        %s446 = scalar_lea.sflag [#allocation10], %s445
        %s447 = sand.u32 %s251, 1
        %s448 = smul.addr %s447, 8
        %s449 = scalar_lea.vmem [#allocation22], %s448
        %p450 = scmp.lt.s32.totalorder %s41, 1
        %s451 = scalar_select %p450, %s41, 1
        %s452 = smul.addr %s451, 8
        %s453 = scalar_lea.vmem %s3, %s452
        %s454 = smul.u32 %s42, 8
        %p455 = scmp.eq.s32.totalorder %s42, 0
        // Predicated region
        $region89: #{tpu_custom_call.1} parent=55 // pred_check
          %p456 = pneg %p455
        $region90: #{tpu_custom_call.1} parent=55 // pred_check_branch
          %458 = sbr.rel (%p456) target = $region92
        $region91: #{tpu_custom_call.1} parent=55 // pred_region
          %459 = vst [vmem:[#allocation3] sm:$0xff] 0.0
          %460 = vst [vmem:[#allocation3 + $0x8] sm:$0xff] 0.0
          %461 = vst [vmem:[#allocation3 + $0x10] sm:$0xff] 0.0
          %462 = vst [vmem:[#allocation3 + $0x18] sm:$0xff] 0.0
          %463 = vst [vmem:[#allocation3 + $0x20] sm:$0xff] 0.0
          %464 = vst [vmem:[#allocation3 + $0x28] sm:$0xff] 0.0
        $region92: #{tpu_custom_call.1} parent=55 // pred_fallthru
          _
        %s465 = smul.u32 %s41, 8
        %s466 = smul.u32 %s41, 24
        %s467 = sadd.s32 %s466, %s42
        %s468 = sld [smem:[#allocation7 + %s467]]
        %p469 = scmp.gt.s32.totalorder %s468, 0
        // Predicated region
        $region93: #{tpu_custom_call.1} parent=55 // pred_check
          %p470 = pneg %p469
        $region94: #{tpu_custom_call.1} parent=55 // pred_check_branch
          %472 = sbr.rel (%p470) target = $region96
        $region95: #{tpu_custom_call.1} parent=55 // pred_region
          %s473 = sadd.s32 %s454, 0
          %s474 = sshra.s32 %s473, 7
          %s475 = sand.u32 %s473, 127
          %s476 = sadd.s32 %s474, %s465
          %s477 = smul.u32 %s476, 128
          %s478 = sshra.s32 %s473, 7
          %s479 = sand.u32 %s473, 127
          %s480 = sadd.s32 %s477, %s479
          %s481 = sld [smem:[#allocation6 + %s480]]
          %s482 = sshrl.u32 %s481, 3
          %s483 = sand.u32 %s481, 7
          %s484 = smul.u32 %s482, 48
          %s485 = sadd.s32 %s483, %s484
          %s486 = smul.addr %s485, 16
          %s487 = scalar_lea.hbm %s2, %s486
          %s488 = smul.u32 0, 48
          %s489 = sadd.s32 0, %s488
          %s490 = scalar_lea.vmem [#allocation2], %s489
          %s492 = sshll.u32 %s490, 4
          %s493 = int_to_ptr.vmem [resolvable:$true] %s492
          %495 = dma.hbm_to_vmem [thread:$0]  %s487, 96, %s493, [#allocation4], 128, 128, 1
          %s496 = sadd.s32 %s473, 1
          %s497 = sshra.s32 %s496, 7
          %s498 = sand.u32 %s496, 127
          %s499 = sadd.s32 %s497, %s465
          %s500 = smul.u32 %s499, 128
          %s501 = sshra.s32 %s496, 7
          %s502 = sand.u32 %s496, 127
          %s503 = sadd.s32 %s500, %s502
          %s504 = sld [smem:[#allocation6 + %s503]]
          %s505 = sadd.s32 0, 1
          %s506 = sshrl.u32 %s504, 3
          %s507 = sand.u32 %s504, 7
          %s508 = smul.u32 %s506, 48
          %s509 = sadd.s32 %s507, %s508
          %s510 = smul.addr %s509, 16
          %s511 = scalar_lea.hbm %s2, %s510
          %s512 = sshrl.u32 %s505, 3
          %s513 = sand.u32 %s505, 7
          %s514 = smul.u32 %s512, 48
          %s515 = sadd.s32 %s513, %s514
          %s516 = scalar_lea.vmem [#allocation2], %s515
          %s518 = sshll.u32 %s516, 4
          %s519 = int_to_ptr.vmem [resolvable:$true] %s518
          %521 = dma.hbm_to_vmem [thread:$0]  %s511, 96, %s519, [#allocation4], 128, 128, 1
          %s522 = sadd.s32 %s473, 2
          %s523 = sshra.s32 %s522, 7
          %s524 = sand.u32 %s522, 127
          %s525 = sadd.s32 %s523, %s465
          %s526 = smul.u32 %s525, 128
          %s527 = sshra.s32 %s522, 7
          %s528 = sand.u32 %s522, 127
          %s529 = sadd.s32 %s526, %s528
          %s530 = sld [smem:[#allocation6 + %s529]]
          %s531 = sadd.s32 0, 2
          %s532 = sshrl.u32 %s530, 3
          %s533 = sand.u32 %s530, 7
          %s534 = smul.u32 %s532, 48
          %s535 = sadd.s32 %s533, %s534
          %s536 = smul.addr %s535, 16
          %s537 = scalar_lea.hbm %s2, %s536
          %s538 = sshrl.u32 %s531, 3
          %s539 = sand.u32 %s531, 7
          %s540 = smul.u32 %s538, 48
          %s541 = sadd.s32 %s539, %s540
          %s542 = scalar_lea.vmem [#allocation2], %s541
          %s544 = sshll.u32 %s542, 4
          %s545 = int_to_ptr.vmem [resolvable:$true] %s544
          %547 = dma.hbm_to_vmem [thread:$0]  %s537, 96, %s545, [#allocation4], 128, 128, 1
          %s548 = sadd.s32 %s473, 3
          %s549 = sshra.s32 %s548, 7
          %s550 = sand.u32 %s548, 127
          %s551 = sadd.s32 %s549, %s465
          %s552 = smul.u32 %s551, 128
          %s553 = sshra.s32 %s548, 7
          %s554 = sand.u32 %s548, 127
          %s555 = sadd.s32 %s552, %s554
          %s556 = sld [smem:[#allocation6 + %s555]]
          %s557 = sadd.s32 0, 3
          %s558 = sshrl.u32 %s556, 3
          %s559 = sand.u32 %s556, 7
          %s560 = smul.u32 %s558, 48
          %s561 = sadd.s32 %s559, %s560
          %s562 = smul.addr %s561, 16
          %s563 = scalar_lea.hbm %s2, %s562
          %s564 = sshrl.u32 %s557, 3
          %s565 = sand.u32 %s557, 7
          %s566 = smul.u32 %s564, 48
          %s567 = sadd.s32 %s565, %s566
          %s568 = scalar_lea.vmem [#allocation2], %s567
          %s570 = sshll.u32 %s568, 4
          %s571 = int_to_ptr.vmem [resolvable:$true] %s570
          %573 = dma.hbm_to_vmem [thread:$0]  %s563, 96, %s571, [#allocation4], 128, 128, 1
          %s574 = sadd.s32 %s473, 4
          %s575 = sshra.s32 %s574, 7
          %s576 = sand.u32 %s574, 127
          %s577 = sadd.s32 %s575, %s465
          %s578 = smul.u32 %s577, 128
          %s579 = sshra.s32 %s574, 7
          %s580 = sand.u32 %s574, 127
          %s581 = sadd.s32 %s578, %s580
          %s582 = sld [smem:[#allocation6 + %s581]]
          %s583 = sadd.s32 0, 4
          %s584 = sshrl.u32 %s582, 3
          %s585 = sand.u32 %s582, 7
          %s586 = smul.u32 %s584, 48
          %s587 = sadd.s32 %s585, %s586
          %s588 = smul.addr %s587, 16
          %s589 = scalar_lea.hbm %s2, %s588
          %s590 = sshrl.u32 %s583, 3
          %s591 = sand.u32 %s583, 7
          %s592 = smul.u32 %s590, 48
          %s593 = sadd.s32 %s591, %s592
          %s594 = scalar_lea.vmem [#allocation2], %s593
          %s596 = sshll.u32 %s594, 4
          %s597 = int_to_ptr.vmem [resolvable:$true] %s596
          %599 = dma.hbm_to_vmem [thread:$0]  %s589, 96, %s597, [#allocation4], 128, 128, 1
          %s600 = sadd.s32 %s473, 5
          %s601 = sshra.s32 %s600, 7
          %s602 = sand.u32 %s600, 127
          %s603 = sadd.s32 %s601, %s465
          %s604 = smul.u32 %s603, 128
          %s605 = sshra.s32 %s600, 7
          %s606 = sand.u32 %s600, 127
          %s607 = sadd.s32 %s604, %s606
          %s608 = sld [smem:[#allocation6 + %s607]]
          %s609 = sadd.s32 0, 5
          %s610 = sshrl.u32 %s608, 3
          %s611 = sand.u32 %s608, 7
          %s612 = smul.u32 %s610, 48
          %s613 = sadd.s32 %s611, %s612
          %s614 = smul.addr %s613, 16
          %s615 = scalar_lea.hbm %s2, %s614
          %s616 = sshrl.u32 %s609, 3
          %s617 = sand.u32 %s609, 7
          %s618 = smul.u32 %s616, 48
          %s619 = sadd.s32 %s617, %s618
          %s620 = scalar_lea.vmem [#allocation2], %s619
          %s622 = sshll.u32 %s620, 4
          %s623 = int_to_ptr.vmem [resolvable:$true] %s622
          %625 = dma.hbm_to_vmem [thread:$0]  %s615, 96, %s623, [#allocation4], 128, 128, 1
          %s626 = sadd.s32 %s473, 6
          %s627 = sshra.s32 %s626, 7
          %s628 = sand.u32 %s626, 127
          %s629 = sadd.s32 %s627, %s465
          %s630 = smul.u32 %s629, 128
          %s631 = sshra.s32 %s626, 7
          %s632 = sand.u32 %s626, 127
          %s633 = sadd.s32 %s630, %s632
          %s634 = sld [smem:[#allocation6 + %s633]]
          %s635 = sadd.s32 0, 6
          %s636 = sshrl.u32 %s634, 3
          %s637 = sand.u32 %s634, 7
          %s638 = smul.u32 %s636, 48
          %s639 = sadd.s32 %s637, %s638
          %s640 = smul.addr %s639, 16
          %s641 = scalar_lea.hbm %s2, %s640
          %s642 = sshrl.u32 %s635, 3
          %s643 = sand.u32 %s635, 7
          %s644 = smul.u32 %s642, 48
          %s645 = sadd.s32 %s643, %s644
          %s646 = scalar_lea.vmem [#allocation2], %s645
          %s648 = sshll.u32 %s646, 4
          %s649 = int_to_ptr.vmem [resolvable:$true] %s648
          %651 = dma.hbm_to_vmem [thread:$0]  %s641, 96, %s649, [#allocation4], 128, 128, 1
          %s652 = sadd.s32 %s473, 7
          %s653 = sshra.s32 %s652, 7
          %s654 = sand.u32 %s652, 127
          %s655 = sadd.s32 %s653, %s465
          %s656 = smul.u32 %s655, 128
          %s657 = sshra.s32 %s652, 7
          %s658 = sand.u32 %s652, 127
          %s659 = sadd.s32 %s656, %s658
          %s660 = sld [smem:[#allocation6 + %s659]]
          %s661 = sadd.s32 0, 7
          %s662 = sshrl.u32 %s660, 3
          %s663 = sand.u32 %s660, 7
          %s664 = smul.u32 %s662, 48
          %s665 = sadd.s32 %s663, %s664
          %s666 = smul.addr %s665, 16
          %s667 = scalar_lea.hbm %s2, %s666
          %s668 = sshrl.u32 %s661, 3
          %s669 = sand.u32 %s661, 7
          %s670 = smul.u32 %s668, 48
          %s671 = sadd.s32 %s669, %s670
          %s672 = scalar_lea.vmem [#allocation2], %s671
          %s674 = sshll.u32 %s672, 4
          %s675 = int_to_ptr.vmem [resolvable:$true] %s674
          %677 = dma.hbm_to_vmem [thread:$0]  %s667, 96, %s675, [#allocation4], 128, 128, 1
        $region96: #{tpu_custom_call.1} parent=55 // pred_fallthru
          _
        loop: start=0, step=1, limit=8
        $region97: #{tpu_custom_call.1} parent=55 // loop_pre_header
          _
        $region98: #{tpu_custom_call.1} parent=55 // loop_header
          %s679 = sphi 0, %s683
          %p680 = scmp.ge.s32.totalorder %s679, 8
        $region99: #{tpu_custom_call.1} parent=55 // loop_header_branch
          %682 = sbr.rel (%p680) target = $region103
        $region100: #{tpu_custom_call.1} parent=55 // loop_body
          %p684 = scmp.lt.s32.totalorder %s679, 0
          %s685 = ssub.s32 0, %s679
          %s686 = scalar_select %p684, %s685, %s679
          %s687 = sand.u32 %s686, 1
          %s688 = ssub.s32 0, %s687
          %s689 = scalar_select %p684, %s688, %s687
          %p690 = scmp.ne.s32.totalorder %s689, 0
          %p691 = scmp.lt.s32.totalorder %s689, 0
          %p692 = pnand %p691, %p690
          %p693 = pneg %p692
          %s694 = sadd.s32 %s689, 2
          %s695 = scalar_select %p693, %s694, %s689
          %s696 = sadd.s32 %s679, 1
          %p697 = scmp.lt.s32.totalorder %s696, 8
          // Predicated region
          $region104: #{tpu_custom_call.1} parent=100 // pred_check
            %p698 = pneg %p697
          $region105: #{tpu_custom_call.1} parent=100 // pred_check_branch
            %700 = sbr.rel (%p698) target = $region107
          $region106: #{tpu_custom_call.1} parent=100 // pred_region
            %s701 = ssub.s32 1, %s695
            %s702 = sadd.s32 %s465, %s696
            %s703 = smul.u32 %s702, 3
            %s704 = sadd.s32 %s703, %s42
            %s705 = sld [smem:[#allocation7 + %s704]]
            %p706 = scmp.gt.s32.totalorder %s705, 0
            // Predicated region
            $region108: #{tpu_custom_call.1} parent=106 // pred_check
              %p707 = pneg %p706
            $region109: #{tpu_custom_call.1} parent=106 // pred_check_branch
              %709 = sbr.rel (%p707) target = $region111
            $region110: #{tpu_custom_call.1} parent=106 // pred_region
              %s710 = sadd.s32 %s454, 0
              %s711 = sshra.s32 %s710, 7
              %s712 = sand.u32 %s710, 127
              %s713 = sadd.s32 %s711, %s702
              %s714 = smul.u32 %s713, 128
              %s715 = sshra.s32 %s710, 7
              %s716 = sand.u32 %s710, 127
              %s717 = sadd.s32 %s714, %s716
              %s718 = sld [smem:[#allocation6 + %s717]]
              %s719 = sshrl.u32 %s718, 3
              %s720 = sand.u32 %s718, 7
              %s721 = smul.u32 %s719, 48
              %s722 = sadd.s32 %s720, %s721
              %s723 = smul.addr %s722, 16
              %s724 = scalar_lea.hbm %s2, %s723
              %s725 = smul.u32 0, 48
              %s726 = sadd.s32 0, %s725
              %s727 = smul.u32 %s701, 48
              %s728 = sadd.s32 %s726, %s727
              %s729 = scalar_lea.vmem [#allocation2], %s728
              %s730 = scalar_lea.sflag [#allocation4], %s701
              %s732 = sshll.u32 %s729, 4
              %s733 = int_to_ptr.vmem [resolvable:$true] %s732
              %735 = dma.hbm_to_vmem [thread:$0]  %s724, 96, %s733, %s730, 128, 128, 1
              %s736 = sadd.s32 %s710, 1
              %s737 = sshra.s32 %s736, 7
              %s738 = sand.u32 %s736, 127
              %s739 = sadd.s32 %s737, %s702
              %s740 = smul.u32 %s739, 128
              %s741 = sshra.s32 %s736, 7
              %s742 = sand.u32 %s736, 127
              %s743 = sadd.s32 %s740, %s742
              %s744 = sld [smem:[#allocation6 + %s743]]
              %s745 = sadd.s32 0, 1
              %s746 = sshrl.u32 %s744, 3
              %s747 = sand.u32 %s744, 7
              %s748 = smul.u32 %s746, 48
              %s749 = sadd.s32 %s747, %s748
              %s750 = smul.addr %s749, 16
              %s751 = scalar_lea.hbm %s2, %s750
              %s752 = sshrl.u32 %s745, 3
              %s753 = sand.u32 %s745, 7
              %s754 = smul.u32 %s752, 48
              %s755 = sadd.s32 %s753, %s754
              %s756 = sadd.s32 %s755, %s727
              %s757 = scalar_lea.vmem [#allocation2], %s756
              %s759 = sshll.u32 %s757, 4
              %s760 = int_to_ptr.vmem [resolvable:$true] %s759
              %762 = dma.hbm_to_vmem [thread:$0]  %s751, 96, %s760, %s730, 128, 128, 1
              %s763 = sadd.s32 %s710, 2
              %s764 = sshra.s32 %s763, 7
              %s765 = sand.u32 %s763, 127
              %s766 = sadd.s32 %s764, %s702
              %s767 = smul.u32 %s766, 128
              %s768 = sshra.s32 %s763, 7
              %s769 = sand.u32 %s763, 127
              %s770 = sadd.s32 %s767, %s769
              %s771 = sld [smem:[#allocation6 + %s770]]
              %s772 = sadd.s32 0, 2
              %s773 = sshrl.u32 %s771, 3
              %s774 = sand.u32 %s771, 7
              %s775 = smul.u32 %s773, 48
              %s776 = sadd.s32 %s774, %s775
              %s777 = smul.addr %s776, 16
              %s778 = scalar_lea.hbm %s2, %s777
              %s779 = sshrl.u32 %s772, 3
              %s780 = sand.u32 %s772, 7
              %s781 = smul.u32 %s779, 48
              %s782 = sadd.s32 %s780, %s781
              %s783 = sadd.s32 %s782, %s727
              %s784 = scalar_lea.vmem [#allocation2], %s783
              %s786 = sshll.u32 %s784, 4
              %s787 = int_to_ptr.vmem [resolvable:$true] %s786
              %789 = dma.hbm_to_vmem [thread:$0]  %s778, 96, %s787, %s730, 128, 128, 1
              %s790 = sadd.s32 %s710, 3
              %s791 = sshra.s32 %s790, 7
              %s792 = sand.u32 %s790, 127
              %s793 = sadd.s32 %s791, %s702
              %s794 = smul.u32 %s793, 128
              %s795 = sshra.s32 %s790, 7
              %s796 = sand.u32 %s790, 127
              %s797 = sadd.s32 %s794, %s796
              %s798 = sld [smem:[#allocation6 + %s797]]
              %s799 = sadd.s32 0, 3
              %s800 = sshrl.u32 %s798, 3
              %s801 = sand.u32 %s798, 7
              %s802 = smul.u32 %s800, 48
              %s803 = sadd.s32 %s801, %s802
              %s804 = smul.addr %s803, 16
              %s805 = scalar_lea.hbm %s2, %s804
              %s806 = sshrl.u32 %s799, 3
              %s807 = sand.u32 %s799, 7
              %s808 = smul.u32 %s806, 48
              %s809 = sadd.s32 %s807, %s808
              %s810 = sadd.s32 %s809, %s727
              %s811 = scalar_lea.vmem [#allocation2], %s810
              %s813 = sshll.u32 %s811, 4
              %s814 = int_to_ptr.vmem [resolvable:$true] %s813
              %816 = dma.hbm_to_vmem [thread:$0]  %s805, 96, %s814, %s730, 128, 128, 1
              %s817 = sadd.s32 %s710, 4
              %s818 = sshra.s32 %s817, 7
              %s819 = sand.u32 %s817, 127
              %s820 = sadd.s32 %s818, %s702
              %s821 = smul.u32 %s820, 128
              %s822 = sshra.s32 %s817, 7
              %s823 = sand.u32 %s817, 127
              %s824 = sadd.s32 %s821, %s823
              %s825 = sld [smem:[#allocation6 + %s824]]
              %s826 = sadd.s32 0, 4
              %s827 = sshrl.u32 %s825, 3
              %s828 = sand.u32 %s825, 7
              %s829 = smul.u32 %s827, 48
              %s830 = sadd.s32 %s828, %s829
              %s831 = smul.addr %s830, 16
              %s832 = scalar_lea.hbm %s2, %s831
              %s833 = sshrl.u32 %s826, 3
              %s834 = sand.u32 %s826, 7
              %s835 = smul.u32 %s833, 48
              %s836 = sadd.s32 %s834, %s835
              %s837 = sadd.s32 %s836, %s727
              %s838 = scalar_lea.vmem [#allocation2], %s837
              %s840 = sshll.u32 %s838, 4
              %s841 = int_to_ptr.vmem [resolvable:$true] %s840
              %843 = dma.hbm_to_vmem [thread:$0]  %s832, 96, %s841, %s730, 128, 128, 1
              %s844 = sadd.s32 %s710, 5
              %s845 = sshra.s32 %s844, 7
              %s846 = sand.u32 %s844, 127
              %s847 = sadd.s32 %s845, %s702
              %s848 = smul.u32 %s847, 128
              %s849 = sshra.s32 %s844, 7
              %s850 = sand.u32 %s844, 127
              %s851 = sadd.s32 %s848, %s850
              %s852 = sld [smem:[#allocation6 + %s851]]
              %s853 = sadd.s32 0, 5
              %s854 = sshrl.u32 %s852, 3
              %s855 = sand.u32 %s852, 7
              %s856 = smul.u32 %s854, 48
              %s857 = sadd.s32 %s855, %s856
              %s858 = smul.addr %s857, 16
              %s859 = scalar_lea.hbm %s2, %s858
              %s860 = sshrl.u32 %s853, 3
              %s861 = sand.u32 %s853, 7
              %s862 = smul.u32 %s860, 48
              %s863 = sadd.s32 %s861, %s862
              %s864 = sadd.s32 %s863, %s727
              %s865 = scalar_lea.vmem [#allocation2], %s864
              %s867 = sshll.u32 %s865, 4
              %s868 = int_to_ptr.vmem [resolvable:$true] %s867
              %870 = dma.hbm_to_vmem [thread:$0]  %s859, 96, %s868, %s730, 128, 128, 1
              %s871 = sadd.s32 %s710, 6
              %s872 = sshra.s32 %s871, 7
              %s873 = sand.u32 %s871, 127
              %s874 = sadd.s32 %s872, %s702
              %s875 = smul.u32 %s874, 128
              %s876 = sshra.s32 %s871, 7
              %s877 = sand.u32 %s871, 127
              %s878 = sadd.s32 %s875, %s877
              %s879 = sld [smem:[#allocation6 + %s878]]
              %s880 = sadd.s32 0, 6
              %s881 = sshrl.u32 %s879, 3
              %s882 = sand.u32 %s879, 7
              %s883 = smul.u32 %s881, 48
              %s884 = sadd.s32 %s882, %s883
              %s885 = smul.addr %s884, 16
              %s886 = scalar_lea.hbm %s2, %s885
              %s887 = sshrl.u32 %s880, 3
              %s888 = sand.u32 %s880, 7
              %s889 = smul.u32 %s887, 48
              %s890 = sadd.s32 %s888, %s889
              %s891 = sadd.s32 %s890, %s727
              %s892 = scalar_lea.vmem [#allocation2], %s891
              %s894 = sshll.u32 %s892, 4
              %s895 = int_to_ptr.vmem [resolvable:$true] %s894
              %897 = dma.hbm_to_vmem [thread:$0]  %s886, 96, %s895, %s730, 128, 128, 1
              %s898 = sadd.s32 %s710, 7
              %s899 = sshra.s32 %s898, 7
              %s900 = sand.u32 %s898, 127
              %s901 = sadd.s32 %s899, %s702
              %s902 = smul.u32 %s901, 128
              %s903 = sshra.s32 %s898, 7
              %s904 = sand.u32 %s898, 127
              %s905 = sadd.s32 %s902, %s904
              %s906 = sld [smem:[#allocation6 + %s905]]
              %s907 = sadd.s32 0, 7
              %s908 = sshrl.u32 %s906, 3
              %s909 = sand.u32 %s906, 7
              %s910 = smul.u32 %s908, 48
              %s911 = sadd.s32 %s909, %s910
              %s912 = smul.addr %s911, 16
              %s913 = scalar_lea.hbm %s2, %s912
              %s914 = sshrl.u32 %s907, 3
              %s915 = sand.u32 %s907, 7
              %s916 = smul.u32 %s914, 48
              %s917 = sadd.s32 %s915, %s916
              %s918 = sadd.s32 %s917, %s727
              %s919 = scalar_lea.vmem [#allocation2], %s918
              %s921 = sshll.u32 %s919, 4
              %s922 = int_to_ptr.vmem [resolvable:$true] %s921
              %924 = dma.hbm_to_vmem [thread:$0]  %s913, 96, %s922, %s730, 128, 128, 1
            $region111: #{tpu_custom_call.1} parent=106 // pred_fallthru
              _
          $region107: #{tpu_custom_call.1} parent=100 // pred_fallthru
            _
          %s925 = sadd.s32 %s465, %s679
          %s926 = smul.u32 %s925, 3
          %s927 = sadd.s32 %s926, %s42
          %s928 = sld [smem:[#allocation7 + %s927]]
          %p929 = scmp.gt.s32.totalorder %s928, 0
          // Predicated region
          $region112: #{tpu_custom_call.1} parent=100 // pred_check
            %p930 = pneg %p929
          $region113: #{tpu_custom_call.1} parent=100 // pred_check_branch
            %932 = sbr.rel (%p930) target = $region115
          $region114: #{tpu_custom_call.1} parent=100 // pred_region
            %s933 = scalar_lea.sflag [#allocation4], %s695
            %s934 = smul.u32 1, 6
            %s935 = sshll.u32 %s934, 4
            %936 = dma.done %s933, %s935
            %s937 = sshll.u32 %s934, 4
            %938 = dma.done %s933, %s937
            %s939 = sshll.u32 %s934, 4
            %940 = dma.done %s933, %s939
            %s941 = sshll.u32 %s934, 4
            %942 = dma.done %s933, %s941
            %s943 = sshll.u32 %s934, 4
            %944 = dma.done %s933, %s943
            %s945 = sshll.u32 %s934, 4
            %946 = dma.done %s933, %s945
            %s947 = sshll.u32 %s934, 4
            %948 = dma.done %s933, %s947
            %s949 = sshll.u32 %s934, 4
            %950 = dma.done %s933, %s949
            %s951 = smul.u32 %s695, 6
            %s952 = smul.addr %s951, 8
            %s953 = scalar_lea.vmem [#allocation2], %s952
            %v954 = vld [vmem:[%s953] sm:$0xff]
            %v955 = vld [vmem:[%s953 + $0x8] sm:$0xff]
            %v956 = vld [vmem:[%s953 + $0x10] sm:$0xff]
            %v957 = vld [vmem:[%s953 + $0x18] sm:$0xff]
            %v958 = vld [vmem:[%s953 + $0x20] sm:$0xff]
            %v959 = vld [vmem:[%s953 + $0x28] sm:$0xff]
            %vm960 = vcmask 64512
            %v962 = vsel %vm960, 1.0, 0
            %964 = vmatprep.subr.mxu0 %v955
            %965 = vmatpush1.msra.mxu0 %v954
            %966 = vmatprep.subr.mxu0 0.0
            %967 = vmatpush1.msra.mxu0 0.0
            %968 = vmatprep.subr.mxu0 0.0
            %969 = vmatpush1.msra.mxu0 0.0
            %970 = vmatprep.subr.mxu0 0.0
            %971 = vmatpush1.msra.mxu0 0.0
            %972 = vmatprep.subr.mxu0 0.0
            %973 = vmatpush1.msra.mxu0 0.0
            %974 = vmatprep.subr.mxu0 0.0
            %975 = vmatpush1.msra.mxu0 0.0
            %976 = vmatprep.subr.mxu0 0.0
            %977 = vmatpush1.msra.mxu0 0.0
            %978 = vmatprep.subr.mxu0 0.0
            %979 = vmatpush1.msra.mxu0 0.0
            %980 = vmatprep.subr.mxu0 0.0
            %981 = vmatpush1.msra.mxu0 0.0
            %982 = vmatprep.subr.mxu0 0.0
            %983 = vmatpush1.msra.mxu0 0.0
            %984 = vmatprep.subr.mxu0 0.0
            %985 = vmatpush1.msra.mxu0 0.0
            %986 = vmatprep.subr.mxu0 0.0
            %987 = vmatpush1.msra.mxu0 0.0
            %988 = vmatprep.subr.mxu0 0.0
            %989 = vmatpush1.msra.mxu0 0.0
            %990 = vmatprep.subr.mxu0 0.0
            %991 = vmatpush1.msra.mxu0 0.0
            %992 = vmatprep.subr.mxu0 0.0
            %993 = vmatpush1.msra.mxu0 0.0
            %994 = vmatprep.subr.mxu0 0.0
            %995 = vmatpush1.msra.mxu0 0.0
            %996 = vmatprep.subr.mxu0 0.0
            %997 = vmatpush1.msra.mxu0 0.0
            %998 = vmatprep.subr.mxu0 0.0
            %999 = vmatpush1.msra.mxu0 0.0
            %1000 = vmatprep.subr.mxu0 0.0
            %1001 = vmatpush1.msra.mxu0 0.0
            %1002 = vmatprep.subr.mxu0 0.0
            %1003 = vmatpush1.msra.mxu0 0.0
            %1004 = vmatprep.subr.mxu0 0.0
            %1005 = vmatpush1.msra.mxu0 0.0
            %1006 = vmatprep.subr.mxu0 0.0
            %1007 = vmatpush1.msra.mxu0 0.0
            %1008 = vmatprep.subr.mxu0 0.0
            %1009 = vmatpush1.msra.mxu0 0.0
            %1010 = vmatprep.subr.mxu0 0.0
            %1011 = vmatpush1.msra.mxu0 0.0
            %1012 = vmatprep.subr.mxu0 0.0
            %1013 = vmatpush1.msra.mxu0 0.0
            %1014 = vmatprep.subr.mxu0 0.0
            %1015 = vmatpush1.msra.mxu0 0.0
            %1016 = vmatprep.subr.mxu0 0.0
            %1017 = vmatpush1.msra.mxu0 0.0
            %1018 = vmatprep.subr.mxu0 0.0
            %1019 = vmatpush1.msra.mxu0 0.0
            %1020 = vmatprep.subr.mxu0 0.0
            %1021 = vmatpush1.msra.mxu0 0.0
            %1022 = vmatprep.subr.mxu0 0.0
            %1023 = vmatpush1.msra.mxu0 0.0
            %1024 = vmatprep.subr.mxu0 0.0
            %1025 = vmatpush1.msra.mxu0 0.0
            %1026 = vmatprep.subr.mxu0 0.0
            %1027 = vmatpush1.msra.mxu0 0.0
            %1028 = vmatprep.mubr.f32.mxu0 0.0
            %1029 = vmatmul.mubr.f32.gmra.mrb[0].mxu0 %v962
            %v1030 = vpop.f32.mrb[0].mxu0
            %v1031 = vadd.f32 0.0, %v1030
            %v1032 = vpop.f32.mrb[0].mxu0
            %v1033 = vadd.f32 0.0, %v1032
            %1034 = vdwg.mxu0
            %1035 = vmatprep.subr.mxu0 %v957
            %1036 = vmatpush1.msra.mxu0 %v956
            %1037 = vmatprep.subr.mxu0 0.0
            %1038 = vmatpush1.msra.mxu0 0.0
            %1039 = vmatprep.subr.mxu0 0.0
            %1040 = vmatpush1.msra.mxu0 0.0
            %1041 = vmatprep.subr.mxu0 0.0
            %1042 = vmatpush1.msra.mxu0 0.0
            %1043 = vmatprep.subr.mxu0 0.0
            %1044 = vmatpush1.msra.mxu0 0.0
            %1045 = vmatprep.subr.mxu0 0.0
            %1046 = vmatpush1.msra.mxu0 0.0
            %1047 = vmatprep.subr.mxu0 0.0
            %1048 = vmatpush1.msra.mxu0 0.0
            %1049 = vmatprep.subr.mxu0 0.0
            %1050 = vmatpush1.msra.mxu0 0.0
            %1051 = vmatprep.subr.mxu0 0.0
            %1052 = vmatpush1.msra.mxu0 0.0
            %1053 = vmatprep.subr.mxu0 0.0
            %1054 = vmatpush1.msra.mxu0 0.0
            %1055 = vmatprep.subr.mxu0 0.0
            %1056 = vmatpush1.msra.mxu0 0.0
            %1057 = vmatprep.subr.mxu0 0.0
            %1058 = vmatpush1.msra.mxu0 0.0
            %1059 = vmatprep.subr.mxu0 0.0
            %1060 = vmatpush1.msra.mxu0 0.0
            %1061 = vmatprep.subr.mxu0 0.0
            %1062 = vmatpush1.msra.mxu0 0.0
            %1063 = vmatprep.subr.mxu0 0.0
            %1064 = vmatpush1.msra.mxu0 0.0
            %1065 = vmatprep.subr.mxu0 0.0
            %1066 = vmatpush1.msra.mxu0 0.0
            %1067 = vmatprep.subr.mxu0 0.0
            %1068 = vmatpush1.msra.mxu0 0.0
            %1069 = vmatprep.subr.mxu0 0.0
            %1070 = vmatpush1.msra.mxu0 0.0
            %1071 = vmatprep.subr.mxu0 0.0
            %1072 = vmatpush1.msra.mxu0 0.0
            %1073 = vmatprep.subr.mxu0 0.0
            %1074 = vmatpush1.msra.mxu0 0.0
            %1075 = vmatprep.subr.mxu0 0.0
            %1076 = vmatpush1.msra.mxu0 0.0
            %1077 = vmatprep.subr.mxu0 0.0
            %1078 = vmatpush1.msra.mxu0 0.0
            %1079 = vmatprep.subr.mxu0 0.0
            %1080 = vmatpush1.msra.mxu0 0.0
            %1081 = vmatprep.subr.mxu0 0.0
            %1082 = vmatpush1.msra.mxu0 0.0
            %1083 = vmatprep.subr.mxu0 0.0
            %1084 = vmatpush1.msra.mxu0 0.0
            %1085 = vmatprep.subr.mxu0 0.0
            %1086 = vmatpush1.msra.mxu0 0.0
            %1087 = vmatprep.subr.mxu0 0.0
            %1088 = vmatpush1.msra.mxu0 0.0
            %1089 = vmatprep.subr.mxu0 0.0
            %1090 = vmatpush1.msra.mxu0 0.0
            %1091 = vmatprep.subr.mxu0 0.0
            %1092 = vmatpush1.msra.mxu0 0.0
            %1093 = vmatprep.subr.mxu0 0.0
            %1094 = vmatpush1.msra.mxu0 0.0
            %1095 = vmatprep.subr.mxu0 0.0
            %1096 = vmatpush1.msra.mxu0 0.0
            %1097 = vmatprep.subr.mxu0 0.0
            %1098 = vmatpush1.msra.mxu0 0.0
            %1099 = vmatprep.mubr.f32.mxu0 0.0
            %1100 = vmatmul.mubr.f32.gmra.mrb[0].mxu0 %v962
            %v1101 = vpop.f32.mrb[0].mxu0
            %v1102 = vadd.f32 0.0, %v1101
            %v1103 = vpop.f32.mrb[0].mxu0
            %v1104 = vadd.f32 0.0, %v1103
            %1105 = vdwg.mxu0
            %1106 = vmatprep.subr.mxu0 %v959
            %1107 = vmatpush1.msra.mxu0 %v958
            %1108 = vmatprep.subr.mxu0 0.0
            %1109 = vmatpush1.msra.mxu0 0.0
            %1110 = vmatprep.subr.mxu0 0.0
            %1111 = vmatpush1.msra.mxu0 0.0
            %1112 = vmatprep.subr.mxu0 0.0
            %1113 = vmatpush1.msra.mxu0 0.0
            %1114 = vmatprep.subr.mxu0 0.0
            %1115 = vmatpush1.msra.mxu0 0.0
            %1116 = vmatprep.subr.mxu0 0.0
            %1117 = vmatpush1.msra.mxu0 0.0
            %1118 = vmatprep.subr.mxu0 0.0
            %1119 = vmatpush1.msra.mxu0 0.0
            %1120 = vmatprep.subr.mxu0 0.0
            %1121 = vmatpush1.msra.mxu0 0.0
            %1122 = vmatprep.subr.mxu0 0.0
            %1123 = vmatpush1.msra.mxu0 0.0
            %1124 = vmatprep.subr.mxu0 0.0
            %1125 = vmatpush1.msra.mxu0 0.0
            %1126 = vmatprep.subr.mxu0 0.0
            %1127 = vmatpush1.msra.mxu0 0.0
            %1128 = vmatprep.subr.mxu0 0.0
            %1129 = vmatpush1.msra.mxu0 0.0
            %1130 = vmatprep.subr.mxu0 0.0
            %1131 = vmatpush1.msra.mxu0 0.0
            %1132 = vmatprep.subr.mxu0 0.0
            %1133 = vmatpush1.msra.mxu0 0.0
            %1134 = vmatprep.subr.mxu0 0.0
            %1135 = vmatpush1.msra.mxu0 0.0
            %1136 = vmatprep.subr.mxu0 0.0
            %1137 = vmatpush1.msra.mxu0 0.0
            %1138 = vmatprep.subr.mxu0 0.0
            %1139 = vmatpush1.msra.mxu0 0.0
            %1140 = vmatprep.subr.mxu0 0.0
            %1141 = vmatpush1.msra.mxu0 0.0
            %1142 = vmatprep.subr.mxu0 0.0
            %1143 = vmatpush1.msra.mxu0 0.0
            %1144 = vmatprep.subr.mxu0 0.0
            %1145 = vmatpush1.msra.mxu0 0.0
            %1146 = vmatprep.subr.mxu0 0.0
            %1147 = vmatpush1.msra.mxu0 0.0
            %1148 = vmatprep.subr.mxu0 0.0
            %1149 = vmatpush1.msra.mxu0 0.0
            %1150 = vmatprep.subr.mxu0 0.0
            %1151 = vmatpush1.msra.mxu0 0.0
            %1152 = vmatprep.subr.mxu0 0.0
            %1153 = vmatpush1.msra.mxu0 0.0
            %1154 = vmatprep.subr.mxu0 0.0
            %1155 = vmatpush1.msra.mxu0 0.0
            %1156 = vmatprep.subr.mxu0 0.0
            %1157 = vmatpush1.msra.mxu0 0.0
            %1158 = vmatprep.subr.mxu0 0.0
            %1159 = vmatpush1.msra.mxu0 0.0
            %1160 = vmatprep.subr.mxu0 0.0
            %1161 = vmatpush1.msra.mxu0 0.0
            %1162 = vmatprep.subr.mxu0 0.0
            %1163 = vmatpush1.msra.mxu0 0.0
            %1164 = vmatprep.subr.mxu0 0.0
            %1165 = vmatpush1.msra.mxu0 0.0
            %1166 = vmatprep.subr.mxu0 0.0
            %1167 = vmatpush1.msra.mxu0 0.0
            %1168 = vmatprep.subr.mxu0 0.0
            %1169 = vmatpush1.msra.mxu0 0.0
            %1170 = vmatprep.mubr.f32.mxu0 0.0
            %1171 = vmatmul.mubr.f32.gmra.mrb[0].mxu0 %v962
            %v1172 = vpop.f32.mrb[0].mxu0
            %v1173 = vadd.f32 0.0, %v1172
            %v1174 = vpop.f32.mrb[0].mxu0
            %v1175 = vadd.f32 0.0, %v1174
            %1176 = vdwg.mxu0
            %s1177 = sshra.s32 %s679, 3
            %s1178 = sand.u32 %s679, 7
            %s1179 = sshra.s32 %s679, 3
            %s1180 = sand.u32 %s679, 7
            %s1181 = smul.u32 %s1177, 6
            %s1182 = smul.u32 %s1181, 8
            %s1183 = sadd.s32 %s1182, %s1180
            %s1184 = scalar_lea.vmem [#allocation3], %s1183
            %v1185 = vld [vmem:[%s1184] ss:$8 sm:$0xf]
            %v1186 = vld [vmem:[%s1184] ss:$8 sm:$0x30]
            %v1187 = vor.u32 %v1185, %v1186
            %v1194 = vcombine.low %v1031, %v1033
            %v1195 = vcombine.low %v1102, %v1104
            %v1196 = vcombine.low %v1173, %v1175
            %v1198 = vunpack.c.l.s4 1966171168
            %v1199 = vunpack.c.0.s8 %v1198
            %v1200 = vlaneseq
            %v1201 = vshrl.u32 %v1200, 7
            %v1202 = vsub.s32 %v1199, %v1201
            %v1203 = vrot.slane %v1194, %v1202
            %v1205 = vunpack.c.l.s4 1966171168
            %v1206 = vunpack.c.0.s8 %v1205
            %v1207 = vlaneseq
            %v1208 = vshrl.u32 %v1207, 7
            %v1209 = vsub.s32 %v1206, %v1208
            %v1210 = vrot.slane %v1195, %v1209
            %v1212 = vunpack.c.l.s4 1966171168
            %v1213 = vunpack.c.0.s8 %v1212
            %v1214 = vlaneseq
            %v1215 = vshrl.u32 %v1214, 7
            %v1216 = vsub.s32 %v1213, %v1215
            %v1217 = vrot.slane %v1196, %v1216
            %v1218 = vcombine.low %v1203, %v1210
            %v1220 = vunpack.c.l.s4 1966171168
            %v1221 = vunpack.c.0.s8 %v1220
            %v1222 = vlaneseq
            %v1223 = vshrl.u32 %v1222, 7
            %v1224 = vsub.s32 %v1221, %v1223
            %v1225 = vrot.slane %v1218, %v1224
            %v1227 = vunpack.c.l.s4 1966171168
            %v1228 = vunpack.c.0.s8 %v1227
            %v1229 = vlaneseq
            %v1230 = vshrl.u32 %v1229, 7
            %v1231 = vsub.s32 %v1228, %v1230
            %v1232 = vrot.slane %v1217, %v1231
            %v1233 = vcombine.low %v1225, %v1232
            %v1235 = vadd.f32 %v1187, %v1233
            %v1236 = vlaneseq
            %vm1237 = vcmp.ge.s32.totalorder %v1236, 0
            %vm1238 = vcmp.lt.s32.totalorder %v1236, 768
            %vm1239 = vmand %vm1237, %vm1238
            %1240 = vst.msk [vmem:[%s1184] ss:$8 sm:$0xf] %vm1239, %v1235
            %1241 = vst.msk [vmem:[%s1184] ss:$8 sm:$0x30] %vm1239, %v1235
          $region115: #{tpu_custom_call.1} parent=100 // pred_fallthru
            _
        $region101: #{tpu_custom_call.1} parent=55 // loop_footer
          %s683 = sadd.s32 1, %s679
        $region102: #{tpu_custom_call.1} parent=55 // loop_footer_branch
          %678 = sbr.rel target = $region98
        $region103: #{tpu_custom_call.1} parent=55 // loop_exit
          _
        %p1242 = scmp.eq.s32.totalorder %s42, 2
        // Predicated region
        $region116: #{tpu_custom_call.1} parent=55 // pred_check
          %p1243 = pneg %p1242
        $region117: #{tpu_custom_call.1} parent=55 // pred_check_branch
          %1245 = sbr.rel (%p1243) target = $region119
        $region118: #{tpu_custom_call.1} parent=55 // pred_region
          %v1246 = vld [vmem:[%s453] sm:$0xff]
          %v1247 = vmax.f32 %v1246, 1.0
          %v1248 = vrcp.pop %v1247
          %v1249 = vmul.f32 1.0, %v1248
          %v1250 = vld [vmem:[#allocation3] sm:$0xff]
          %v1251 = vld [vmem:[#allocation3 + $0x8] sm:$0xff]
          %v1252 = vld [vmem:[#allocation3 + $0x10] sm:$0xff]
          %v1253 = vld [vmem:[#allocation3 + $0x18] sm:$0xff]
          %v1254 = vld [vmem:[#allocation3 + $0x20] sm:$0xff]
          %v1255 = vld [vmem:[#allocation3 + $0x28] sm:$0xff]
          %1257 = vset.pattern.permute.xlu0 0
          %1258 = vperm.xlu0 %1257, %v1249
          %v1259 = vpop.permute.xlu0 %1258
          %v1261 = vmul.f32 %v1250, %v1259
          %v1262 = vmul.f32 %v1251, %v1259
          %v1263 = vmul.f32 %v1252, %v1259
          %v1264 = vmul.f32 %v1253, %v1259
          %v1265 = vmul.f32 %v1254, %v1259
          %v1266 = vmul.f32 %v1255, %v1259
          %v1267 = vld [vmem:[#allocation8] sm:$0x3f]
          %v1269 = vlaneseq
          %v1270 = vshrl.u32 %v1269, 7
          %v1271 = vsub.s32 0, %v1270
          %v1272 = vrot.slane %v1267, %v1271
          %v1273 = vlaneseq
          %v1274 = vshrl.u32 %v1273, 7
          %v1275 = vsub.s32 1, %v1274
          %v1276 = vrot.slane %v1267, %v1275
          %v1277 = vlaneseq
          %v1278 = vshrl.u32 %v1277, 7
          %v1279 = vsub.s32 2, %v1278
          %v1280 = vrot.slane %v1267, %v1279
          %v1281 = vlaneseq
          %v1282 = vshrl.u32 %v1281, 7
          %v1283 = vsub.s32 3, %v1282
          %v1284 = vrot.slane %v1267, %v1283
          %v1285 = vlaneseq
          %v1286 = vshrl.u32 %v1285, 7
          %v1287 = vsub.s32 4, %v1286
          %v1288 = vrot.slane %v1267, %v1287
          %v1289 = vlaneseq
          %v1290 = vshrl.u32 %v1289, 7
          %v1291 = vsub.s32 5, %v1290
          %v1292 = vrot.slane %v1267, %v1291
          %v1299 = vmul.f32 %v1261, %v1272
          %v1300 = vmul.f32 %v1262, %v1276
          %v1301 = vmul.f32 %v1263, %v1280
          %v1302 = vmul.f32 %v1264, %v1284
          %v1303 = vmul.f32 %v1265, %v1288
          %v1304 = vmul.f32 %v1266, %v1292
          %v1305 = vld [vmem:[#allocation11] sm:$0x3f]
          %v1307 = vlaneseq
          %v1308 = vshrl.u32 %v1307, 7
          %v1309 = vsub.s32 0, %v1308
          %v1310 = vrot.slane %v1305, %v1309
          %v1311 = vlaneseq
          %v1312 = vshrl.u32 %v1311, 7
          %v1313 = vsub.s32 1, %v1312
          %v1314 = vrot.slane %v1305, %v1313
          %v1315 = vlaneseq
          %v1316 = vshrl.u32 %v1315, 7
          %v1317 = vsub.s32 2, %v1316
          %v1318 = vrot.slane %v1305, %v1317
          %v1319 = vlaneseq
          %v1320 = vshrl.u32 %v1319, 7
          %v1321 = vsub.s32 3, %v1320
          %v1322 = vrot.slane %v1305, %v1321
          %v1323 = vlaneseq
          %v1324 = vshrl.u32 %v1323, 7
          %v1325 = vsub.s32 4, %v1324
          %v1326 = vrot.slane %v1305, %v1325
          %v1327 = vlaneseq
          %v1328 = vshrl.u32 %v1327, 7
          %v1329 = vsub.s32 5, %v1328
          %v1330 = vrot.slane %v1305, %v1329
          %v1337 = vadd.f32 %v1299, %v1310
          %v1338 = vadd.f32 %v1300, %v1314
          %v1339 = vadd.f32 %v1301, %v1318
          %v1340 = vadd.f32 %v1302, %v1322
          %v1341 = vadd.f32 %v1303, %v1326
          %v1342 = vadd.f32 %v1304, %v1330
          %v1343 = vld [vmem:[#allocation13] sm:$0xff]
          %v1344 = vld [vmem:[#allocation13 + $0x8] sm:$0xff]
          %v1345 = vld [vmem:[#allocation13 + $0x10] sm:$0xff]
          %v1346 = vld [vmem:[#allocation13 + $0x18] sm:$0xff]
          %v1347 = vld [vmem:[#allocation13 + $0x20] sm:$0xff]
          %v1348 = vld [vmem:[#allocation13 + $0x28] sm:$0xff]
          %v1349 = vld [vmem:[#allocation13 + $0x30] sm:$0xff]
          %v1350 = vld [vmem:[#allocation13 + $0x38] sm:$0xff]
          %v1351 = vld [vmem:[#allocation13 + $0x40] sm:$0xff]
          %v1352 = vld [vmem:[#allocation13 + $0x48] sm:$0xff]
          %v1353 = vld [vmem:[#allocation13 + $0x50] sm:$0xff]
          %v1354 = vld [vmem:[#allocation13 + $0x58] sm:$0xff]
          %v1355 = vld [vmem:[#allocation13 + $0x60] sm:$0xff]
          %v1356 = vld [vmem:[#allocation13 + $0x68] sm:$0xff]
          %v1357 = vld [vmem:[#allocation13 + $0x70] sm:$0xff]
          %v1358 = vld [vmem:[#allocation13 + $0x78] sm:$0xff]
          %v1359 = vld [vmem:[#allocation13 + $0x80] sm:$0xff]
          %v1360 = vld [vmem:[#allocation13 + $0x88] sm:$0xff]
          %v1361 = vld [vmem:[#allocation13 + $0x90] sm:$0xff]
          %v1362 = vld [vmem:[#allocation13 + $0x98] sm:$0xff]
          %v1363 = vld [vmem:[#allocation13 + $0xa0] sm:$0xff]
          %v1364 = vld [vmem:[#allocation13 + $0xa8] sm:$0xff]
          %v1365 = vld [vmem:[#allocation13 + $0xb0] sm:$0xff]
          %v1366 = vld [vmem:[#allocation13 + $0xb8] sm:$0xff]
          %v1367 = vld [vmem:[#allocation13 + $0xc0] sm:$0xff]
          %v1368 = vld [vmem:[#allocation13 + $0xc8] sm:$0xff]
          %v1369 = vld [vmem:[#allocation13 + $0xd0] sm:$0xff]
          %v1370 = vld [vmem:[#allocation13 + $0xd8] sm:$0xff]
          %v1371 = vld [vmem:[#allocation13 + $0xe0] sm:$0xff]
          %v1372 = vld [vmem:[#allocation13 + $0xe8] sm:$0xff]
          %v1373 = vld [vmem:[#allocation13 + $0xf0] sm:$0xff]
          %v1374 = vld [vmem:[#allocation13 + $0xf8] sm:$0xff]
          %v1375 = vld [vmem:[#allocation13 + $0x100] sm:$0xff]
          %v1376 = vld [vmem:[#allocation13 + $0x108] sm:$0xff]
          %v1377 = vld [vmem:[#allocation13 + $0x110] sm:$0xff]
          %v1378 = vld [vmem:[#allocation13 + $0x118] sm:$0xff]
          %v1379 = vld [vmem:[#allocation13 + $0x120] sm:$0xff]
          %v1380 = vld [vmem:[#allocation13 + $0x128] sm:$0xff]
          %v1381 = vld [vmem:[#allocation13 + $0x130] sm:$0xff]
          %v1382 = vld [vmem:[#allocation13 + $0x138] sm:$0xff]
          %v1383 = vld [vmem:[#allocation13 + $0x140] sm:$0xff]
          %v1384 = vld [vmem:[#allocation13 + $0x148] sm:$0xff]
          %v1385 = vld [vmem:[#allocation13 + $0x150] sm:$0xff]
          %v1386 = vld [vmem:[#allocation13 + $0x158] sm:$0xff]
          %v1387 = vld [vmem:[#allocation13 + $0x160] sm:$0xff]
          %v1388 = vld [vmem:[#allocation13 + $0x168] sm:$0xff]
          %v1389 = vld [vmem:[#allocation13 + $0x170] sm:$0xff]
          %v1390 = vld [vmem:[#allocation13 + $0x178] sm:$0xff]
          %v1391 = vld [vmem:[#allocation13 + $0x180] sm:$0xff]
          %v1392 = vld [vmem:[#allocation13 + $0x188] sm:$0xff]
          %v1393 = vld [vmem:[#allocation13 + $0x190] sm:$0xff]
          %v1394 = vld [vmem:[#allocation13 + $0x198] sm:$0xff]
          %v1395 = vld [vmem:[#allocation13 + $0x1a0] sm:$0xff]
          %v1396 = vld [vmem:[#allocation13 + $0x1a8] sm:$0xff]
          %v1397 = vld [vmem:[#allocation13 + $0x1b0] sm:$0xff]
          %v1398 = vld [vmem:[#allocation13 + $0x1b8] sm:$0xff]
          %v1399 = vld [vmem:[#allocation13 + $0x1c0] sm:$0xff]
          %v1400 = vld [vmem:[#allocation13 + $0x1c8] sm:$0xff]
          %v1401 = vld [vmem:[#allocation13 + $0x1d0] sm:$0xff]
          %v1402 = vld [vmem:[#allocation13 + $0x1d8] sm:$0xff]
          %v1403 = vld [vmem:[#allocation13 + $0x1e0] sm:$0xff]
          %v1404 = vld [vmem:[#allocation13 + $0x1e8] sm:$0xff]
          %v1405 = vld [vmem:[#allocation13 + $0x1f0] sm:$0xff]
          %v1406 = vld [vmem:[#allocation13 + $0x1f8] sm:$0xff]
          %v1407 = vld [vmem:[#allocation13 + $0x200] sm:$0xff]
          %v1408 = vld [vmem:[#allocation13 + $0x208] sm:$0xff]
          %v1409 = vld [vmem:[#allocation13 + $0x210] sm:$0xff]
          %v1410 = vld [vmem:[#allocation13 + $0x218] sm:$0xff]
          %v1411 = vld [vmem:[#allocation13 + $0x220] sm:$0xff]
          %v1412 = vld [vmem:[#allocation13 + $0x228] sm:$0xff]
          %v1413 = vld [vmem:[#allocation13 + $0x230] sm:$0xff]
          %v1414 = vld [vmem:[#allocation13 + $0x238] sm:$0xff]
          %v1415 = vld [vmem:[#allocation13 + $0x240] sm:$0xff]
          %v1416 = vld [vmem:[#allocation13 + $0x248] sm:$0xff]
          %v1417 = vld [vmem:[#allocation13 + $0x250] sm:$0xff]
          %v1418 = vld [vmem:[#allocation13 + $0x258] sm:$0xff]
          %v1419 = vld [vmem:[#allocation13 + $0x260] sm:$0xff]
          %v1420 = vld [vmem:[#allocation13 + $0x268] sm:$0xff]
          %v1421 = vld [vmem:[#allocation13 + $0x270] sm:$0xff]
          %v1422 = vld [vmem:[#allocation13 + $0x278] sm:$0xff]
          %v1423 = vld [vmem:[#allocation13 + $0x280] sm:$0xff]
          %v1424 = vld [vmem:[#allocation13 + $0x288] sm:$0xff]
          %v1425 = vld [vmem:[#allocation13 + $0x290] sm:$0xff]
          %v1426 = vld [vmem:[#allocation13 + $0x298] sm:$0xff]
          %v1427 = vld [vmem:[#allocation13 + $0x2a0] sm:$0xff]
          %v1428 = vld [vmem:[#allocation13 + $0x2a8] sm:$0xff]
          %v1429 = vld [vmem:[#allocation13 + $0x2b0] sm:$0xff]
          %v1430 = vld [vmem:[#allocation13 + $0x2b8] sm:$0xff]
          %v1431 = vld [vmem:[#allocation13 + $0x2c0] sm:$0xff]
          %v1432 = vld [vmem:[#allocation13 + $0x2c8] sm:$0xff]
          %v1433 = vld [vmem:[#allocation13 + $0x2d0] sm:$0xff]
          %v1434 = vld [vmem:[#allocation13 + $0x2d8] sm:$0xff]
          %v1435 = vld [vmem:[#allocation13 + $0x2e0] sm:$0xff]
          %v1436 = vld [vmem:[#allocation13 + $0x2e8] sm:$0xff]
          %v1437 = vld [vmem:[#allocation13 + $0x2f0] sm:$0xff]
          %v1438 = vld [vmem:[#allocation13 + $0x2f8] sm:$0xff]
          %v1439 = vld [vmem:[#allocation13 + $0x300] sm:$0xff]
          %v1440 = vld [vmem:[#allocation13 + $0x308] sm:$0xff]
          %v1441 = vld [vmem:[#allocation13 + $0x310] sm:$0xff]
          %v1442 = vld [vmem:[#allocation13 + $0x318] sm:$0xff]
          %v1443 = vld [vmem:[#allocation13 + $0x320] sm:$0xff]
          %v1444 = vld [vmem:[#allocation13 + $0x328] sm:$0xff]
          %v1445 = vld [vmem:[#allocation13 + $0x330] sm:$0xff]
          %v1446 = vld [vmem:[#allocation13 + $0x338] sm:$0xff]
          %v1447 = vld [vmem:[#allocation13 + $0x340] sm:$0xff]
          %v1448 = vld [vmem:[#allocation13 + $0x348] sm:$0xff]
          %v1449 = vld [vmem:[#allocation13 + $0x350] sm:$0xff]
          %v1450 = vld [vmem:[#allocation13 + $0x358] sm:$0xff]
          %v1451 = vld [vmem:[#allocation13 + $0x360] sm:$0xff]
          %v1452 = vld [vmem:[#allocation13 + $0x368] sm:$0xff]
          %v1453 = vld [vmem:[#allocation13 + $0x370] sm:$0xff]
          %v1454 = vld [vmem:[#allocation13 + $0x378] sm:$0xff]
          %v1455 = vld [vmem:[#allocation13 + $0x380] sm:$0xff]
          %v1456 = vld [vmem:[#allocation13 + $0x388] sm:$0xff]
          %v1457 = vld [vmem:[#allocation13 + $0x390] sm:$0xff]
          %v1458 = vld [vmem:[#allocation13 + $0x398] sm:$0xff]
          %v1459 = vld [vmem:[#allocation13 + $0x3a0] sm:$0xff]
          %v1460 = vld [vmem:[#allocation13 + $0x3a8] sm:$0xff]
          %v1461 = vld [vmem:[#allocation13 + $0x3b0] sm:$0xff]
          %v1462 = vld [vmem:[#allocation13 + $0x3b8] sm:$0xff]
          %v1463 = vld [vmem:[#allocation13 + $0x3c0] sm:$0xff]
          %v1464 = vld [vmem:[#allocation13 + $0x3c8] sm:$0xff]
          %v1465 = vld [vmem:[#allocation13 + $0x3d0] sm:$0xff]
          %v1466 = vld [vmem:[#allocation13 + $0x3d8] sm:$0xff]
          %v1467 = vld [vmem:[#allocation13 + $0x3e0] sm:$0xff]
          %v1468 = vld [vmem:[#allocation13 + $0x3e8] sm:$0xff]
          %v1469 = vld [vmem:[#allocation13 + $0x3f0] sm:$0xff]
          %v1470 = vld [vmem:[#allocation13 + $0x3f8] sm:$0xff]
          %v1471 = vld [vmem:[#allocation13 + $0x400] sm:$0xff]
          %v1472 = vld [vmem:[#allocation13 + $0x408] sm:$0xff]
          %v1473 = vld [vmem:[#allocation13 + $0x410] sm:$0xff]
          %v1474 = vld [vmem:[#allocation13 + $0x418] sm:$0xff]
          %v1475 = vld [vmem:[#allocation13 + $0x420] sm:$0xff]
          %v1476 = vld [vmem:[#allocation13 + $0x428] sm:$0xff]
          %v1477 = vld [vmem:[#allocation13 + $0x430] sm:$0xff]
          %v1478 = vld [vmem:[#allocation13 + $0x438] sm:$0xff]
          %v1479 = vld [vmem:[#allocation13 + $0x440] sm:$0xff]
          %v1480 = vld [vmem:[#allocation13 + $0x448] sm:$0xff]
          %v1481 = vld [vmem:[#allocation13 + $0x450] sm:$0xff]
          %v1482 = vld [vmem:[#allocation13 + $0x458] sm:$0xff]
          %v1483 = vld [vmem:[#allocation13 + $0x460] sm:$0xff]
          %v1484 = vld [vmem:[#allocation13 + $0x468] sm:$0xff]
          %v1485 = vld [vmem:[#allocation13 + $0x470] sm:$0xff]
          %v1486 = vld [vmem:[#allocation13 + $0x478] sm:$0xff]
          %v1487 = vld [vmem:[#allocation13 + $0x480] sm:$0xff]
          %v1488 = vld [vmem:[#allocation13 + $0x488] sm:$0xff]
          %v1489 = vld [vmem:[#allocation13 + $0x490] sm:$0xff]
          %v1490 = vld [vmem:[#allocation13 + $0x498] sm:$0xff]
          %v1491 = vld [vmem:[#allocation13 + $0x4a0] sm:$0xff]
          %v1492 = vld [vmem:[#allocation13 + $0x4a8] sm:$0xff]
          %v1493 = vld [vmem:[#allocation13 + $0x4b0] sm:$0xff]
          %v1494 = vld [vmem:[#allocation13 + $0x4b8] sm:$0xff]
          %v1495 = vld [vmem:[#allocation13 + $0x4c0] sm:$0xff]
          %v1496 = vld [vmem:[#allocation13 + $0x4c8] sm:$0xff]
          %v1497 = vld [vmem:[#allocation13 + $0x4d0] sm:$0xff]
          %v1498 = vld [vmem:[#allocation13 + $0x4d8] sm:$0xff]
          %v1499 = vld [vmem:[#allocation13 + $0x4e0] sm:$0xff]
          %v1500 = vld [vmem:[#allocation13 + $0x4e8] sm:$0xff]
          %v1501 = vld [vmem:[#allocation13 + $0x4f0] sm:$0xff]
          %v1502 = vld [vmem:[#allocation13 + $0x4f8] sm:$0xff]
          %v1503 = vld [vmem:[#allocation13 + $0x500] sm:$0xff]
          %v1504 = vld [vmem:[#allocation13 + $0x508] sm:$0xff]
          %v1505 = vld [vmem:[#allocation13 + $0x510] sm:$0xff]
          %v1506 = vld [vmem:[#allocation13 + $0x518] sm:$0xff]
          %v1507 = vld [vmem:[#allocation13 + $0x520] sm:$0xff]
          %v1508 = vld [vmem:[#allocation13 + $0x528] sm:$0xff]
          %v1509 = vld [vmem:[#allocation13 + $0x530] sm:$0xff]
          %v1510 = vld [vmem:[#allocation13 + $0x538] sm:$0xff]
          %v1511 = vld [vmem:[#allocation13 + $0x540] sm:$0xff]
          %v1512 = vld [vmem:[#allocation13 + $0x548] sm:$0xff]
          %v1513 = vld [vmem:[#allocation13 + $0x550] sm:$0xff]
          %v1514 = vld [vmem:[#allocation13 + $0x558] sm:$0xff]
          %v1515 = vld [vmem:[#allocation13 + $0x560] sm:$0xff]
          %v1516 = vld [vmem:[#allocation13 + $0x568] sm:$0xff]
          %v1517 = vld [vmem:[#allocation13 + $0x570] sm:$0xff]
          %v1518 = vld [vmem:[#allocation13 + $0x578] sm:$0xff]
          %v1519 = vld [vmem:[#allocation13 + $0x580] sm:$0xff]
          %v1520 = vld [vmem:[#allocation13 + $0x588] sm:$0xff]
          %v1521 = vld [vmem:[#allocation13 + $0x590] sm:$0xff]
          %v1522 = vld [vmem:[#allocation13 + $0x598] sm:$0xff]
          %v1523 = vld [vmem:[#allocation13 + $0x5a0] sm:$0xff]
          %v1524 = vld [vmem:[#allocation13 + $0x5a8] sm:$0xff]
          %v1525 = vld [vmem:[#allocation13 + $0x5b0] sm:$0xff]
          %v1526 = vld [vmem:[#allocation13 + $0x5b8] sm:$0xff]
          %v1527 = vld [vmem:[#allocation13 + $0x5c0] sm:$0xff]
          %v1528 = vld [vmem:[#allocation13 + $0x5c8] sm:$0xff]
          %v1529 = vld [vmem:[#allocation13 + $0x5d0] sm:$0xff]
          %v1530 = vld [vmem:[#allocation13 + $0x5d8] sm:$0xff]
          %v1531 = vld [vmem:[#allocation13 + $0x5e0] sm:$0xff]
          %v1532 = vld [vmem:[#allocation13 + $0x5e8] sm:$0xff]
          %v1533 = vld [vmem:[#allocation13 + $0x5f0] sm:$0xff]
          %v1534 = vld [vmem:[#allocation13 + $0x5f8] sm:$0xff]
          %v1535 = vld [vmem:[#allocation13 + $0x600] sm:$0xff]
          %v1536 = vld [vmem:[#allocation13 + $0x608] sm:$0xff]
          %v1537 = vld [vmem:[#allocation13 + $0x610] sm:$0xff]
          %v1538 = vld [vmem:[#allocation13 + $0x618] sm:$0xff]
          %v1539 = vld [vmem:[#allocation13 + $0x620] sm:$0xff]
          %v1540 = vld [vmem:[#allocation13 + $0x628] sm:$0xff]
          %v1541 = vld [vmem:[#allocation13 + $0x630] sm:$0xff]
          %v1542 = vld [vmem:[#allocation13 + $0x638] sm:$0xff]
          %v1543 = vld [vmem:[#allocation13 + $0x640] sm:$0xff]
          %v1544 = vld [vmem:[#allocation13 + $0x648] sm:$0xff]
          %v1545 = vld [vmem:[#allocation13 + $0x650] sm:$0xff]
          %v1546 = vld [vmem:[#allocation13 + $0x658] sm:$0xff]
          %v1547 = vld [vmem:[#allocation13 + $0x660] sm:$0xff]
          %v1548 = vld [vmem:[#allocation13 + $0x668] sm:$0xff]
          %v1549 = vld [vmem:[#allocation13 + $0x670] sm:$0xff]
          %v1550 = vld [vmem:[#allocation13 + $0x678] sm:$0xff]
          %v1551 = vld [vmem:[#allocation13 + $0x680] sm:$0xff]
          %v1552 = vld [vmem:[#allocation13 + $0x688] sm:$0xff]
          %v1553 = vld [vmem:[#allocation13 + $0x690] sm:$0xff]
          %v1554 = vld [vmem:[#allocation13 + $0x698] sm:$0xff]
          %v1555 = vld [vmem:[#allocation13 + $0x6a0] sm:$0xff]
          %v1556 = vld [vmem:[#allocation13 + $0x6a8] sm:$0xff]
          %v1557 = vld [vmem:[#allocation13 + $0x6b0] sm:$0xff]
          %v1558 = vld [vmem:[#allocation13 + $0x6b8] sm:$0xff]
          %v1559 = vld [vmem:[#allocation13 + $0x6c0] sm:$0xff]
          %v1560 = vld [vmem:[#allocation13 + $0x6c8] sm:$0xff]
          %v1561 = vld [vmem:[#allocation13 + $0x6d0] sm:$0xff]
          %v1562 = vld [vmem:[#allocation13 + $0x6d8] sm:$0xff]
          %v1563 = vld [vmem:[#allocation13 + $0x6e0] sm:$0xff]
          %v1564 = vld [vmem:[#allocation13 + $0x6e8] sm:$0xff]
          %v1565 = vld [vmem:[#allocation13 + $0x6f0] sm:$0xff]
          %v1566 = vld [vmem:[#allocation13 + $0x6f8] sm:$0xff]
          %v1567 = vld [vmem:[#allocation13 + $0x700] sm:$0xff]
          %v1568 = vld [vmem:[#allocation13 + $0x708] sm:$0xff]
          %v1569 = vld [vmem:[#allocation13 + $0x710] sm:$0xff]
          %v1570 = vld [vmem:[#allocation13 + $0x718] sm:$0xff]
          %v1571 = vld [vmem:[#allocation13 + $0x720] sm:$0xff]
          %v1572 = vld [vmem:[#allocation13 + $0x728] sm:$0xff]
          %v1573 = vld [vmem:[#allocation13 + $0x730] sm:$0xff]
          %v1574 = vld [vmem:[#allocation13 + $0x738] sm:$0xff]
          %v1575 = vld [vmem:[#allocation13 + $0x740] sm:$0xff]
          %v1576 = vld [vmem:[#allocation13 + $0x748] sm:$0xff]
          %v1577 = vld [vmem:[#allocation13 + $0x750] sm:$0xff]
          %v1578 = vld [vmem:[#allocation13 + $0x758] sm:$0xff]
          %v1579 = vld [vmem:[#allocation13 + $0x760] sm:$0xff]
          %v1580 = vld [vmem:[#allocation13 + $0x768] sm:$0xff]
          %v1581 = vld [vmem:[#allocation13 + $0x770] sm:$0xff]
          %v1582 = vld [vmem:[#allocation13 + $0x778] sm:$0xff]
          %v1583 = vld [vmem:[#allocation13 + $0x780] sm:$0xff]
          %v1584 = vld [vmem:[#allocation13 + $0x788] sm:$0xff]
          %v1585 = vld [vmem:[#allocation13 + $0x790] sm:$0xff]
          %v1586 = vld [vmem:[#allocation13 + $0x798] sm:$0xff]
          %v1587 = vld [vmem:[#allocation13 + $0x7a0] sm:$0xff]
          %v1588 = vld [vmem:[#allocation13 + $0x7a8] sm:$0xff]
          %v1589 = vld [vmem:[#allocation13 + $0x7b0] sm:$0xff]
          %v1590 = vld [vmem:[#allocation13 + $0x7b8] sm:$0xff]
          %v1591 = vld [vmem:[#allocation13 + $0x7c0] sm:$0xff]
          %v1592 = vld [vmem:[#allocation13 + $0x7c8] sm:$0xff]
          %v1593 = vld [vmem:[#allocation13 + $0x7d0] sm:$0xff]
          %v1594 = vld [vmem:[#allocation13 + $0x7d8] sm:$0xff]
          %v1595 = vld [vmem:[#allocation13 + $0x7e0] sm:$0xff]
          %v1596 = vld [vmem:[#allocation13 + $0x7e8] sm:$0xff]
          %v1597 = vld [vmem:[#allocation13 + $0x7f0] sm:$0xff]
          %v1598 = vld [vmem:[#allocation13 + $0x7f8] sm:$0xff]
          %v1599 = vld [vmem:[#allocation13 + $0x800] sm:$0xff]
          %v1600 = vld [vmem:[#allocation13 + $0x808] sm:$0xff]
          %v1601 = vld [vmem:[#allocation13 + $0x810] sm:$0xff]
          %v1602 = vld [vmem:[#allocation13 + $0x818] sm:$0xff]
          %v1603 = vld [vmem:[#allocation13 + $0x820] sm:$0xff]
          %v1604 = vld [vmem:[#allocation13 + $0x828] sm:$0xff]
          %v1605 = vld [vmem:[#allocation13 + $0x830] sm:$0xff]
          %v1606 = vld [vmem:[#allocation13 + $0x838] sm:$0xff]
          %v1607 = vld [vmem:[#allocation13 + $0x840] sm:$0xff]
          %v1608 = vld [vmem:[#allocation13 + $0x848] sm:$0xff]
          %v1609 = vld [vmem:[#allocation13 + $0x850] sm:$0xff]
          %v1610 = vld [vmem:[#allocation13 + $0x858] sm:$0xff]
          %v1611 = vld [vmem:[#allocation13 + $0x860] sm:$0xff]
          %v1612 = vld [vmem:[#allocation13 + $0x868] sm:$0xff]
          %v1613 = vld [vmem:[#allocation13 + $0x870] sm:$0xff]
          %v1614 = vld [vmem:[#allocation13 + $0x878] sm:$0xff]
          %v1615 = vld [vmem:[#allocation13 + $0x880] sm:$0xff]
          %v1616 = vld [vmem:[#allocation13 + $0x888] sm:$0xff]
          %v1617 = vld [vmem:[#allocation13 + $0x890] sm:$0xff]
          %v1618 = vld [vmem:[#allocation13 + $0x898] sm:$0xff]
          %v1619 = vld [vmem:[#allocation13 + $0x8a0] sm:$0xff]
          %v1620 = vld [vmem:[#allocation13 + $0x8a8] sm:$0xff]
          %v1621 = vld [vmem:[#allocation13 + $0x8b0] sm:$0xff]
          %v1622 = vld [vmem:[#allocation13 + $0x8b8] sm:$0xff]
          %v1623 = vld [vmem:[#allocation13 + $0x8c0] sm:$0xff]
          %v1624 = vld [vmem:[#allocation13 + $0x8c8] sm:$0xff]
          %v1625 = vld [vmem:[#allocation13 + $0x8d0] sm:$0xff]
          %v1626 = vld [vmem:[#allocation13 + $0x8d8] sm:$0xff]
          %v1627 = vld [vmem:[#allocation13 + $0x8e0] sm:$0xff]
          %v1628 = vld [vmem:[#allocation13 + $0x8e8] sm:$0xff]
          %v1629 = vld [vmem:[#allocation13 + $0x8f0] sm:$0xff]
          %v1630 = vld [vmem:[#allocation13 + $0x8f8] sm:$0xff]
          %v1631 = vld [vmem:[#allocation13 + $0x900] sm:$0xff]
          %v1632 = vld [vmem:[#allocation13 + $0x908] sm:$0xff]
          %v1633 = vld [vmem:[#allocation13 + $0x910] sm:$0xff]
          %v1634 = vld [vmem:[#allocation13 + $0x918] sm:$0xff]
          %v1635 = vld [vmem:[#allocation13 + $0x920] sm:$0xff]
          %v1636 = vld [vmem:[#allocation13 + $0x928] sm:$0xff]
          %v1637 = vld [vmem:[#allocation13 + $0x930] sm:$0xff]
          %v1638 = vld [vmem:[#allocation13 + $0x938] sm:$0xff]
          %v1639 = vld [vmem:[#allocation13 + $0x940] sm:$0xff]
          %v1640 = vld [vmem:[#allocation13 + $0x948] sm:$0xff]
          %v1641 = vld [vmem:[#allocation13 + $0x950] sm:$0xff]
          %v1642 = vld [vmem:[#allocation13 + $0x958] sm:$0xff]
          %v1643 = vld [vmem:[#allocation13 + $0x960] sm:$0xff]
          %v1644 = vld [vmem:[#allocation13 + $0x968] sm:$0xff]
          %v1645 = vld [vmem:[#allocation13 + $0x970] sm:$0xff]
          %v1646 = vld [vmem:[#allocation13 + $0x978] sm:$0xff]
          %v1647 = vld [vmem:[#allocation13 + $0x980] sm:$0xff]
          %v1648 = vld [vmem:[#allocation13 + $0x988] sm:$0xff]
          %v1649 = vld [vmem:[#allocation13 + $0x990] sm:$0xff]
          %v1650 = vld [vmem:[#allocation13 + $0x998] sm:$0xff]
          %v1651 = vld [vmem:[#allocation13 + $0x9a0] sm:$0xff]
          %v1652 = vld [vmem:[#allocation13 + $0x9a8] sm:$0xff]
          %v1653 = vld [vmem:[#allocation13 + $0x9b0] sm:$0xff]
          %v1654 = vld [vmem:[#allocation13 + $0x9b8] sm:$0xff]
          %v1655 = vld [vmem:[#allocation13 + $0x9c0] sm:$0xff]
          %v1656 = vld [vmem:[#allocation13 + $0x9c8] sm:$0xff]
          %v1657 = vld [vmem:[#allocation13 + $0x9d0] sm:$0xff]
          %v1658 = vld [vmem:[#allocation13 + $0x9d8] sm:$0xff]
          %v1659 = vld [vmem:[#allocation13 + $0x9e0] sm:$0xff]
          %v1660 = vld [vmem:[#allocation13 + $0x9e8] sm:$0xff]
          %v1661 = vld [vmem:[#allocation13 + $0x9f0] sm:$0xff]
          %v1662 = vld [vmem:[#allocation13 + $0x9f8] sm:$0xff]
          %v1663 = vld [vmem:[#allocation13 + $0xa00] sm:$0xff]
          %v1664 = vld [vmem:[#allocation13 + $0xa08] sm:$0xff]
          %v1665 = vld [vmem:[#allocation13 + $0xa10] sm:$0xff]
          %v1666 = vld [vmem:[#allocation13 + $0xa18] sm:$0xff]
          %v1667 = vld [vmem:[#allocation13 + $0xa20] sm:$0xff]
          %v1668 = vld [vmem:[#allocation13 + $0xa28] sm:$0xff]
          %v1669 = vld [vmem:[#allocation13 + $0xa30] sm:$0xff]
          %v1670 = vld [vmem:[#allocation13 + $0xa38] sm:$0xff]
          %v1671 = vld [vmem:[#allocation13 + $0xa40] sm:$0xff]
          %v1672 = vld [vmem:[#allocation13 + $0xa48] sm:$0xff]
          %v1673 = vld [vmem:[#allocation13 + $0xa50] sm:$0xff]
          %v1674 = vld [vmem:[#allocation13 + $0xa58] sm:$0xff]
          %v1675 = vld [vmem:[#allocation13 + $0xa60] sm:$0xff]
          %v1676 = vld [vmem:[#allocation13 + $0xa68] sm:$0xff]
          %v1677 = vld [vmem:[#allocation13 + $0xa70] sm:$0xff]
          %v1678 = vld [vmem:[#allocation13 + $0xa78] sm:$0xff]
          %v1679 = vld [vmem:[#allocation13 + $0xa80] sm:$0xff]
          %v1680 = vld [vmem:[#allocation13 + $0xa88] sm:$0xff]
          %v1681 = vld [vmem:[#allocation13 + $0xa90] sm:$0xff]
          %v1682 = vld [vmem:[#allocation13 + $0xa98] sm:$0xff]
          %v1683 = vld [vmem:[#allocation13 + $0xaa0] sm:$0xff]
          %v1684 = vld [vmem:[#allocation13 + $0xaa8] sm:$0xff]
          %v1685 = vld [vmem:[#allocation13 + $0xab0] sm:$0xff]
          %v1686 = vld [vmem:[#allocation13 + $0xab8] sm:$0xff]
          %v1687 = vld [vmem:[#allocation13 + $0xac0] sm:$0xff]
          %v1688 = vld [vmem:[#allocation13 + $0xac8] sm:$0xff]
          %v1689 = vld [vmem:[#allocation13 + $0xad0] sm:$0xff]
          %v1690 = vld [vmem:[#allocation13 + $0xad8] sm:$0xff]
          %v1691 = vld [vmem:[#allocation13 + $0xae0] sm:$0xff]
          %v1692 = vld [vmem:[#allocation13 + $0xae8] sm:$0xff]
          %v1693 = vld [vmem:[#allocation13 + $0xaf0] sm:$0xff]
          %v1694 = vld [vmem:[#allocation13 + $0xaf8] sm:$0xff]
          %v1695 = vld [vmem:[#allocation13 + $0xb00] sm:$0xff]
          %v1696 = vld [vmem:[#allocation13 + $0xb08] sm:$0xff]
          %v1697 = vld [vmem:[#allocation13 + $0xb10] sm:$0xff]
          %v1698 = vld [vmem:[#allocation13 + $0xb18] sm:$0xff]
          %v1699 = vld [vmem:[#allocation13 + $0xb20] sm:$0xff]
          %v1700 = vld [vmem:[#allocation13 + $0xb28] sm:$0xff]
          %v1701 = vld [vmem:[#allocation13 + $0xb30] sm:$0xff]
          %v1702 = vld [vmem:[#allocation13 + $0xb38] sm:$0xff]
          %v1703 = vld [vmem:[#allocation13 + $0xb40] sm:$0xff]
          %v1704 = vld [vmem:[#allocation13 + $0xb48] sm:$0xff]
          %v1705 = vld [vmem:[#allocation13 + $0xb50] sm:$0xff]
          %v1706 = vld [vmem:[#allocation13 + $0xb58] sm:$0xff]
          %v1707 = vld [vmem:[#allocation13 + $0xb60] sm:$0xff]
          %v1708 = vld [vmem:[#allocation13 + $0xb68] sm:$0xff]
          %v1709 = vld [vmem:[#allocation13 + $0xb70] sm:$0xff]
          %v1710 = vld [vmem:[#allocation13 + $0xb78] sm:$0xff]
          %v1711 = vld [vmem:[#allocation13 + $0xb80] sm:$0xff]
          %v1712 = vld [vmem:[#allocation13 + $0xb88] sm:$0xff]
          %v1713 = vld [vmem:[#allocation13 + $0xb90] sm:$0xff]
          %v1714 = vld [vmem:[#allocation13 + $0xb98] sm:$0xff]
          %v1715 = vld [vmem:[#allocation13 + $0xba0] sm:$0xff]
          %v1716 = vld [vmem:[#allocation13 + $0xba8] sm:$0xff]
          %v1717 = vld [vmem:[#allocation13 + $0xbb0] sm:$0xff]
          %v1718 = vld [vmem:[#allocation13 + $0xbb8] sm:$0xff]
          %v1719 = vld [vmem:[#allocation13 + $0xbc0] sm:$0xff]
          %v1720 = vld [vmem:[#allocation13 + $0xbc8] sm:$0xff]
          %v1721 = vld [vmem:[#allocation13 + $0xbd0] sm:$0xff]
          %v1722 = vld [vmem:[#allocation13 + $0xbd8] sm:$0xff]
          %v1723 = vld [vmem:[#allocation13 + $0xbe0] sm:$0xff]
          %v1724 = vld [vmem:[#allocation13 + $0xbe8] sm:$0xff]
          %v1725 = vld [vmem:[#allocation13 + $0xbf0] sm:$0xff]
          %v1726 = vld [vmem:[#allocation13 + $0xbf8] sm:$0xff]
          %v1727 = vld [vmem:[#allocation13 + $0xc00] sm:$0xff]
          %v1728 = vld [vmem:[#allocation13 + $0xc08] sm:$0xff]
          %v1729 = vld [vmem:[#allocation13 + $0xc10] sm:$0xff]
          %v1730 = vld [vmem:[#allocation13 + $0xc18] sm:$0xff]
          %v1731 = vld [vmem:[#allocation13 + $0xc20] sm:$0xff]
          %v1732 = vld [vmem:[#allocation13 + $0xc28] sm:$0xff]
          %v1733 = vld [vmem:[#allocation13 + $0xc30] sm:$0xff]
          %v1734 = vld [vmem:[#allocation13 + $0xc38] sm:$0xff]
          %v1735 = vld [vmem:[#allocation13 + $0xc40] sm:$0xff]
          %v1736 = vld [vmem:[#allocation13 + $0xc48] sm:$0xff]
          %v1737 = vld [vmem:[#allocation13 + $0xc50] sm:$0xff]
          %v1738 = vld [vmem:[#allocation13 + $0xc58] sm:$0xff]
          %v1739 = vld [vmem:[#allocation13 + $0xc60] sm:$0xff]
          %v1740 = vld [vmem:[#allocation13 + $0xc68] sm:$0xff]
          %v1741 = vld [vmem:[#allocation13 + $0xc70] sm:$0xff]
          %v1742 = vld [vmem:[#allocation13 + $0xc78] sm:$0xff]
          %v1743 = vld [vmem:[#allocation13 + $0xc80] sm:$0xff]
          %v1744 = vld [vmem:[#allocation13 + $0xc88] sm:$0xff]
          %v1745 = vld [vmem:[#allocation13 + $0xc90] sm:$0xff]
          %v1746 = vld [vmem:[#allocation13 + $0xc98] sm:$0xff]
          %v1747 = vld [vmem:[#allocation13 + $0xca0] sm:$0xff]
          %v1748 = vld [vmem:[#allocation13 + $0xca8] sm:$0xff]
          %v1749 = vld [vmem:[#allocation13 + $0xcb0] sm:$0xff]
          %v1750 = vld [vmem:[#allocation13 + $0xcb8] sm:$0xff]
          %v1751 = vld [vmem:[#allocation13 + $0xcc0] sm:$0xff]
          %v1752 = vld [vmem:[#allocation13 + $0xcc8] sm:$0xff]
          %v1753 = vld [vmem:[#allocation13 + $0xcd0] sm:$0xff]
          %v1754 = vld [vmem:[#allocation13 + $0xcd8] sm:$0xff]
          %v1755 = vld [vmem:[#allocation13 + $0xce0] sm:$0xff]
          %v1756 = vld [vmem:[#allocation13 + $0xce8] sm:$0xff]
          %v1757 = vld [vmem:[#allocation13 + $0xcf0] sm:$0xff]
          %v1758 = vld [vmem:[#allocation13 + $0xcf8] sm:$0xff]
          %v1759 = vld [vmem:[#allocation13 + $0xd00] sm:$0xff]
          %v1760 = vld [vmem:[#allocation13 + $0xd08] sm:$0xff]
          %v1761 = vld [vmem:[#allocation13 + $0xd10] sm:$0xff]
          %v1762 = vld [vmem:[#allocation13 + $0xd18] sm:$0xff]
          %v1763 = vld [vmem:[#allocation13 + $0xd20] sm:$0xff]
          %v1764 = vld [vmem:[#allocation13 + $0xd28] sm:$0xff]
          %v1765 = vld [vmem:[#allocation13 + $0xd30] sm:$0xff]
          %v1766 = vld [vmem:[#allocation13 + $0xd38] sm:$0xff]
          %v1767 = vld [vmem:[#allocation13 + $0xd40] sm:$0xff]
          %v1768 = vld [vmem:[#allocation13 + $0xd48] sm:$0xff]
          %v1769 = vld [vmem:[#allocation13 + $0xd50] sm:$0xff]
          %v1770 = vld [vmem:[#allocation13 + $0xd58] sm:$0xff]
          %v1771 = vld [vmem:[#allocation13 + $0xd60] sm:$0xff]
          %v1772 = vld [vmem:[#allocation13 + $0xd68] sm:$0xff]
          %v1773 = vld [vmem:[#allocation13 + $0xd70] sm:$0xff]
          %v1774 = vld [vmem:[#allocation13 + $0xd78] sm:$0xff]
          %v1775 = vld [vmem:[#allocation13 + $0xd80] sm:$0xff]
          %v1776 = vld [vmem:[#allocation13 + $0xd88] sm:$0xff]
          %v1777 = vld [vmem:[#allocation13 + $0xd90] sm:$0xff]
          %v1778 = vld [vmem:[#allocation13 + $0xd98] sm:$0xff]
          %v1779 = vld [vmem:[#allocation13 + $0xda0] sm:$0xff]
          %v1780 = vld [vmem:[#allocation13 + $0xda8] sm:$0xff]
          %v1781 = vld [vmem:[#allocation13 + $0xdb0] sm:$0xff]
          %v1782 = vld [vmem:[#allocation13 + $0xdb8] sm:$0xff]
          %v1783 = vld [vmem:[#allocation13 + $0xdc0] sm:$0xff]
          %v1784 = vld [vmem:[#allocation13 + $0xdc8] sm:$0xff]
          %v1785 = vld [vmem:[#allocation13 + $0xdd0] sm:$0xff]
          %v1786 = vld [vmem:[#allocation13 + $0xdd8] sm:$0xff]
          %v1787 = vld [vmem:[#allocation13 + $0xde0] sm:$0xff]
          %v1788 = vld [vmem:[#allocation13 + $0xde8] sm:$0xff]
          %v1789 = vld [vmem:[#allocation13 + $0xdf0] sm:$0xff]
          %v1790 = vld [vmem:[#allocation13 + $0xdf8] sm:$0xff]
          %v1791 = vld [vmem:[#allocation13 + $0xe00] sm:$0xff]
          %v1792 = vld [vmem:[#allocation13 + $0xe08] sm:$0xff]
          %v1793 = vld [vmem:[#allocation13 + $0xe10] sm:$0xff]
          %v1794 = vld [vmem:[#allocation13 + $0xe18] sm:$0xff]
          %v1795 = vld [vmem:[#allocation13 + $0xe20] sm:$0xff]
          %v1796 = vld [vmem:[#allocation13 + $0xe28] sm:$0xff]
          %v1797 = vld [vmem:[#allocation13 + $0xe30] sm:$0xff]
          %v1798 = vld [vmem:[#allocation13 + $0xe38] sm:$0xff]
          %v1799 = vld [vmem:[#allocation13 + $0xe40] sm:$0xff]
          %v1800 = vld [vmem:[#allocation13 + $0xe48] sm:$0xff]
          %v1801 = vld [vmem:[#allocation13 + $0xe50] sm:$0xff]
          %v1802 = vld [vmem:[#allocation13 + $0xe58] sm:$0xff]
          %v1803 = vld [vmem:[#allocation13 + $0xe60] sm:$0xff]
          %v1804 = vld [vmem:[#allocation13 + $0xe68] sm:$0xff]
          %v1805 = vld [vmem:[#allocation13 + $0xe70] sm:$0xff]
          %v1806 = vld [vmem:[#allocation13 + $0xe78] sm:$0xff]
          %v1807 = vld [vmem:[#allocation13 + $0xe80] sm:$0xff]
          %v1808 = vld [vmem:[#allocation13 + $0xe88] sm:$0xff]
          %v1809 = vld [vmem:[#allocation13 + $0xe90] sm:$0xff]
          %v1810 = vld [vmem:[#allocation13 + $0xe98] sm:$0xff]
          %v1811 = vld [vmem:[#allocation13 + $0xea0] sm:$0xff]
          %v1812 = vld [vmem:[#allocation13 + $0xea8] sm:$0xff]
          %v1813 = vld [vmem:[#allocation13 + $0xeb0] sm:$0xff]
          %v1814 = vld [vmem:[#allocation13 + $0xeb8] sm:$0xff]
          %v1815 = vld [vmem:[#allocation13 + $0xec0] sm:$0xff]
          %v1816 = vld [vmem:[#allocation13 + $0xec8] sm:$0xff]
          %v1817 = vld [vmem:[#allocation13 + $0xed0] sm:$0xff]
          %v1818 = vld [vmem:[#allocation13 + $0xed8] sm:$0xff]
          %v1819 = vld [vmem:[#allocation13 + $0xee0] sm:$0xff]
          %v1820 = vld [vmem:[#allocation13 + $0xee8] sm:$0xff]
          %v1821 = vld [vmem:[#allocation13 + $0xef0] sm:$0xff]
          %v1822 = vld [vmem:[#allocation13 + $0xef8] sm:$0xff]
          %v1823 = vld [vmem:[#allocation13 + $0xf00] sm:$0xff]
          %v1824 = vld [vmem:[#allocation13 + $0xf08] sm:$0xff]
          %v1825 = vld [vmem:[#allocation13 + $0xf10] sm:$0xff]
          %v1826 = vld [vmem:[#allocation13 + $0xf18] sm:$0xff]
          %v1827 = vld [vmem:[#allocation13 + $0xf20] sm:$0xff]
          %v1828 = vld [vmem:[#allocation13 + $0xf28] sm:$0xff]
          %v1829 = vld [vmem:[#allocation13 + $0xf30] sm:$0xff]
          %v1830 = vld [vmem:[#allocation13 + $0xf38] sm:$0xff]
          %v1831 = vld [vmem:[#allocation13 + $0xf40] sm:$0xff]
          %v1832 = vld [vmem:[#allocation13 + $0xf48] sm:$0xff]
          %v1833 = vld [vmem:[#allocation13 + $0xf50] sm:$0xff]
          %v1834 = vld [vmem:[#allocation13 + $0xf58] sm:$0xff]
          %v1835 = vld [vmem:[#allocation13 + $0xf60] sm:$0xff]
          %v1836 = vld [vmem:[#allocation13 + $0xf68] sm:$0xff]
          %v1837 = vld [vmem:[#allocation13 + $0xf70] sm:$0xff]
          %v1838 = vld [vmem:[#allocation13 + $0xf78] sm:$0xff]
          %v1839 = vld [vmem:[#allocation13 + $0xf80] sm:$0xff]
          %v1840 = vld [vmem:[#allocation13 + $0xf88] sm:$0xff]
          %v1841 = vld [vmem:[#allocation13 + $0xf90] sm:$0xff]
          %v1842 = vld [vmem:[#allocation13 + $0xf98] sm:$0xff]
          %v1843 = vld [vmem:[#allocation13 + $0xfa0] sm:$0xff]
          %v1844 = vld [vmem:[#allocation13 + $0xfa8] sm:$0xff]
          %v1845 = vld [vmem:[#allocation13 + $0xfb0] sm:$0xff]
          %v1846 = vld [vmem:[#allocation13 + $0xfb8] sm:$0xff]
          %v1847 = vld [vmem:[#allocation13 + $0xfc0] sm:$0xff]
          %v1848 = vld [vmem:[#allocation13 + $0xfc8] sm:$0xff]
          %v1849 = vld [vmem:[#allocation13 + $0xfd0] sm:$0xff]
          %v1850 = vld [vmem:[#allocation13 + $0xfd8] sm:$0xff]
          %v1851 = vld [vmem:[#allocation13 + $0xfe0] sm:$0xff]
          %v1852 = vld [vmem:[#allocation13 + $0xfe8] sm:$0xff]
          %v1853 = vld [vmem:[#allocation13 + $0xff0] sm:$0xff]
          %v1854 = vld [vmem:[#allocation13 + $0xff8] sm:$0xff]
          %v1855 = vld [vmem:[#allocation13 + $0x1000] sm:$0xff]
          %v1856 = vld [vmem:[#allocation13 + $0x1008] sm:$0xff]
          %v1857 = vld [vmem:[#allocation13 + $0x1010] sm:$0xff]
          %v1858 = vld [vmem:[#allocation13 + $0x1018] sm:$0xff]
          %v1859 = vld [vmem:[#allocation13 + $0x1020] sm:$0xff]
          %v1860 = vld [vmem:[#allocation13 + $0x1028] sm:$0xff]
          %v1861 = vld [vmem:[#allocation13 + $0x1030] sm:$0xff]
          %v1862 = vld [vmem:[#allocation13 + $0x1038] sm:$0xff]
          %v1863 = vld [vmem:[#allocation13 + $0x1040] sm:$0xff]
          %v1864 = vld [vmem:[#allocation13 + $0x1048] sm:$0xff]
          %v1865 = vld [vmem:[#allocation13 + $0x1050] sm:$0xff]
          %v1866 = vld [vmem:[#allocation13 + $0x1058] sm:$0xff]
          %v1867 = vld [vmem:[#allocation13 + $0x1060] sm:$0xff]
          %v1868 = vld [vmem:[#allocation13 + $0x1068] sm:$0xff]
          %v1869 = vld [vmem:[#allocation13 + $0x1070] sm:$0xff]
          %v1870 = vld [vmem:[#allocation13 + $0x1078] sm:$0xff]
          %v1871 = vld [vmem:[#allocation13 + $0x1080] sm:$0xff]
          %v1872 = vld [vmem:[#allocation13 + $0x1088] sm:$0xff]
          %v1873 = vld [vmem:[#allocation13 + $0x1090] sm:$0xff]
          %v1874 = vld [vmem:[#allocation13 + $0x1098] sm:$0xff]
          %v1875 = vld [vmem:[#allocation13 + $0x10a0] sm:$0xff]
          %v1876 = vld [vmem:[#allocation13 + $0x10a8] sm:$0xff]
          %v1877 = vld [vmem:[#allocation13 + $0x10b0] sm:$0xff]
          %v1878 = vld [vmem:[#allocation13 + $0x10b8] sm:$0xff]
          %v1879 = vld [vmem:[#allocation13 + $0x10c0] sm:$0xff]
          %v1880 = vld [vmem:[#allocation13 + $0x10c8] sm:$0xff]
          %v1881 = vld [vmem:[#allocation13 + $0x10d0] sm:$0xff]
          %v1882 = vld [vmem:[#allocation13 + $0x10d8] sm:$0xff]
          %v1883 = vld [vmem:[#allocation13 + $0x10e0] sm:$0xff]
          %v1884 = vld [vmem:[#allocation13 + $0x10e8] sm:$0xff]
          %v1885 = vld [vmem:[#allocation13 + $0x10f0] sm:$0xff]
          %v1886 = vld [vmem:[#allocation13 + $0x10f8] sm:$0xff]
          %v1887 = vld [vmem:[#allocation13 + $0x1100] sm:$0xff]
          %v1888 = vld [vmem:[#allocation13 + $0x1108] sm:$0xff]
          %v1889 = vld [vmem:[#allocation13 + $0x1110] sm:$0xff]
          %v1890 = vld [vmem:[#allocation13 + $0x1118] sm:$0xff]
          %v1891 = vld [vmem:[#allocation13 + $0x1120] sm:$0xff]
          %v1892 = vld [vmem:[#allocation13 + $0x1128] sm:$0xff]
          %v1893 = vld [vmem:[#allocation13 + $0x1130] sm:$0xff]
          %v1894 = vld [vmem:[#allocation13 + $0x1138] sm:$0xff]
          %v1895 = vld [vmem:[#allocation13 + $0x1140] sm:$0xff]
          %v1896 = vld [vmem:[#allocation13 + $0x1148] sm:$0xff]
          %v1897 = vld [vmem:[#allocation13 + $0x1150] sm:$0xff]
          %v1898 = vld [vmem:[#allocation13 + $0x1158] sm:$0xff]
          %v1899 = vld [vmem:[#allocation13 + $0x1160] sm:$0xff]
          %v1900 = vld [vmem:[#allocation13 + $0x1168] sm:$0xff]
          %v1901 = vld [vmem:[#allocation13 + $0x1170] sm:$0xff]
          %v1902 = vld [vmem:[#allocation13 + $0x1178] sm:$0xff]
          %v1903 = vld [vmem:[#allocation13 + $0x1180] sm:$0xff]
          %v1904 = vld [vmem:[#allocation13 + $0x1188] sm:$0xff]
          %v1905 = vld [vmem:[#allocation13 + $0x1190] sm:$0xff]
          %v1906 = vld [vmem:[#allocation13 + $0x1198] sm:$0xff]
          %v1907 = vld [vmem:[#allocation13 + $0x11a0] sm:$0xff]
          %v1908 = vld [vmem:[#allocation13 + $0x11a8] sm:$0xff]
          %v1909 = vld [vmem:[#allocation13 + $0x11b0] sm:$0xff]
          %v1910 = vld [vmem:[#allocation13 + $0x11b8] sm:$0xff]
          %v1911 = vld [vmem:[#allocation13 + $0x11c0] sm:$0xff]
          %v1912 = vld [vmem:[#allocation13 + $0x11c8] sm:$0xff]
          %v1913 = vld [vmem:[#allocation13 + $0x11d0] sm:$0xff]
          %v1914 = vld [vmem:[#allocation13 + $0x11d8] sm:$0xff]
          %v1915 = vld [vmem:[#allocation13 + $0x11e0] sm:$0xff]
          %v1916 = vld [vmem:[#allocation13 + $0x11e8] sm:$0xff]
          %v1917 = vld [vmem:[#allocation13 + $0x11f0] sm:$0xff]
          %v1918 = vld [vmem:[#allocation13 + $0x11f8] sm:$0xff]
          %v1919 = vld [vmem:[#allocation13 + $0x1200] sm:$0xff]
          %v1920 = vld [vmem:[#allocation13 + $0x1208] sm:$0xff]
          %v1921 = vld [vmem:[#allocation13 + $0x1210] sm:$0xff]
          %v1922 = vld [vmem:[#allocation13 + $0x1218] sm:$0xff]
          %v1923 = vld [vmem:[#allocation13 + $0x1220] sm:$0xff]
          %v1924 = vld [vmem:[#allocation13 + $0x1228] sm:$0xff]
          %v1925 = vld [vmem:[#allocation13 + $0x1230] sm:$0xff]
          %v1926 = vld [vmem:[#allocation13 + $0x1238] sm:$0xff]
          %v1927 = vld [vmem:[#allocation13 + $0x1240] sm:$0xff]
          %v1928 = vld [vmem:[#allocation13 + $0x1248] sm:$0xff]
          %v1929 = vld [vmem:[#allocation13 + $0x1250] sm:$0xff]
          %v1930 = vld [vmem:[#allocation13 + $0x1258] sm:$0xff]
          %v1931 = vld [vmem:[#allocation13 + $0x1260] sm:$0xff]
          %v1932 = vld [vmem:[#allocation13 + $0x1268] sm:$0xff]
          %v1933 = vld [vmem:[#allocation13 + $0x1270] sm:$0xff]
          %v1934 = vld [vmem:[#allocation13 + $0x1278] sm:$0xff]
          %v1935 = vld [vmem:[#allocation13 + $0x1280] sm:$0xff]
          %v1936 = vld [vmem:[#allocation13 + $0x1288] sm:$0xff]
          %v1937 = vld [vmem:[#allocation13 + $0x1290] sm:$0xff]
          %v1938 = vld [vmem:[#allocation13 + $0x1298] sm:$0xff]
          %v1939 = vld [vmem:[#allocation13 + $0x12a0] sm:$0xff]
          %v1940 = vld [vmem:[#allocation13 + $0x12a8] sm:$0xff]
          %v1941 = vld [vmem:[#allocation13 + $0x12b0] sm:$0xff]
          %v1942 = vld [vmem:[#allocation13 + $0x12b8] sm:$0xff]
          %v1943 = vld [vmem:[#allocation13 + $0x12c0] sm:$0xff]
          %v1944 = vld [vmem:[#allocation13 + $0x12c8] sm:$0xff]
          %v1945 = vld [vmem:[#allocation13 + $0x12d0] sm:$0xff]
          %v1946 = vld [vmem:[#allocation13 + $0x12d8] sm:$0xff]
          %v1947 = vld [vmem:[#allocation13 + $0x12e0] sm:$0xff]
          %v1948 = vld [vmem:[#allocation13 + $0x12e8] sm:$0xff]
          %v1949 = vld [vmem:[#allocation13 + $0x12f0] sm:$0xff]
          %v1950 = vld [vmem:[#allocation13 + $0x12f8] sm:$0xff]
          %v1951 = vld [vmem:[#allocation13 + $0x1300] sm:$0xff]
          %v1952 = vld [vmem:[#allocation13 + $0x1308] sm:$0xff]
          %v1953 = vld [vmem:[#allocation13 + $0x1310] sm:$0xff]
          %v1954 = vld [vmem:[#allocation13 + $0x1318] sm:$0xff]
          %v1955 = vld [vmem:[#allocation13 + $0x1320] sm:$0xff]
          %v1956 = vld [vmem:[#allocation13 + $0x1328] sm:$0xff]
          %v1957 = vld [vmem:[#allocation13 + $0x1330] sm:$0xff]
          %v1958 = vld [vmem:[#allocation13 + $0x1338] sm:$0xff]
          %v1959 = vld [vmem:[#allocation13 + $0x1340] sm:$0xff]
          %v1960 = vld [vmem:[#allocation13 + $0x1348] sm:$0xff]
          %v1961 = vld [vmem:[#allocation13 + $0x1350] sm:$0xff]
          %v1962 = vld [vmem:[#allocation13 + $0x1358] sm:$0xff]
          %v1963 = vld [vmem:[#allocation13 + $0x1360] sm:$0xff]
          %v1964 = vld [vmem:[#allocation13 + $0x1368] sm:$0xff]
          %v1965 = vld [vmem:[#allocation13 + $0x1370] sm:$0xff]
          %v1966 = vld [vmem:[#allocation13 + $0x1378] sm:$0xff]
          %v1967 = vld [vmem:[#allocation13 + $0x1380] sm:$0xff]
          %v1968 = vld [vmem:[#allocation13 + $0x1388] sm:$0xff]
          %v1969 = vld [vmem:[#allocation13 + $0x1390] sm:$0xff]
          %v1970 = vld [vmem:[#allocation13 + $0x1398] sm:$0xff]
          %v1971 = vld [vmem:[#allocation13 + $0x13a0] sm:$0xff]
          %v1972 = vld [vmem:[#allocation13 + $0x13a8] sm:$0xff]
          %v1973 = vld [vmem:[#allocation13 + $0x13b0] sm:$0xff]
          %v1974 = vld [vmem:[#allocation13 + $0x13b8] sm:$0xff]
          %v1975 = vld [vmem:[#allocation13 + $0x13c0] sm:$0xff]
          %v1976 = vld [vmem:[#allocation13 + $0x13c8] sm:$0xff]
          %v1977 = vld [vmem:[#allocation13 + $0x13d0] sm:$0xff]
          %v1978 = vld [vmem:[#allocation13 + $0x13d8] sm:$0xff]
          %v1979 = vld [vmem:[#allocation13 + $0x13e0] sm:$0xff]
          %v1980 = vld [vmem:[#allocation13 + $0x13e8] sm:$0xff]
          %v1981 = vld [vmem:[#allocation13 + $0x13f0] sm:$0xff]
          %v1982 = vld [vmem:[#allocation13 + $0x13f8] sm:$0xff]
          %v1983 = vld [vmem:[#allocation13 + $0x1400] sm:$0xff]
          %v1984 = vld [vmem:[#allocation13 + $0x1408] sm:$0xff]
          %v1985 = vld [vmem:[#allocation13 + $0x1410] sm:$0xff]
          %v1986 = vld [vmem:[#allocation13 + $0x1418] sm:$0xff]
          %v1987 = vld [vmem:[#allocation13 + $0x1420] sm:$0xff]
          %v1988 = vld [vmem:[#allocation13 + $0x1428] sm:$0xff]
          %v1989 = vld [vmem:[#allocation13 + $0x1430] sm:$0xff]
          %v1990 = vld [vmem:[#allocation13 + $0x1438] sm:$0xff]
          %v1991 = vld [vmem:[#allocation13 + $0x1440] sm:$0xff]
          %v1992 = vld [vmem:[#allocation13 + $0x1448] sm:$0xff]
          %v1993 = vld [vmem:[#allocation13 + $0x1450] sm:$0xff]
          %v1994 = vld [vmem:[#allocation13 + $0x1458] sm:$0xff]
          %v1995 = vld [vmem:[#allocation13 + $0x1460] sm:$0xff]
          %v1996 = vld [vmem:[#allocation13 + $0x1468] sm:$0xff]
          %v1997 = vld [vmem:[#allocation13 + $0x1470] sm:$0xff]
          %v1998 = vld [vmem:[#allocation13 + $0x1478] sm:$0xff]
          %v1999 = vld [vmem:[#allocation13 + $0x1480] sm:$0xff]
          %v2000 = vld [vmem:[#allocation13 + $0x1488] sm:$0xff]
          %v2001 = vld [vmem:[#allocation13 + $0x1490] sm:$0xff]
          %v2002 = vld [vmem:[#allocation13 + $0x1498] sm:$0xff]
          %v2003 = vld [vmem:[#allocation13 + $0x14a0] sm:$0xff]
          %v2004 = vld [vmem:[#allocation13 + $0x14a8] sm:$0xff]
          %v2005 = vld [vmem:[#allocation13 + $0x14b0] sm:$0xff]
          %v2006 = vld [vmem:[#allocation13 + $0x14b8] sm:$0xff]
          %v2007 = vld [vmem:[#allocation13 + $0x14c0] sm:$0xff]
          %v2008 = vld [vmem:[#allocation13 + $0x14c8] sm:$0xff]
          %v2009 = vld [vmem:[#allocation13 + $0x14d0] sm:$0xff]
          %v2010 = vld [vmem:[#allocation13 + $0x14d8] sm:$0xff]
          %v2011 = vld [vmem:[#allocation13 + $0x14e0] sm:$0xff]
          %v2012 = vld [vmem:[#allocation13 + $0x14e8] sm:$0xff]
          %v2013 = vld [vmem:[#allocation13 + $0x14f0] sm:$0xff]
          %v2014 = vld [vmem:[#allocation13 + $0x14f8] sm:$0xff]
          %v2015 = vld [vmem:[#allocation13 + $0x1500] sm:$0xff]
          %v2016 = vld [vmem:[#allocation13 + $0x1508] sm:$0xff]
          %v2017 = vld [vmem:[#allocation13 + $0x1510] sm:$0xff]
          %v2018 = vld [vmem:[#allocation13 + $0x1518] sm:$0xff]
          %v2019 = vld [vmem:[#allocation13 + $0x1520] sm:$0xff]
          %v2020 = vld [vmem:[#allocation13 + $0x1528] sm:$0xff]
          %v2021 = vld [vmem:[#allocation13 + $0x1530] sm:$0xff]
          %v2022 = vld [vmem:[#allocation13 + $0x1538] sm:$0xff]
          %v2023 = vld [vmem:[#allocation13 + $0x1540] sm:$0xff]
          %v2024 = vld [vmem:[#allocation13 + $0x1548] sm:$0xff]
          %v2025 = vld [vmem:[#allocation13 + $0x1550] sm:$0xff]
          %v2026 = vld [vmem:[#allocation13 + $0x1558] sm:$0xff]
          %v2027 = vld [vmem:[#allocation13 + $0x1560] sm:$0xff]
          %v2028 = vld [vmem:[#allocation13 + $0x1568] sm:$0xff]
          %v2029 = vld [vmem:[#allocation13 + $0x1570] sm:$0xff]
          %v2030 = vld [vmem:[#allocation13 + $0x1578] sm:$0xff]
          %v2031 = vld [vmem:[#allocation13 + $0x1580] sm:$0xff]
          %v2032 = vld [vmem:[#allocation13 + $0x1588] sm:$0xff]
          %v2033 = vld [vmem:[#allocation13 + $0x1590] sm:$0xff]
          %v2034 = vld [vmem:[#allocation13 + $0x1598] sm:$0xff]
          %v2035 = vld [vmem:[#allocation13 + $0x15a0] sm:$0xff]
          %v2036 = vld [vmem:[#allocation13 + $0x15a8] sm:$0xff]
          %v2037 = vld [vmem:[#allocation13 + $0x15b0] sm:$0xff]
          %v2038 = vld [vmem:[#allocation13 + $0x15b8] sm:$0xff]
          %v2039 = vld [vmem:[#allocation13 + $0x15c0] sm:$0xff]
          %v2040 = vld [vmem:[#allocation13 + $0x15c8] sm:$0xff]
          %v2041 = vld [vmem:[#allocation13 + $0x15d0] sm:$0xff]
          %v2042 = vld [vmem:[#allocation13 + $0x15d8] sm:$0xff]
          %v2043 = vld [vmem:[#allocation13 + $0x15e0] sm:$0xff]
          %v2044 = vld [vmem:[#allocation13 + $0x15e8] sm:$0xff]
          %v2045 = vld [vmem:[#allocation13 + $0x15f0] sm:$0xff]
          %v2046 = vld [vmem:[#allocation13 + $0x15f8] sm:$0xff]
          %v2047 = vld [vmem:[#allocation13 + $0x1600] sm:$0xff]
          %v2048 = vld [vmem:[#allocation13 + $0x1608] sm:$0xff]
          %v2049 = vld [vmem:[#allocation13 + $0x1610] sm:$0xff]
          %v2050 = vld [vmem:[#allocation13 + $0x1618] sm:$0xff]
          %v2051 = vld [vmem:[#allocation13 + $0x1620] sm:$0xff]
          %v2052 = vld [vmem:[#allocation13 + $0x1628] sm:$0xff]
          %v2053 = vld [vmem:[#allocation13 + $0x1630] sm:$0xff]
          %v2054 = vld [vmem:[#allocation13 + $0x1638] sm:$0xff]
          %v2055 = vld [vmem:[#allocation13 + $0x1640] sm:$0xff]
          %v2056 = vld [vmem:[#allocation13 + $0x1648] sm:$0xff]
          %v2057 = vld [vmem:[#allocation13 + $0x1650] sm:$0xff]
          %v2058 = vld [vmem:[#allocation13 + $0x1658] sm:$0xff]
          %v2059 = vld [vmem:[#allocation13 + $0x1660] sm:$0xff]
          %v2060 = vld [vmem:[#allocation13 + $0x1668] sm:$0xff]
          %v2061 = vld [vmem:[#allocation13 + $0x1670] sm:$0xff]
          %v2062 = vld [vmem:[#allocation13 + $0x1678] sm:$0xff]
          %v2063 = vld [vmem:[#allocation13 + $0x1680] sm:$0xff]
          %v2064 = vld [vmem:[#allocation13 + $0x1688] sm:$0xff]
          %v2065 = vld [vmem:[#allocation13 + $0x1690] sm:$0xff]
          %v2066 = vld [vmem:[#allocation13 + $0x1698] sm:$0xff]
          %v2067 = vld [vmem:[#allocation13 + $0x16a0] sm:$0xff]
          %v2068 = vld [vmem:[#allocation13 + $0x16a8] sm:$0xff]
          %v2069 = vld [vmem:[#allocation13 + $0x16b0] sm:$0xff]
          %v2070 = vld [vmem:[#allocation13 + $0x16b8] sm:$0xff]
          %v2071 = vld [vmem:[#allocation13 + $0x16c0] sm:$0xff]
          %v2072 = vld [vmem:[#allocation13 + $0x16c8] sm:$0xff]
          %v2073 = vld [vmem:[#allocation13 + $0x16d0] sm:$0xff]
          %v2074 = vld [vmem:[#allocation13 + $0x16d8] sm:$0xff]
          %v2075 = vld [vmem:[#allocation13 + $0x16e0] sm:$0xff]
          %v2076 = vld [vmem:[#allocation13 + $0x16e8] sm:$0xff]
          %v2077 = vld [vmem:[#allocation13 + $0x16f0] sm:$0xff]
          %v2078 = vld [vmem:[#allocation13 + $0x16f8] sm:$0xff]
          %v2079 = vld [vmem:[#allocation13 + $0x1700] sm:$0xff]
          %v2080 = vld [vmem:[#allocation13 + $0x1708] sm:$0xff]
          %v2081 = vld [vmem:[#allocation13 + $0x1710] sm:$0xff]
          %v2082 = vld [vmem:[#allocation13 + $0x1718] sm:$0xff]
          %v2083 = vld [vmem:[#allocation13 + $0x1720] sm:$0xff]
          %v2084 = vld [vmem:[#allocation13 + $0x1728] sm:$0xff]
          %v2085 = vld [vmem:[#allocation13 + $0x1730] sm:$0xff]
          %v2086 = vld [vmem:[#allocation13 + $0x1738] sm:$0xff]
          %v2087 = vld [vmem:[#allocation13 + $0x1740] sm:$0xff]
          %v2088 = vld [vmem:[#allocation13 + $0x1748] sm:$0xff]
          %v2089 = vld [vmem:[#allocation13 + $0x1750] sm:$0xff]
          %v2090 = vld [vmem:[#allocation13 + $0x1758] sm:$0xff]
          %v2091 = vld [vmem:[#allocation13 + $0x1760] sm:$0xff]
          %v2092 = vld [vmem:[#allocation13 + $0x1768] sm:$0xff]
          %v2093 = vld [vmem:[#allocation13 + $0x1770] sm:$0xff]
          %v2094 = vld [vmem:[#allocation13 + $0x1778] sm:$0xff]
          %v2095 = vld [vmem:[#allocation13 + $0x1780] sm:$0xff]
          %v2096 = vld [vmem:[#allocation13 + $0x1788] sm:$0xff]
          %v2097 = vld [vmem:[#allocation13 + $0x1790] sm:$0xff]
          %v2098 = vld [vmem:[#allocation13 + $0x1798] sm:$0xff]
          %v2099 = vld [vmem:[#allocation13 + $0x17a0] sm:$0xff]
          %v2100 = vld [vmem:[#allocation13 + $0x17a8] sm:$0xff]
          %v2101 = vld [vmem:[#allocation13 + $0x17b0] sm:$0xff]
          %v2102 = vld [vmem:[#allocation13 + $0x17b8] sm:$0xff]
          %v2103 = vld [vmem:[#allocation13 + $0x17c0] sm:$0xff]
          %v2104 = vld [vmem:[#allocation13 + $0x17c8] sm:$0xff]
          %v2105 = vld [vmem:[#allocation13 + $0x17d0] sm:$0xff]
          %v2106 = vld [vmem:[#allocation13 + $0x17d8] sm:$0xff]
          %v2107 = vld [vmem:[#allocation13 + $0x17e0] sm:$0xff]
          %v2108 = vld [vmem:[#allocation13 + $0x17e8] sm:$0xff]
          %v2109 = vld [vmem:[#allocation13 + $0x17f0] sm:$0xff]
          %v2110 = vld [vmem:[#allocation13 + $0x17f8] sm:$0xff]
          %v2111 = vld [vmem:[#allocation14] sm:$0xff]
          %v2113 = vlaneseq
          %v2114 = vshrl.u32 %v2113, 7
          %v2115 = vsub.s32 0, %v2114
          %v2116 = vrot.slane %v2111, %v2115
          %v2117 = vlaneseq
          %v2118 = vshrl.u32 %v2117, 7
          %v2119 = vsub.s32 1, %v2118
          %v2120 = vrot.slane %v2111, %v2119
          %v2121 = vlaneseq
          %v2122 = vshrl.u32 %v2121, 7
          %v2123 = vsub.s32 2, %v2122
          %v2124 = vrot.slane %v2111, %v2123
          %v2125 = vlaneseq
          %v2126 = vshrl.u32 %v2125, 7
          %v2127 = vsub.s32 3, %v2126
          %v2128 = vrot.slane %v2111, %v2127
          %v2129 = vlaneseq
          %v2130 = vshrl.u32 %v2129, 7
          %v2131 = vsub.s32 4, %v2130
          %v2132 = vrot.slane %v2111, %v2131
          %v2133 = vlaneseq
          %v2134 = vshrl.u32 %v2133, 7
          %v2135 = vsub.s32 5, %v2134
          %v2136 = vrot.slane %v2111, %v2135
          %v2137 = vlaneseq
          %v2138 = vshrl.u32 %v2137, 7
          %v2139 = vsub.s32 6, %v2138
          %v2140 = vrot.slane %v2111, %v2139
          %v2141 = vlaneseq
          %v2142 = vshrl.u32 %v2141, 7
          %v2143 = vsub.s32 7, %v2142
          %v2144 = vrot.slane %v2111, %v2143
          %2153 = vmatprep.subr.mxu0 %v1344
          %2154 = vmatpush1.msra.mxu0 %v1343
          %2155 = vmatprep.subr.mxu0 %v1352
          %2156 = vmatpush1.msra.mxu0 %v1351
          %2157 = vmatprep.subr.mxu0 %v1360
          %2158 = vmatpush1.msra.mxu0 %v1359
          %2159 = vmatprep.subr.mxu0 %v1368
          %2160 = vmatpush1.msra.mxu0 %v1367
          %2161 = vmatprep.subr.mxu0 %v1376
          %2162 = vmatpush1.msra.mxu0 %v1375
          %2163 = vmatprep.subr.mxu0 %v1384
          %2164 = vmatpush1.msra.mxu0 %v1383
          %2165 = vmatprep.subr.mxu0 %v1392
          %2166 = vmatpush1.msra.mxu0 %v1391
          %2167 = vmatprep.subr.mxu0 %v1400
          %2168 = vmatpush1.msra.mxu0 %v1399
          %2169 = vmatprep.subr.mxu0 %v1408
          %2170 = vmatpush1.msra.mxu0 %v1407
          %2171 = vmatprep.subr.mxu0 %v1416
          %2172 = vmatpush1.msra.mxu0 %v1415
          %2173 = vmatprep.subr.mxu0 %v1424
          %2174 = vmatpush1.msra.mxu0 %v1423
          %2175 = vmatprep.subr.mxu0 %v1432
          %2176 = vmatpush1.msra.mxu0 %v1431
          %2177 = vmatprep.subr.mxu0 %v1440
          %2178 = vmatpush1.msra.mxu0 %v1439
          %2179 = vmatprep.subr.mxu0 %v1448
          %2180 = vmatpush1.msra.mxu0 %v1447
          %2181 = vmatprep.subr.mxu0 %v1456
          %2182 = vmatpush1.msra.mxu0 %v1455
          %2183 = vmatprep.subr.mxu0 %v1464
          %2184 = vmatpush1.msra.mxu0 %v1463
          %2185 = vmatprep.subr.mxu0 %v1472
          %2186 = vmatpush1.msra.mxu0 %v1471
          %2187 = vmatprep.subr.mxu0 %v1480
          %2188 = vmatpush1.msra.mxu0 %v1479
          %2189 = vmatprep.subr.mxu0 %v1488
          %2190 = vmatpush1.msra.mxu0 %v1487
          %2191 = vmatprep.subr.mxu0 %v1496
          %2192 = vmatpush1.msra.mxu0 %v1495
          %2193 = vmatprep.subr.mxu0 %v1504
          %2194 = vmatpush1.msra.mxu0 %v1503
          %2195 = vmatprep.subr.mxu0 %v1512
          %2196 = vmatpush1.msra.mxu0 %v1511
          %2197 = vmatprep.subr.mxu0 %v1520
          %2198 = vmatpush1.msra.mxu0 %v1519
          %2199 = vmatprep.subr.mxu0 %v1528
          %2200 = vmatpush1.msra.mxu0 %v1527
          %2201 = vmatprep.subr.mxu0 %v1536
          %2202 = vmatpush1.msra.mxu0 %v1535
          %2203 = vmatprep.subr.mxu0 %v1544
          %2204 = vmatpush1.msra.mxu0 %v1543
          %2205 = vmatprep.subr.mxu0 %v1552
          %2206 = vmatpush1.msra.mxu0 %v1551
          %2207 = vmatprep.subr.mxu0 %v1560
          %2208 = vmatpush1.msra.mxu0 %v1559
          %2209 = vmatprep.subr.mxu0 %v1568
          %2210 = vmatpush1.msra.mxu0 %v1567
          %2211 = vmatprep.subr.mxu0 %v1576
          %2212 = vmatpush1.msra.mxu0 %v1575
          %2213 = vmatprep.subr.mxu0 %v1584
          %2214 = vmatpush1.msra.mxu0 %v1583
          %2215 = vmatprep.subr.mxu0 %v1592
          %2216 = vmatpush1.msra.mxu0 %v1591
          %2217 = vmatprep.mubr.f32.mxu0 %v1338
          %2218 = vmatmul.mubr.f32.gmra.mrb[0].mxu0 %v1337
          %v2219 = vpop.f32.mrb[0].mxu0
          %v2220 = vadd.f32 %v2116, %v2219
          %v2221 = vpop.f32.mrb[0].mxu0
          %v2222 = vadd.f32 %v2120, %v2221
          %2223 = vdwg.mxu0
          %2224 = vmatprep.subr.mxu0 %v1600
          %2225 = vmatpush1.msra.mxu0 %v1599
          %2226 = vmatprep.subr.mxu0 %v1608
          %2227 = vmatpush1.msra.mxu0 %v1607
          %2228 = vmatprep.subr.mxu0 %v1616
          %2229 = vmatpush1.msra.mxu0 %v1615
          %2230 = vmatprep.subr.mxu0 %v1624
          %2231 = vmatpush1.msra.mxu0 %v1623
          %2232 = vmatprep.subr.mxu0 %v1632
          %2233 = vmatpush1.msra.mxu0 %v1631
          %2234 = vmatprep.subr.mxu0 %v1640
          %2235 = vmatpush1.msra.mxu0 %v1639
          %2236 = vmatprep.subr.mxu0 %v1648
          %2237 = vmatpush1.msra.mxu0 %v1647
          %2238 = vmatprep.subr.mxu0 %v1656
          %2239 = vmatpush1.msra.mxu0 %v1655
          %2240 = vmatprep.subr.mxu0 %v1664
          %2241 = vmatpush1.msra.mxu0 %v1663
          %2242 = vmatprep.subr.mxu0 %v1672
          %2243 = vmatpush1.msra.mxu0 %v1671
          %2244 = vmatprep.subr.mxu0 %v1680
          %2245 = vmatpush1.msra.mxu0 %v1679
          %2246 = vmatprep.subr.mxu0 %v1688
          %2247 = vmatpush1.msra.mxu0 %v1687
          %2248 = vmatprep.subr.mxu0 %v1696
          %2249 = vmatpush1.msra.mxu0 %v1695
          %2250 = vmatprep.subr.mxu0 %v1704
          %2251 = vmatpush1.msra.mxu0 %v1703
          %2252 = vmatprep.subr.mxu0 %v1712
          %2253 = vmatpush1.msra.mxu0 %v1711
          %2254 = vmatprep.subr.mxu0 %v1720
          %2255 = vmatpush1.msra.mxu0 %v1719
          %2256 = vmatprep.subr.mxu0 %v1728
          %2257 = vmatpush1.msra.mxu0 %v1727
          %2258 = vmatprep.subr.mxu0 %v1736
          %2259 = vmatpush1.msra.mxu0 %v1735
          %2260 = vmatprep.subr.mxu0 %v1744
          %2261 = vmatpush1.msra.mxu0 %v1743
          %2262 = vmatprep.subr.mxu0 %v1752
          %2263 = vmatpush1.msra.mxu0 %v1751
          %2264 = vmatprep.subr.mxu0 %v1760
          %2265 = vmatpush1.msra.mxu0 %v1759
          %2266 = vmatprep.subr.mxu0 %v1768
          %2267 = vmatpush1.msra.mxu0 %v1767
          %2268 = vmatprep.subr.mxu0 %v1776
          %2269 = vmatpush1.msra.mxu0 %v1775
          %2270 = vmatprep.subr.mxu0 %v1784
          %2271 = vmatpush1.msra.mxu0 %v1783
          %2272 = vmatprep.subr.mxu0 %v1792
          %2273 = vmatpush1.msra.mxu0 %v1791
          %2274 = vmatprep.subr.mxu0 %v1800
          %2275 = vmatpush1.msra.mxu0 %v1799
          %2276 = vmatprep.subr.mxu0 %v1808
          %2277 = vmatpush1.msra.mxu0 %v1807
          %2278 = vmatprep.subr.mxu0 %v1816
          %2279 = vmatpush1.msra.mxu0 %v1815
          %2280 = vmatprep.subr.mxu0 %v1824
          %2281 = vmatpush1.msra.mxu0 %v1823
          %2282 = vmatprep.subr.mxu0 %v1832
          %2283 = vmatpush1.msra.mxu0 %v1831
          %2284 = vmatprep.subr.mxu0 %v1840
          %2285 = vmatpush1.msra.mxu0 %v1839
          %2286 = vmatprep.subr.mxu0 %v1848
          %2287 = vmatpush1.msra.mxu0 %v1847
          %2288 = vmatprep.mubr.f32.mxu0 %v1340
          %2289 = vmatmul.mubr.f32.gmra.mrb[0].mxu0 %v1339
          %v2290 = vpop.f32.mrb[0].mxu0
          %v2291 = vadd.f32 %v2220, %v2290
          %v2292 = vpop.f32.mrb[0].mxu0
          %v2293 = vadd.f32 %v2222, %v2292
          %2294 = vdwg.mxu0
          %2295 = vmatprep.subr.mxu0 %v1856
          %2296 = vmatpush1.msra.mxu0 %v1855
          %2297 = vmatprep.subr.mxu0 %v1864
          %2298 = vmatpush1.msra.mxu0 %v1863
          %2299 = vmatprep.subr.mxu0 %v1872
          %2300 = vmatpush1.msra.mxu0 %v1871
          %2301 = vmatprep.subr.mxu0 %v1880
          %2302 = vmatpush1.msra.mxu0 %v1879
          %2303 = vmatprep.subr.mxu0 %v1888
          %2304 = vmatpush1.msra.mxu0 %v1887
          %2305 = vmatprep.subr.mxu0 %v1896
          %2306 = vmatpush1.msra.mxu0 %v1895
          %2307 = vmatprep.subr.mxu0 %v1904
          %2308 = vmatpush1.msra.mxu0 %v1903
          %2309 = vmatprep.subr.mxu0 %v1912
          %2310 = vmatpush1.msra.mxu0 %v1911
          %2311 = vmatprep.subr.mxu0 %v1920
          %2312 = vmatpush1.msra.mxu0 %v1919
          %2313 = vmatprep.subr.mxu0 %v1928
          %2314 = vmatpush1.msra.mxu0 %v1927
          %2315 = vmatprep.subr.mxu0 %v1936
          %2316 = vmatpush1.msra.mxu0 %v1935
          %2317 = vmatprep.subr.mxu0 %v1944
          %2318 = vmatpush1.msra.mxu0 %v1943
          %2319 = vmatprep.subr.mxu0 %v1952
          %2320 = vmatpush1.msra.mxu0 %v1951
          %2321 = vmatprep.subr.mxu0 %v1960
          %2322 = vmatpush1.msra.mxu0 %v1959
          %2323 = vmatprep.subr.mxu0 %v1968
          %2324 = vmatpush1.msra.mxu0 %v1967
          %2325 = vmatprep.subr.mxu0 %v1976
          %2326 = vmatpush1.msra.mxu0 %v1975
          %2327 = vmatprep.subr.mxu0 %v1984
          %2328 = vmatpush1.msra.mxu0 %v1983
          %2329 = vmatprep.subr.mxu0 %v1992
          %2330 = vmatpush1.msra.mxu0 %v1991
          %2331 = vmatprep.subr.mxu0 %v2000
          %2332 = vmatpush1.msra.mxu0 %v1999
          %2333 = vmatprep.subr.mxu0 %v2008
          %2334 = vmatpush1.msra.mxu0 %v2007
          %2335 = vmatprep.subr.mxu0 %v2016
          %2336 = vmatpush1.msra.mxu0 %v2015
          %2337 = vmatprep.subr.mxu0 %v2024
          %2338 = vmatpush1.msra.mxu0 %v2023
          %2339 = vmatprep.subr.mxu0 %v2032
          %2340 = vmatpush1.msra.mxu0 %v2031
          %2341 = vmatprep.subr.mxu0 %v2040
          %2342 = vmatpush1.msra.mxu0 %v2039
          %2343 = vmatprep.subr.mxu0 %v2048
          %2344 = vmatpush1.msra.mxu0 %v2047
          %2345 = vmatprep.subr.mxu0 %v2056
          %2346 = vmatpush1.msra.mxu0 %v2055
          %2347 = vmatprep.subr.mxu0 %v2064
          %2348 = vmatpush1.msra.mxu0 %v2063
          %2349 = vmatprep.subr.mxu0 %v2072
          %2350 = vmatpush1.msra.mxu0 %v2071
          %2351 = vmatprep.subr.mxu0 %v2080
          %2352 = vmatpush1.msra.mxu0 %v2079
          %2353 = vmatprep.subr.mxu0 %v2088
          %2354 = vmatpush1.msra.mxu0 %v2087
          %2355 = vmatprep.subr.mxu0 %v2096
          %2356 = vmatpush1.msra.mxu0 %v2095
          %2357 = vmatprep.subr.mxu0 %v2104
          %2358 = vmatpush1.msra.mxu0 %v2103
          %2359 = vmatprep.mubr.f32.mxu0 %v1342
          %2360 = vmatmul.mubr.f32.gmra.mrb[0].mxu0 %v1341
          %v2361 = vpop.f32.mrb[0].mxu0
          %v2362 = vadd.f32 %v2291, %v2361
          %v2363 = vpop.f32.mrb[0].mxu0
          %v2364 = vadd.f32 %v2293, %v2363
          %2365 = vdwg.mxu0
          %2366 = vmatprep.subr.mxu0 %v1346
          %2367 = vmatpush1.msra.mxu0 %v1345
          %2368 = vmatprep.subr.mxu0 %v1354
          %2369 = vmatpush1.msra.mxu0 %v1353
          %2370 = vmatprep.subr.mxu0 %v1362
          %2371 = vmatpush1.msra.mxu0 %v1361
          %2372 = vmatprep.subr.mxu0 %v1370
          %2373 = vmatpush1.msra.mxu0 %v1369
          %2374 = vmatprep.subr.mxu0 %v1378
          %2375 = vmatpush1.msra.mxu0 %v1377
          %2376 = vmatprep.subr.mxu0 %v1386
          %2377 = vmatpush1.msra.mxu0 %v1385
          %2378 = vmatprep.subr.mxu0 %v1394
          %2379 = vmatpush1.msra.mxu0 %v1393
          %2380 = vmatprep.subr.mxu0 %v1402
          %2381 = vmatpush1.msra.mxu0 %v1401
          %2382 = vmatprep.subr.mxu0 %v1410
          %2383 = vmatpush1.msra.mxu0 %v1409
          %2384 = vmatprep.subr.mxu0 %v1418
          %2385 = vmatpush1.msra.mxu0 %v1417
          %2386 = vmatprep.subr.mxu0 %v1426
          %2387 = vmatpush1.msra.mxu0 %v1425
          %2388 = vmatprep.subr.mxu0 %v1434
          %2389 = vmatpush1.msra.mxu0 %v1433
          %2390 = vmatprep.subr.mxu0 %v1442
          %2391 = vmatpush1.msra.mxu0 %v1441
          %2392 = vmatprep.subr.mxu0 %v1450
          %2393 = vmatpush1.msra.mxu0 %v1449
          %2394 = vmatprep.subr.mxu0 %v1458
          %2395 = vmatpush1.msra.mxu0 %v1457
          %2396 = vmatprep.subr.mxu0 %v1466
          %2397 = vmatpush1.msra.mxu0 %v1465
          %2398 = vmatprep.subr.mxu0 %v1474
          %2399 = vmatpush1.msra.mxu0 %v1473
          %2400 = vmatprep.subr.mxu0 %v1482
          %2401 = vmatpush1.msra.mxu0 %v1481
          %2402 = vmatprep.subr.mxu0 %v1490
          %2403 = vmatpush1.msra.mxu0 %v1489
          %2404 = vmatprep.subr.mxu0 %v1498
          %2405 = vmatpush1.msra.mxu0 %v1497
          %2406 = vmatprep.subr.mxu0 %v1506
          %2407 = vmatpush1.msra.mxu0 %v1505
          %2408 = vmatprep.subr.mxu0 %v1514
          %2409 = vmatpush1.msra.mxu0 %v1513
          %2410 = vmatprep.subr.mxu0 %v1522
          %2411 = vmatpush1.msra.mxu0 %v1521
          %2412 = vmatprep.subr.mxu0 %v1530
          %2413 = vmatpush1.msra.mxu0 %v1529
          %2414 = vmatprep.subr.mxu0 %v1538
          %2415 = vmatpush1.msra.mxu0 %v1537
          %2416 = vmatprep.subr.mxu0 %v1546
          %2417 = vmatpush1.msra.mxu0 %v1545
          %2418 = vmatprep.subr.mxu0 %v1554
          %2419 = vmatpush1.msra.mxu0 %v1553
          %2420 = vmatprep.subr.mxu0 %v1562
          %2421 = vmatpush1.msra.mxu0 %v1561
          %2422 = vmatprep.subr.mxu0 %v1570
          %2423 = vmatpush1.msra.mxu0 %v1569
          %2424 = vmatprep.subr.mxu0 %v1578
          %2425 = vmatpush1.msra.mxu0 %v1577
          %2426 = vmatprep.subr.mxu0 %v1586
          %2427 = vmatpush1.msra.mxu0 %v1585
          %2428 = vmatprep.subr.mxu0 %v1594
          %2429 = vmatpush1.msra.mxu0 %v1593
          %2430 = vmatprep.mubr.f32.mxu0 %v1338
          %2431 = vmatmul.mubr.f32.gmra.mrb[0].mxu0 %v1337
          %v2432 = vpop.f32.mrb[0].mxu0
          %v2433 = vadd.f32 %v2124, %v2432
          %v2434 = vpop.f32.mrb[0].mxu0
          %v2435 = vadd.f32 %v2128, %v2434
          %2436 = vdwg.mxu0
          %2437 = vmatprep.subr.mxu0 %v1602
          %2438 = vmatpush1.msra.mxu0 %v1601
          %2439 = vmatprep.subr.mxu0 %v1610
          %2440 = vmatpush1.msra.mxu0 %v1609
          %2441 = vmatprep.subr.mxu0 %v1618
          %2442 = vmatpush1.msra.mxu0 %v1617
          %2443 = vmatprep.subr.mxu0 %v1626
          %2444 = vmatpush1.msra.mxu0 %v1625
          %2445 = vmatprep.subr.mxu0 %v1634
          %2446 = vmatpush1.msra.mxu0 %v1633
          %2447 = vmatprep.subr.mxu0 %v1642
          %2448 = vmatpush1.msra.mxu0 %v1641
          %2449 = vmatprep.subr.mxu0 %v1650
          %2450 = vmatpush1.msra.mxu0 %v1649
          %2451 = vmatprep.subr.mxu0 %v1658
          %2452 = vmatpush1.msra.mxu0 %v1657
          %2453 = vmatprep.subr.mxu0 %v1666
          %2454 = vmatpush1.msra.mxu0 %v1665
          %2455 = vmatprep.subr.mxu0 %v1674
          %2456 = vmatpush1.msra.mxu0 %v1673
          %2457 = vmatprep.subr.mxu0 %v1682
          %2458 = vmatpush1.msra.mxu0 %v1681
          %2459 = vmatprep.subr.mxu0 %v1690
          %2460 = vmatpush1.msra.mxu0 %v1689
          %2461 = vmatprep.subr.mxu0 %v1698
          %2462 = vmatpush1.msra.mxu0 %v1697
          %2463 = vmatprep.subr.mxu0 %v1706
          %2464 = vmatpush1.msra.mxu0 %v1705
          %2465 = vmatprep.subr.mxu0 %v1714
          %2466 = vmatpush1.msra.mxu0 %v1713
          %2467 = vmatprep.subr.mxu0 %v1722
          %2468 = vmatpush1.msra.mxu0 %v1721
          %2469 = vmatprep.subr.mxu0 %v1730
          %2470 = vmatpush1.msra.mxu0 %v1729
          %2471 = vmatprep.subr.mxu0 %v1738
          %2472 = vmatpush1.msra.mxu0 %v1737
          %2473 = vmatprep.subr.mxu0 %v1746
          %2474 = vmatpush1.msra.mxu0 %v1745
          %2475 = vmatprep.subr.mxu0 %v1754
          %2476 = vmatpush1.msra.mxu0 %v1753
          %2477 = vmatprep.subr.mxu0 %v1762
          %2478 = vmatpush1.msra.mxu0 %v1761
          %2479 = vmatprep.subr.mxu0 %v1770
          %2480 = vmatpush1.msra.mxu0 %v1769
          %2481 = vmatprep.subr.mxu0 %v1778
          %2482 = vmatpush1.msra.mxu0 %v1777
          %2483 = vmatprep.subr.mxu0 %v1786
          %2484 = vmatpush1.msra.mxu0 %v1785
          %2485 = vmatprep.subr.mxu0 %v1794
          %2486 = vmatpush1.msra.mxu0 %v1793
          %2487 = vmatprep.subr.mxu0 %v1802
          %2488 = vmatpush1.msra.mxu0 %v1801
          %2489 = vmatprep.subr.mxu0 %v1810
          %2490 = vmatpush1.msra.mxu0 %v1809
          %2491 = vmatprep.subr.mxu0 %v1818
          %2492 = vmatpush1.msra.mxu0 %v1817
          %2493 = vmatprep.subr.mxu0 %v1826
          %2494 = vmatpush1.msra.mxu0 %v1825
          %2495 = vmatprep.subr.mxu0 %v1834
          %2496 = vmatpush1.msra.mxu0 %v1833
          %2497 = vmatprep.subr.mxu0 %v1842
          %2498 = vmatpush1.msra.mxu0 %v1841
          %2499 = vmatprep.subr.mxu0 %v1850
          %2500 = vmatpush1.msra.mxu0 %v1849
          %2501 = vmatprep.mubr.f32.mxu0 %v1340
          %2502 = vmatmul.mubr.f32.gmra.mrb[0].mxu0 %v1339
          %v2503 = vpop.f32.mrb[0].mxu0
          %v2504 = vadd.f32 %v2433, %v2503
          %v2505 = vpop.f32.mrb[0].mxu0
          %v2506 = vadd.f32 %v2435, %v2505
          %2507 = vdwg.mxu0
          %2508 = vmatprep.subr.mxu0 %v1858
          %2509 = vmatpush1.msra.mxu0 %v1857
          %2510 = vmatprep.subr.mxu0 %v1866
          %2511 = vmatpush1.msra.mxu0 %v1865
          %2512 = vmatprep.subr.mxu0 %v1874
          %2513 = vmatpush1.msra.mxu0 %v1873
          %2514 = vmatprep.subr.mxu0 %v1882
          %2515 = vmatpush1.msra.mxu0 %v1881
          %2516 = vmatprep.subr.mxu0 %v1890
          %2517 = vmatpush1.msra.mxu0 %v1889
          %2518 = vmatprep.subr.mxu0 %v1898
          %2519 = vmatpush1.msra.mxu0 %v1897
          %2520 = vmatprep.subr.mxu0 %v1906
          %2521 = vmatpush1.msra.mxu0 %v1905
          %2522 = vmatprep.subr.mxu0 %v1914
          %2523 = vmatpush1.msra.mxu0 %v1913
          %2524 = vmatprep.subr.mxu0 %v1922
          %2525 = vmatpush1.msra.mxu0 %v1921
          %2526 = vmatprep.subr.mxu0 %v1930
          %2527 = vmatpush1.msra.mxu0 %v1929
          %2528 = vmatprep.subr.mxu0 %v1938
          %2529 = vmatpush1.msra.mxu0 %v1937
          %2530 = vmatprep.subr.mxu0 %v1946
          %2531 = vmatpush1.msra.mxu0 %v1945
          %2532 = vmatprep.subr.mxu0 %v1954
          %2533 = vmatpush1.msra.mxu0 %v1953
          %2534 = vmatprep.subr.mxu0 %v1962
          %2535 = vmatpush1.msra.mxu0 %v1961
          %2536 = vmatprep.subr.mxu0 %v1970
          %2537 = vmatpush1.msra.mxu0 %v1969
          %2538 = vmatprep.subr.mxu0 %v1978
          %2539 = vmatpush1.msra.mxu0 %v1977
          %2540 = vmatprep.subr.mxu0 %v1986
          %2541 = vmatpush1.msra.mxu0 %v1985
          %2542 = vmatprep.subr.mxu0 %v1994
          %2543 = vmatpush1.msra.mxu0 %v1993
          %2544 = vmatprep.subr.mxu0 %v2002
          %2545 = vmatpush1.msra.mxu0 %v2001
          %2546 = vmatprep.subr.mxu0 %v2010
          %2547 = vmatpush1.msra.mxu0 %v2009
          %2548 = vmatprep.subr.mxu0 %v2018
          %2549 = vmatpush1.msra.mxu0 %v2017
          %2550 = vmatprep.subr.mxu0 %v2026
          %2551 = vmatpush1.msra.mxu0 %v2025
          %2552 = vmatprep.subr.mxu0 %v2034
          %2553 = vmatpush1.msra.mxu0 %v2033
          %2554 = vmatprep.subr.mxu0 %v2042
          %2555 = vmatpush1.msra.mxu0 %v2041
          %2556 = vmatprep.subr.mxu0 %v2050
          %2557 = vmatpush1.msra.mxu0 %v2049
          %2558 = vmatprep.subr.mxu0 %v2058
          %2559 = vmatpush1.msra.mxu0 %v2057
          %2560 = vmatprep.subr.mxu0 %v2066
          %2561 = vmatpush1.msra.mxu0 %v2065
          %2562 = vmatprep.subr.mxu0 %v2074
          %2563 = vmatpush1.msra.mxu0 %v2073
          %2564 = vmatprep.subr.mxu0 %v2082
          %2565 = vmatpush1.msra.mxu0 %v2081
          %2566 = vmatprep.subr.mxu0 %v2090
          %2567 = vmatpush1.msra.mxu0 %v2089
          %2568 = vmatprep.subr.mxu0 %v2098
          %2569 = vmatpush1.msra.mxu0 %v2097
          %2570 = vmatprep.subr.mxu0 %v2106
          %2571 = vmatpush1.msra.mxu0 %v2105
          %2572 = vmatprep.mubr.f32.mxu0 %v1342
          %2573 = vmatmul.mubr.f32.gmra.mrb[0].mxu0 %v1341
          %v2574 = vpop.f32.mrb[0].mxu0
          %v2575 = vadd.f32 %v2504, %v2574
          %v2576 = vpop.f32.mrb[0].mxu0
          %v2577 = vadd.f32 %v2506, %v2576
          %2578 = vdwg.mxu0
          %2579 = vmatprep.subr.mxu0 %v1348
          %2580 = vmatpush1.msra.mxu0 %v1347
          %2581 = vmatprep.subr.mxu0 %v1356
          %2582 = vmatpush1.msra.mxu0 %v1355
          %2583 = vmatprep.subr.mxu0 %v1364
          %2584 = vmatpush1.msra.mxu0 %v1363
          %2585 = vmatprep.subr.mxu0 %v1372
          %2586 = vmatpush1.msra.mxu0 %v1371
          %2587 = vmatprep.subr.mxu0 %v1380
          %2588 = vmatpush1.msra.mxu0 %v1379
          %2589 = vmatprep.subr.mxu0 %v1388
          %2590 = vmatpush1.msra.mxu0 %v1387
          %2591 = vmatprep.subr.mxu0 %v1396
          %2592 = vmatpush1.msra.mxu0 %v1395
          %2593 = vmatprep.subr.mxu0 %v1404
          %2594 = vmatpush1.msra.mxu0 %v1403
          %2595 = vmatprep.subr.mxu0 %v1412
          %2596 = vmatpush1.msra.mxu0 %v1411
          %2597 = vmatprep.subr.mxu0 %v1420
          %2598 = vmatpush1.msra.mxu0 %v1419
          %2599 = vmatprep.subr.mxu0 %v1428
          %2600 = vmatpush1.msra.mxu0 %v1427
          %2601 = vmatprep.subr.mxu0 %v1436
          %2602 = vmatpush1.msra.mxu0 %v1435
          %2603 = vmatprep.subr.mxu0 %v1444
          %2604 = vmatpush1.msra.mxu0 %v1443
          %2605 = vmatprep.subr.mxu0 %v1452
          %2606 = vmatpush1.msra.mxu0 %v1451
          %2607 = vmatprep.subr.mxu0 %v1460
          %2608 = vmatpush1.msra.mxu0 %v1459
          %2609 = vmatprep.subr.mxu0 %v1468
          %2610 = vmatpush1.msra.mxu0 %v1467
          %2611 = vmatprep.subr.mxu0 %v1476
          %2612 = vmatpush1.msra.mxu0 %v1475
          %2613 = vmatprep.subr.mxu0 %v1484
          %2614 = vmatpush1.msra.mxu0 %v1483
          %2615 = vmatprep.subr.mxu0 %v1492
          %2616 = vmatpush1.msra.mxu0 %v1491
          %2617 = vmatprep.subr.mxu0 %v1500
          %2618 = vmatpush1.msra.mxu0 %v1499
          %2619 = vmatprep.subr.mxu0 %v1508
          %2620 = vmatpush1.msra.mxu0 %v1507
          %2621 = vmatprep.subr.mxu0 %v1516
          %2622 = vmatpush1.msra.mxu0 %v1515
          %2623 = vmatprep.subr.mxu0 %v1524
          %2624 = vmatpush1.msra.mxu0 %v1523
          %2625 = vmatprep.subr.mxu0 %v1532
          %2626 = vmatpush1.msra.mxu0 %v1531
          %2627 = vmatprep.subr.mxu0 %v1540
          %2628 = vmatpush1.msra.mxu0 %v1539
          %2629 = vmatprep.subr.mxu0 %v1548
          %2630 = vmatpush1.msra.mxu0 %v1547
          %2631 = vmatprep.subr.mxu0 %v1556
          %2632 = vmatpush1.msra.mxu0 %v1555
          %2633 = vmatprep.subr.mxu0 %v1564
          %2634 = vmatpush1.msra.mxu0 %v1563
          %2635 = vmatprep.subr.mxu0 %v1572
          %2636 = vmatpush1.msra.mxu0 %v1571
          %2637 = vmatprep.subr.mxu0 %v1580
          %2638 = vmatpush1.msra.mxu0 %v1579
          %2639 = vmatprep.subr.mxu0 %v1588
          %2640 = vmatpush1.msra.mxu0 %v1587
          %2641 = vmatprep.subr.mxu0 %v1596
          %2642 = vmatpush1.msra.mxu0 %v1595
          %2643 = vmatprep.mubr.f32.mxu0 %v1338
          %2644 = vmatmul.mubr.f32.gmra.mrb[0].mxu0 %v1337
          %v2645 = vpop.f32.mrb[0].mxu0
          %v2646 = vadd.f32 %v2132, %v2645
          %v2647 = vpop.f32.mrb[0].mxu0
          %v2648 = vadd.f32 %v2136, %v2647
          %2649 = vdwg.mxu0
          %2650 = vmatprep.subr.mxu0 %v1604
          %2651 = vmatpush1.msra.mxu0 %v1603
          %2652 = vmatprep.subr.mxu0 %v1612
          %2653 = vmatpush1.msra.mxu0 %v1611
          %2654 = vmatprep.subr.mxu0 %v1620
          %2655 = vmatpush1.msra.mxu0 %v1619
          %2656 = vmatprep.subr.mxu0 %v1628
          %2657 = vmatpush1.msra.mxu0 %v1627
          %2658 = vmatprep.subr.mxu0 %v1636
          %2659 = vmatpush1.msra.mxu0 %v1635
          %2660 = vmatprep.subr.mxu0 %v1644
          %2661 = vmatpush1.msra.mxu0 %v1643
          %2662 = vmatprep.subr.mxu0 %v1652
          %2663 = vmatpush1.msra.mxu0 %v1651
          %2664 = vmatprep.subr.mxu0 %v1660
          %2665 = vmatpush1.msra.mxu0 %v1659
          %2666 = vmatprep.subr.mxu0 %v1668
          %2667 = vmatpush1.msra.mxu0 %v1667
          %2668 = vmatprep.subr.mxu0 %v1676
          %2669 = vmatpush1.msra.mxu0 %v1675
          %2670 = vmatprep.subr.mxu0 %v1684
          %2671 = vmatpush1.msra.mxu0 %v1683
          %2672 = vmatprep.subr.mxu0 %v1692
          %2673 = vmatpush1.msra.mxu0 %v1691
          %2674 = vmatprep.subr.mxu0 %v1700
          %2675 = vmatpush1.msra.mxu0 %v1699
          %2676 = vmatprep.subr.mxu0 %v1708
          %2677 = vmatpush1.msra.mxu0 %v1707
          %2678 = vmatprep.subr.mxu0 %v1716
          %2679 = vmatpush1.msra.mxu0 %v1715
          %2680 = vmatprep.subr.mxu0 %v1724
          %2681 = vmatpush1.msra.mxu0 %v1723
          %2682 = vmatprep.subr.mxu0 %v1732
          %2683 = vmatpush1.msra.mxu0 %v1731
          %2684 = vmatprep.subr.mxu0 %v1740
          %2685 = vmatpush1.msra.mxu0 %v1739
          %2686 = vmatprep.subr.mxu0 %v1748
          %2687 = vmatpush1.msra.mxu0 %v1747
          %2688 = vmatprep.subr.mxu0 %v1756
          %2689 = vmatpush1.msra.mxu0 %v1755
          %2690 = vmatprep.subr.mxu0 %v1764
          %2691 = vmatpush1.msra.mxu0 %v1763
          %2692 = vmatprep.subr.mxu0 %v1772
          %2693 = vmatpush1.msra.mxu0 %v1771
          %2694 = vmatprep.subr.mxu0 %v1780
          %2695 = vmatpush1.msra.mxu0 %v1779
          %2696 = vmatprep.subr.mxu0 %v1788
          %2697 = vmatpush1.msra.mxu0 %v1787
          %2698 = vmatprep.subr.mxu0 %v1796
          %2699 = vmatpush1.msra.mxu0 %v1795
          %2700 = vmatprep.subr.mxu0 %v1804
          %2701 = vmatpush1.msra.mxu0 %v1803
          %2702 = vmatprep.subr.mxu0 %v1812
          %2703 = vmatpush1.msra.mxu0 %v1811
          %2704 = vmatprep.subr.mxu0 %v1820
          %2705 = vmatpush1.msra.mxu0 %v1819
          %2706 = vmatprep.subr.mxu0 %v1828
          %2707 = vmatpush1.msra.mxu0 %v1827
          %2708 = vmatprep.subr.mxu0 %v1836
          %2709 = vmatpush1.msra.mxu0 %v1835
          %2710 = vmatprep.subr.mxu0 %v1844
          %2711 = vmatpush1.msra.mxu0 %v1843
          %2712 = vmatprep.subr.mxu0 %v1852
          %2713 = vmatpush1.msra.mxu0 %v1851
          %2714 = vmatprep.mubr.f32.mxu0 %v1340
          %2715 = vmatmul.mubr.f32.gmra.mrb[0].mxu0 %v1339
          %v2716 = vpop.f32.mrb[0].mxu0
          %v2717 = vadd.f32 %v2646, %v2716
          %v2718 = vpop.f32.mrb[0].mxu0
          %v2719 = vadd.f32 %v2648, %v2718
          %2720 = vdwg.mxu0
          %2721 = vmatprep.subr.mxu0 %v1860
          %2722 = vmatpush1.msra.mxu0 %v1859
          %2723 = vmatprep.subr.mxu0 %v1868
          %2724 = vmatpush1.msra.mxu0 %v1867
          %2725 = vmatprep.subr.mxu0 %v1876
          %2726 = vmatpush1.msra.mxu0 %v1875
          %2727 = vmatprep.subr.mxu0 %v1884
          %2728 = vmatpush1.msra.mxu0 %v1883
          %2729 = vmatprep.subr.mxu0 %v1892
          %2730 = vmatpush1.msra.mxu0 %v1891
          %2731 = vmatprep.subr.mxu0 %v1900
          %2732 = vmatpush1.msra.mxu0 %v1899
          %2733 = vmatprep.subr.mxu0 %v1908
          %2734 = vmatpush1.msra.mxu0 %v1907
          %2735 = vmatprep.subr.mxu0 %v1916
          %2736 = vmatpush1.msra.mxu0 %v1915
          %2737 = vmatprep.subr.mxu0 %v1924
          %2738 = vmatpush1.msra.mxu0 %v1923
          %2739 = vmatprep.subr.mxu0 %v1932
          %2740 = vmatpush1.msra.mxu0 %v1931
          %2741 = vmatprep.subr.mxu0 %v1940
          %2742 = vmatpush1.msra.mxu0 %v1939
          %2743 = vmatprep.subr.mxu0 %v1948
          %2744 = vmatpush1.msra.mxu0 %v1947
          %2745 = vmatprep.subr.mxu0 %v1956
          %2746 = vmatpush1.msra.mxu0 %v1955
          %2747 = vmatprep.subr.mxu0 %v1964
          %2748 = vmatpush1.msra.mxu0 %v1963
          %2749 = vmatprep.subr.mxu0 %v1972
          %2750 = vmatpush1.msra.mxu0 %v1971
          %2751 = vmatprep.subr.mxu0 %v1980
          %2752 = vmatpush1.msra.mxu0 %v1979
          %2753 = vmatprep.subr.mxu0 %v1988
          %2754 = vmatpush1.msra.mxu0 %v1987
          %2755 = vmatprep.subr.mxu0 %v1996
          %2756 = vmatpush1.msra.mxu0 %v1995
          %2757 = vmatprep.subr.mxu0 %v2004
          %2758 = vmatpush1.msra.mxu0 %v2003
          %2759 = vmatprep.subr.mxu0 %v2012
          %2760 = vmatpush1.msra.mxu0 %v2011
          %2761 = vmatprep.subr.mxu0 %v2020
          %2762 = vmatpush1.msra.mxu0 %v2019
          %2763 = vmatprep.subr.mxu0 %v2028
          %2764 = vmatpush1.msra.mxu0 %v2027
          %2765 = vmatprep.subr.mxu0 %v2036
          %2766 = vmatpush1.msra.mxu0 %v2035
          %2767 = vmatprep.subr.mxu0 %v2044
          %2768 = vmatpush1.msra.mxu0 %v2043
          %2769 = vmatprep.subr.mxu0 %v2052
          %2770 = vmatpush1.msra.mxu0 %v2051
          %2771 = vmatprep.subr.mxu0 %v2060
          %2772 = vmatpush1.msra.mxu0 %v2059
          %2773 = vmatprep.subr.mxu0 %v2068
          %2774 = vmatpush1.msra.mxu0 %v2067
          %2775 = vmatprep.subr.mxu0 %v2076
          %2776 = vmatpush1.msra.mxu0 %v2075
          %2777 = vmatprep.subr.mxu0 %v2084
          %2778 = vmatpush1.msra.mxu0 %v2083
          %2779 = vmatprep.subr.mxu0 %v2092
          %2780 = vmatpush1.msra.mxu0 %v2091
          %2781 = vmatprep.subr.mxu0 %v2100
          %2782 = vmatpush1.msra.mxu0 %v2099
          %2783 = vmatprep.subr.mxu0 %v2108
          %2784 = vmatpush1.msra.mxu0 %v2107
          %2785 = vmatprep.mubr.f32.mxu0 %v1342
          %2786 = vmatmul.mubr.f32.gmra.mrb[0].mxu0 %v1341
          %v2787 = vpop.f32.mrb[0].mxu0
          %v2788 = vadd.f32 %v2717, %v2787
          %v2789 = vpop.f32.mrb[0].mxu0
          %v2790 = vadd.f32 %v2719, %v2789
          %2791 = vdwg.mxu0
          %2792 = vmatprep.subr.mxu0 %v1350
          %2793 = vmatpush1.msra.mxu0 %v1349
          %2794 = vmatprep.subr.mxu0 %v1358
          %2795 = vmatpush1.msra.mxu0 %v1357
          %2796 = vmatprep.subr.mxu0 %v1366
          %2797 = vmatpush1.msra.mxu0 %v1365
          %2798 = vmatprep.subr.mxu0 %v1374
          %2799 = vmatpush1.msra.mxu0 %v1373
          %2800 = vmatprep.subr.mxu0 %v1382
          %2801 = vmatpush1.msra.mxu0 %v1381
          %2802 = vmatprep.subr.mxu0 %v1390
          %2803 = vmatpush1.msra.mxu0 %v1389
          %2804 = vmatprep.subr.mxu0 %v1398
          %2805 = vmatpush1.msra.mxu0 %v1397
          %2806 = vmatprep.subr.mxu0 %v1406
          %2807 = vmatpush1.msra.mxu0 %v1405
          %2808 = vmatprep.subr.mxu0 %v1414
          %2809 = vmatpush1.msra.mxu0 %v1413
          %2810 = vmatprep.subr.mxu0 %v1422
          %2811 = vmatpush1.msra.mxu0 %v1421
          %2812 = vmatprep.subr.mxu0 %v1430
          %2813 = vmatpush1.msra.mxu0 %v1429
          %2814 = vmatprep.subr.mxu0 %v1438
          %2815 = vmatpush1.msra.mxu0 %v1437
          %2816 = vmatprep.subr.mxu0 %v1446
          %2817 = vmatpush1.msra.mxu0 %v1445
          %2818 = vmatprep.subr.mxu0 %v1454
          %2819 = vmatpush1.msra.mxu0 %v1453
          %2820 = vmatprep.subr.mxu0 %v1462
          %2821 = vmatpush1.msra.mxu0 %v1461
          %2822 = vmatprep.subr.mxu0 %v1470
          %2823 = vmatpush1.msra.mxu0 %v1469
          %2824 = vmatprep.subr.mxu0 %v1478
          %2825 = vmatpush1.msra.mxu0 %v1477
          %2826 = vmatprep.subr.mxu0 %v1486
          %2827 = vmatpush1.msra.mxu0 %v1485
          %2828 = vmatprep.subr.mxu0 %v1494
          %2829 = vmatpush1.msra.mxu0 %v1493
          %2830 = vmatprep.subr.mxu0 %v1502
          %2831 = vmatpush1.msra.mxu0 %v1501
          %2832 = vmatprep.subr.mxu0 %v1510
          %2833 = vmatpush1.msra.mxu0 %v1509
          %2834 = vmatprep.subr.mxu0 %v1518
          %2835 = vmatpush1.msra.mxu0 %v1517
          %2836 = vmatprep.subr.mxu0 %v1526
          %2837 = vmatpush1.msra.mxu0 %v1525
          %2838 = vmatprep.subr.mxu0 %v1534
          %2839 = vmatpush1.msra.mxu0 %v1533
          %2840 = vmatprep.subr.mxu0 %v1542
          %2841 = vmatpush1.msra.mxu0 %v1541
          %2842 = vmatprep.subr.mxu0 %v1550
          %2843 = vmatpush1.msra.mxu0 %v1549
          %2844 = vmatprep.subr.mxu0 %v1558
          %2845 = vmatpush1.msra.mxu0 %v1557
          %2846 = vmatprep.subr.mxu0 %v1566
          %2847 = vmatpush1.msra.mxu0 %v1565
          %2848 = vmatprep.subr.mxu0 %v1574
          %2849 = vmatpush1.msra.mxu0 %v1573
          %2850 = vmatprep.subr.mxu0 %v1582
          %2851 = vmatpush1.msra.mxu0 %v1581
          %2852 = vmatprep.subr.mxu0 %v1590
          %2853 = vmatpush1.msra.mxu0 %v1589
          %2854 = vmatprep.subr.mxu0 %v1598
          %2855 = vmatpush1.msra.mxu0 %v1597
          %2856 = vmatprep.mubr.f32.mxu0 %v1338
          %2857 = vmatmul.mubr.f32.gmra.mrb[0].mxu0 %v1337
          %v2858 = vpop.f32.mrb[0].mxu0
          %v2859 = vadd.f32 %v2140, %v2858
          %v2860 = vpop.f32.mrb[0].mxu0
          %v2861 = vadd.f32 %v2144, %v2860
          %2862 = vdwg.mxu0
          %2863 = vmatprep.subr.mxu0 %v1606
          %2864 = vmatpush1.msra.mxu0 %v1605
          %2865 = vmatprep.subr.mxu0 %v1614
          %2866 = vmatpush1.msra.mxu0 %v1613
          %2867 = vmatprep.subr.mxu0 %v1622
          %2868 = vmatpush1.msra.mxu0 %v1621
          %2869 = vmatprep.subr.mxu0 %v1630
          %2870 = vmatpush1.msra.mxu0 %v1629
          %2871 = vmatprep.subr.mxu0 %v1638
          %2872 = vmatpush1.msra.mxu0 %v1637
          %2873 = vmatprep.subr.mxu0 %v1646
          %2874 = vmatpush1.msra.mxu0 %v1645
          %2875 = vmatprep.subr.mxu0 %v1654
          %2876 = vmatpush1.msra.mxu0 %v1653
          %2877 = vmatprep.subr.mxu0 %v1662
          %2878 = vmatpush1.msra.mxu0 %v1661
          %2879 = vmatprep.subr.mxu0 %v1670
          %2880 = vmatpush1.msra.mxu0 %v1669
          %2881 = vmatprep.subr.mxu0 %v1678
          %2882 = vmatpush1.msra.mxu0 %v1677
          %2883 = vmatprep.subr.mxu0 %v1686
          %2884 = vmatpush1.msra.mxu0 %v1685
          %2885 = vmatprep.subr.mxu0 %v1694
          %2886 = vmatpush1.msra.mxu0 %v1693
          %2887 = vmatprep.subr.mxu0 %v1702
          %2888 = vmatpush1.msra.mxu0 %v1701
          %2889 = vmatprep.subr.mxu0 %v1710
          %2890 = vmatpush1.msra.mxu0 %v1709
          %2891 = vmatprep.subr.mxu0 %v1718
          %2892 = vmatpush1.msra.mxu0 %v1717
          %2893 = vmatprep.subr.mxu0 %v1726
          %2894 = vmatpush1.msra.mxu0 %v1725
          %2895 = vmatprep.subr.mxu0 %v1734
          %2896 = vmatpush1.msra.mxu0 %v1733
          %2897 = vmatprep.subr.mxu0 %v1742
          %2898 = vmatpush1.msra.mxu0 %v1741
          %2899 = vmatprep.subr.mxu0 %v1750
          %2900 = vmatpush1.msra.mxu0 %v1749
          %2901 = vmatprep.subr.mxu0 %v1758
          %2902 = vmatpush1.msra.mxu0 %v1757
          %2903 = vmatprep.subr.mxu0 %v1766
          %2904 = vmatpush1.msra.mxu0 %v1765
          %2905 = vmatprep.subr.mxu0 %v1774
          %2906 = vmatpush1.msra.mxu0 %v1773
          %2907 = vmatprep.subr.mxu0 %v1782
          %2908 = vmatpush1.msra.mxu0 %v1781
          %2909 = vmatprep.subr.mxu0 %v1790
          %2910 = vmatpush1.msra.mxu0 %v1789
          %2911 = vmatprep.subr.mxu0 %v1798
          %2912 = vmatpush1.msra.mxu0 %v1797
          %2913 = vmatprep.subr.mxu0 %v1806
          %2914 = vmatpush1.msra.mxu0 %v1805
          %2915 = vmatprep.subr.mxu0 %v1814
          %2916 = vmatpush1.msra.mxu0 %v1813
          %2917 = vmatprep.subr.mxu0 %v1822
          %2918 = vmatpush1.msra.mxu0 %v1821
          %2919 = vmatprep.subr.mxu0 %v1830
          %2920 = vmatpush1.msra.mxu0 %v1829
          %2921 = vmatprep.subr.mxu0 %v1838
          %2922 = vmatpush1.msra.mxu0 %v1837
          %2923 = vmatprep.subr.mxu0 %v1846
          %2924 = vmatpush1.msra.mxu0 %v1845
          %2925 = vmatprep.subr.mxu0 %v1854
          %2926 = vmatpush1.msra.mxu0 %v1853
          %2927 = vmatprep.mubr.f32.mxu0 %v1340
          %2928 = vmatmul.mubr.f32.gmra.mrb[0].mxu0 %v1339
          %v2929 = vpop.f32.mrb[0].mxu0
          %v2930 = vadd.f32 %v2859, %v2929
          %v2931 = vpop.f32.mrb[0].mxu0
          %v2932 = vadd.f32 %v2861, %v2931
          %2933 = vdwg.mxu0
          %2934 = vmatprep.subr.mxu0 %v1862
          %2935 = vmatpush1.msra.mxu0 %v1861
          %2936 = vmatprep.subr.mxu0 %v1870
          %2937 = vmatpush1.msra.mxu0 %v1869
          %2938 = vmatprep.subr.mxu0 %v1878
          %2939 = vmatpush1.msra.mxu0 %v1877
          %2940 = vmatprep.subr.mxu0 %v1886
          %2941 = vmatpush1.msra.mxu0 %v1885
          %2942 = vmatprep.subr.mxu0 %v1894
          %2943 = vmatpush1.msra.mxu0 %v1893
          %2944 = vmatprep.subr.mxu0 %v1902
          %2945 = vmatpush1.msra.mxu0 %v1901
          %2946 = vmatprep.subr.mxu0 %v1910
          %2947 = vmatpush1.msra.mxu0 %v1909
          %2948 = vmatprep.subr.mxu0 %v1918
          %2949 = vmatpush1.msra.mxu0 %v1917
          %2950 = vmatprep.subr.mxu0 %v1926
          %2951 = vmatpush1.msra.mxu0 %v1925
          %2952 = vmatprep.subr.mxu0 %v1934
          %2953 = vmatpush1.msra.mxu0 %v1933
          %2954 = vmatprep.subr.mxu0 %v1942
          %2955 = vmatpush1.msra.mxu0 %v1941
          %2956 = vmatprep.subr.mxu0 %v1950
          %2957 = vmatpush1.msra.mxu0 %v1949
          %2958 = vmatprep.subr.mxu0 %v1958
          %2959 = vmatpush1.msra.mxu0 %v1957
          %2960 = vmatprep.subr.mxu0 %v1966
          %2961 = vmatpush1.msra.mxu0 %v1965
          %2962 = vmatprep.subr.mxu0 %v1974
          %2963 = vmatpush1.msra.mxu0 %v1973
          %2964 = vmatprep.subr.mxu0 %v1982
          %2965 = vmatpush1.msra.mxu0 %v1981
          %2966 = vmatprep.subr.mxu0 %v1990
          %2967 = vmatpush1.msra.mxu0 %v1989
          %2968 = vmatprep.subr.mxu0 %v1998
          %2969 = vmatpush1.msra.mxu0 %v1997
          %2970 = vmatprep.subr.mxu0 %v2006
          %2971 = vmatpush1.msra.mxu0 %v2005
          %2972 = vmatprep.subr.mxu0 %v2014
          %2973 = vmatpush1.msra.mxu0 %v2013
          %2974 = vmatprep.subr.mxu0 %v2022
          %2975 = vmatpush1.msra.mxu0 %v2021
          %2976 = vmatprep.subr.mxu0 %v2030
          %2977 = vmatpush1.msra.mxu0 %v2029
          %2978 = vmatprep.subr.mxu0 %v2038
          %2979 = vmatpush1.msra.mxu0 %v2037
          %2980 = vmatprep.subr.mxu0 %v2046
          %2981 = vmatpush1.msra.mxu0 %v2045
          %2982 = vmatprep.subr.mxu0 %v2054
          %2983 = vmatpush1.msra.mxu0 %v2053
          %2984 = vmatprep.subr.mxu0 %v2062
          %2985 = vmatpush1.msra.mxu0 %v2061
          %2986 = vmatprep.subr.mxu0 %v2070
          %2987 = vmatpush1.msra.mxu0 %v2069
          %2988 = vmatprep.subr.mxu0 %v2078
          %2989 = vmatpush1.msra.mxu0 %v2077
          %2990 = vmatprep.subr.mxu0 %v2086
          %2991 = vmatpush1.msra.mxu0 %v2085
          %2992 = vmatprep.subr.mxu0 %v2094
          %2993 = vmatpush1.msra.mxu0 %v2093
          %2994 = vmatprep.subr.mxu0 %v2102
          %2995 = vmatpush1.msra.mxu0 %v2101
          %2996 = vmatprep.subr.mxu0 %v2110
          %2997 = vmatpush1.msra.mxu0 %v2109
          %2998 = vmatprep.mubr.f32.mxu0 %v1342
          %2999 = vmatmul.mubr.f32.gmra.mrb[0].mxu0 %v1341
          %v3000 = vpop.f32.mrb[0].mxu0
          %v3001 = vadd.f32 %v2930, %v3000
          %v3002 = vpop.f32.mrb[0].mxu0
          %v3003 = vadd.f32 %v2932, %v3002
          %3004 = vdwg.mxu0
          %v3005 = vtanh.pop %v2362
          %v3006 = vtanh.pop %v2364
          %v3007 = vtanh.pop %v2575
          %v3008 = vtanh.pop %v2577
          %v3009 = vtanh.pop %v2788
          %v3010 = vtanh.pop %v2790
          %v3011 = vtanh.pop %v3001
          %v3012 = vtanh.pop %v3003
          %v3013 = vld [vmem:[#allocation16] sm:$0xff]
          %v3014 = vld [vmem:[#allocation16 + $0x8] sm:$0xff]
          %v3015 = vld [vmem:[#allocation16 + $0x10] sm:$0xff]
          %v3016 = vld [vmem:[#allocation16 + $0x18] sm:$0xff]
          %v3017 = vld [vmem:[#allocation16 + $0x20] sm:$0xff]
          %v3018 = vld [vmem:[#allocation16 + $0x28] sm:$0xff]
          %v3019 = vld [vmem:[#allocation16 + $0x30] sm:$0xff]
          %v3020 = vld [vmem:[#allocation16 + $0x38] sm:$0xff]
          %v3021 = vld [vmem:[#allocation16 + $0x40] sm:$0xff]
          %v3022 = vld [vmem:[#allocation16 + $0x48] sm:$0xff]
          %v3023 = vld [vmem:[#allocation16 + $0x50] sm:$0xff]
          %v3024 = vld [vmem:[#allocation16 + $0x58] sm:$0xff]
          %v3025 = vld [vmem:[#allocation16 + $0x60] sm:$0xff]
          %v3026 = vld [vmem:[#allocation16 + $0x68] sm:$0xff]
          %v3027 = vld [vmem:[#allocation16 + $0x70] sm:$0xff]
          %v3028 = vld [vmem:[#allocation16 + $0x78] sm:$0xff]
          %v3029 = vld [vmem:[#allocation16 + $0x80] sm:$0xff]
          %v3030 = vld [vmem:[#allocation16 + $0x88] sm:$0xff]
          %v3031 = vld [vmem:[#allocation16 + $0x90] sm:$0xff]
          %v3032 = vld [vmem:[#allocation16 + $0x98] sm:$0xff]
          %v3033 = vld [vmem:[#allocation16 + $0xa0] sm:$0xff]
          %v3034 = vld [vmem:[#allocation16 + $0xa8] sm:$0xff]
          %v3035 = vld [vmem:[#allocation16 + $0xb0] sm:$0xff]
          %v3036 = vld [vmem:[#allocation16 + $0xb8] sm:$0xff]
          %v3037 = vld [vmem:[#allocation16 + $0xc0] sm:$0xff]
          %v3038 = vld [vmem:[#allocation16 + $0xc8] sm:$0xff]
          %v3039 = vld [vmem:[#allocation16 + $0xd0] sm:$0xff]
          %v3040 = vld [vmem:[#allocation16 + $0xd8] sm:$0xff]
          %v3041 = vld [vmem:[#allocation16 + $0xe0] sm:$0xff]
          %v3042 = vld [vmem:[#allocation16 + $0xe8] sm:$0xff]
          %v3043 = vld [vmem:[#allocation16 + $0xf0] sm:$0xff]
          %v3044 = vld [vmem:[#allocation16 + $0xf8] sm:$0xff]
          %v3045 = vld [vmem:[#allocation16 + $0x100] sm:$0xff]
          %v3046 = vld [vmem:[#allocation16 + $0x108] sm:$0xff]
          %v3047 = vld [vmem:[#allocation16 + $0x110] sm:$0xff]
          %v3048 = vld [vmem:[#allocation16 + $0x118] sm:$0xff]
          %v3049 = vld [vmem:[#allocation16 + $0x120] sm:$0xff]
          %v3050 = vld [vmem:[#allocation16 + $0x128] sm:$0xff]
          %v3051 = vld [vmem:[#allocation16 + $0x130] sm:$0xff]
          %v3052 = vld [vmem:[#allocation16 + $0x138] sm:$0xff]
          %v3053 = vld [vmem:[#allocation16 + $0x140] sm:$0xff]
          %v3054 = vld [vmem:[#allocation16 + $0x148] sm:$0xff]
          %v3055 = vld [vmem:[#allocation16 + $0x150] sm:$0xff]
          %v3056 = vld [vmem:[#allocation16 + $0x158] sm:$0xff]
          %v3057 = vld [vmem:[#allocation16 + $0x160] sm:$0xff]
          %v3058 = vld [vmem:[#allocation16 + $0x168] sm:$0xff]
          %v3059 = vld [vmem:[#allocation16 + $0x170] sm:$0xff]
          %v3060 = vld [vmem:[#allocation16 + $0x178] sm:$0xff]
          %v3061 = vld [vmem:[#allocation16 + $0x180] sm:$0xff]
          %v3062 = vld [vmem:[#allocation16 + $0x188] sm:$0xff]
          %v3063 = vld [vmem:[#allocation16 + $0x190] sm:$0xff]
          %v3064 = vld [vmem:[#allocation16 + $0x198] sm:$0xff]
          %v3065 = vld [vmem:[#allocation16 + $0x1a0] sm:$0xff]
          %v3066 = vld [vmem:[#allocation16 + $0x1a8] sm:$0xff]
          %v3067 = vld [vmem:[#allocation16 + $0x1b0] sm:$0xff]
          %v3068 = vld [vmem:[#allocation16 + $0x1b8] sm:$0xff]
          %v3069 = vld [vmem:[#allocation16 + $0x1c0] sm:$0xff]
          %v3070 = vld [vmem:[#allocation16 + $0x1c8] sm:$0xff]
          %v3071 = vld [vmem:[#allocation16 + $0x1d0] sm:$0xff]
          %v3072 = vld [vmem:[#allocation16 + $0x1d8] sm:$0xff]
          %v3073 = vld [vmem:[#allocation16 + $0x1e0] sm:$0xff]
          %v3074 = vld [vmem:[#allocation16 + $0x1e8] sm:$0xff]
          %v3075 = vld [vmem:[#allocation16 + $0x1f0] sm:$0xff]
          %v3076 = vld [vmem:[#allocation16 + $0x1f8] sm:$0xff]
          %v3077 = vld [vmem:[#allocation16 + $0x200] sm:$0xff]
          %v3078 = vld [vmem:[#allocation16 + $0x208] sm:$0xff]
          %v3079 = vld [vmem:[#allocation16 + $0x210] sm:$0xff]
          %v3080 = vld [vmem:[#allocation16 + $0x218] sm:$0xff]
          %v3081 = vld [vmem:[#allocation16 + $0x220] sm:$0xff]
          %v3082 = vld [vmem:[#allocation16 + $0x228] sm:$0xff]
          %v3083 = vld [vmem:[#allocation16 + $0x230] sm:$0xff]
          %v3084 = vld [vmem:[#allocation16 + $0x238] sm:$0xff]
          %v3085 = vld [vmem:[#allocation16 + $0x240] sm:$0xff]
          %v3086 = vld [vmem:[#allocation16 + $0x248] sm:$0xff]
          %v3087 = vld [vmem:[#allocation16 + $0x250] sm:$0xff]
          %v3088 = vld [vmem:[#allocation16 + $0x258] sm:$0xff]
          %v3089 = vld [vmem:[#allocation16 + $0x260] sm:$0xff]
          %v3090 = vld [vmem:[#allocation16 + $0x268] sm:$0xff]
          %v3091 = vld [vmem:[#allocation16 + $0x270] sm:$0xff]
          %v3092 = vld [vmem:[#allocation16 + $0x278] sm:$0xff]
          %v3093 = vld [vmem:[#allocation16 + $0x280] sm:$0xff]
          %v3094 = vld [vmem:[#allocation16 + $0x288] sm:$0xff]
          %v3095 = vld [vmem:[#allocation16 + $0x290] sm:$0xff]
          %v3096 = vld [vmem:[#allocation16 + $0x298] sm:$0xff]
          %v3097 = vld [vmem:[#allocation16 + $0x2a0] sm:$0xff]
          %v3098 = vld [vmem:[#allocation16 + $0x2a8] sm:$0xff]
          %v3099 = vld [vmem:[#allocation16 + $0x2b0] sm:$0xff]
          %v3100 = vld [vmem:[#allocation16 + $0x2b8] sm:$0xff]
          %v3101 = vld [vmem:[#allocation16 + $0x2c0] sm:$0xff]
          %v3102 = vld [vmem:[#allocation16 + $0x2c8] sm:$0xff]
          %v3103 = vld [vmem:[#allocation16 + $0x2d0] sm:$0xff]
          %v3104 = vld [vmem:[#allocation16 + $0x2d8] sm:$0xff]
          %v3105 = vld [vmem:[#allocation16 + $0x2e0] sm:$0xff]
          %v3106 = vld [vmem:[#allocation16 + $0x2e8] sm:$0xff]
          %v3107 = vld [vmem:[#allocation16 + $0x2f0] sm:$0xff]
          %v3108 = vld [vmem:[#allocation16 + $0x2f8] sm:$0xff]
          %v3109 = vld [vmem:[#allocation16 + $0x300] sm:$0xff]
          %v3110 = vld [vmem:[#allocation16 + $0x308] sm:$0xff]
          %v3111 = vld [vmem:[#allocation16 + $0x310] sm:$0xff]
          %v3112 = vld [vmem:[#allocation16 + $0x318] sm:$0xff]
          %v3113 = vld [vmem:[#allocation16 + $0x320] sm:$0xff]
          %v3114 = vld [vmem:[#allocation16 + $0x328] sm:$0xff]
          %v3115 = vld [vmem:[#allocation16 + $0x330] sm:$0xff]
          %v3116 = vld [vmem:[#allocation16 + $0x338] sm:$0xff]
          %v3117 = vld [vmem:[#allocation16 + $0x340] sm:$0xff]
          %v3118 = vld [vmem:[#allocation16 + $0x348] sm:$0xff]
          %v3119 = vld [vmem:[#allocation16 + $0x350] sm:$0xff]
          %v3120 = vld [vmem:[#allocation16 + $0x358] sm:$0xff]
          %v3121 = vld [vmem:[#allocation16 + $0x360] sm:$0xff]
          %v3122 = vld [vmem:[#allocation16 + $0x368] sm:$0xff]
          %v3123 = vld [vmem:[#allocation16 + $0x370] sm:$0xff]
          %v3124 = vld [vmem:[#allocation16 + $0x378] sm:$0xff]
          %v3125 = vld [vmem:[#allocation16 + $0x380] sm:$0xff]
          %v3126 = vld [vmem:[#allocation16 + $0x388] sm:$0xff]
          %v3127 = vld [vmem:[#allocation16 + $0x390] sm:$0xff]
          %v3128 = vld [vmem:[#allocation16 + $0x398] sm:$0xff]
          %v3129 = vld [vmem:[#allocation16 + $0x3a0] sm:$0xff]
          %v3130 = vld [vmem:[#allocation16 + $0x3a8] sm:$0xff]
          %v3131 = vld [vmem:[#allocation16 + $0x3b0] sm:$0xff]
          %v3132 = vld [vmem:[#allocation16 + $0x3b8] sm:$0xff]
          %v3133 = vld [vmem:[#allocation16 + $0x3c0] sm:$0xff]
          %v3134 = vld [vmem:[#allocation16 + $0x3c8] sm:$0xff]
          %v3135 = vld [vmem:[#allocation16 + $0x3d0] sm:$0xff]
          %v3136 = vld [vmem:[#allocation16 + $0x3d8] sm:$0xff]
          %v3137 = vld [vmem:[#allocation16 + $0x3e0] sm:$0xff]
          %v3138 = vld [vmem:[#allocation16 + $0x3e8] sm:$0xff]
          %v3139 = vld [vmem:[#allocation16 + $0x3f0] sm:$0xff]
          %v3140 = vld [vmem:[#allocation16 + $0x3f8] sm:$0xff]
          %v3141 = vld [vmem:[#allocation17] sm:$0x1]
          %v3143 = vlaneseq
          %v3144 = vshrl.u32 %v3143, 7
          %v3145 = vsub.s32 0, %v3144
          %v3146 = vrot.slane %v3141, %v3145
          %3148 = vmatprep.subr.mxu0 0.0
          %3149 = vmatpush1.msra.mxu0 %v3013
          %3150 = vmatprep.subr.mxu0 0.0
          %3151 = vmatpush1.msra.mxu0 %v3014
          %3152 = vmatprep.subr.mxu0 0.0
          %3153 = vmatpush1.msra.mxu0 %v3015
          %3154 = vmatprep.subr.mxu0 0.0
          %3155 = vmatpush1.msra.mxu0 %v3016
          %3156 = vmatprep.subr.mxu0 0.0
          %3157 = vmatpush1.msra.mxu0 %v3017
          %3158 = vmatprep.subr.mxu0 0.0
          %3159 = vmatpush1.msra.mxu0 %v3018
          %3160 = vmatprep.subr.mxu0 0.0
          %3161 = vmatpush1.msra.mxu0 %v3019
          %3162 = vmatprep.subr.mxu0 0.0
          %3163 = vmatpush1.msra.mxu0 %v3020
          %3164 = vmatprep.subr.mxu0 0.0
          %3165 = vmatpush1.msra.mxu0 %v3021
          %3166 = vmatprep.subr.mxu0 0.0
          %3167 = vmatpush1.msra.mxu0 %v3022
          %3168 = vmatprep.subr.mxu0 0.0
          %3169 = vmatpush1.msra.mxu0 %v3023
          %3170 = vmatprep.subr.mxu0 0.0
          %3171 = vmatpush1.msra.mxu0 %v3024
          %3172 = vmatprep.subr.mxu0 0.0
          %3173 = vmatpush1.msra.mxu0 %v3025
          %3174 = vmatprep.subr.mxu0 0.0
          %3175 = vmatpush1.msra.mxu0 %v3026
          %3176 = vmatprep.subr.mxu0 0.0
          %3177 = vmatpush1.msra.mxu0 %v3027
          %3178 = vmatprep.subr.mxu0 0.0
          %3179 = vmatpush1.msra.mxu0 %v3028
          %3180 = vmatprep.subr.mxu0 0.0
          %3181 = vmatpush1.msra.mxu0 %v3029
          %3182 = vmatprep.subr.mxu0 0.0
          %3183 = vmatpush1.msra.mxu0 %v3030
          %3184 = vmatprep.subr.mxu0 0.0
          %3185 = vmatpush1.msra.mxu0 %v3031
          %3186 = vmatprep.subr.mxu0 0.0
          %3187 = vmatpush1.msra.mxu0 %v3032
          %3188 = vmatprep.subr.mxu0 0.0
          %3189 = vmatpush1.msra.mxu0 %v3033
          %3190 = vmatprep.subr.mxu0 0.0
          %3191 = vmatpush1.msra.mxu0 %v3034
          %3192 = vmatprep.subr.mxu0 0.0
          %3193 = vmatpush1.msra.mxu0 %v3035
          %3194 = vmatprep.subr.mxu0 0.0
          %3195 = vmatpush1.msra.mxu0 %v3036
          %3196 = vmatprep.subr.mxu0 0.0
          %3197 = vmatpush1.msra.mxu0 %v3037
          %3198 = vmatprep.subr.mxu0 0.0
          %3199 = vmatpush1.msra.mxu0 %v3038
          %3200 = vmatprep.subr.mxu0 0.0
          %3201 = vmatpush1.msra.mxu0 %v3039
          %3202 = vmatprep.subr.mxu0 0.0
          %3203 = vmatpush1.msra.mxu0 %v3040
          %3204 = vmatprep.subr.mxu0 0.0
          %3205 = vmatpush1.msra.mxu0 %v3041
          %3206 = vmatprep.subr.mxu0 0.0
          %3207 = vmatpush1.msra.mxu0 %v3042
          %3208 = vmatprep.subr.mxu0 0.0
          %3209 = vmatpush1.msra.mxu0 %v3043
          %3210 = vmatprep.subr.mxu0 0.0
          %3211 = vmatpush1.msra.mxu0 %v3044
          %3212 = vmatprep.mubr.f32.mxu0 %v3006
          %3213 = vmatmul.mubr.f32.gmra.mrb[0].mxu0 %v3005
          %v3214 = vpop.f32.mrb[0].mxu0
          %v3215 = vadd.f32 %v3146, %v3214
          %v3216 = vpop.f32.mrb[0].mxu0
          %3217 = vdwg.mxu0
          %3218 = vmatprep.subr.mxu0 0.0
          %3219 = vmatpush1.msra.mxu0 %v3045
          %3220 = vmatprep.subr.mxu0 0.0
          %3221 = vmatpush1.msra.mxu0 %v3046
          %3222 = vmatprep.subr.mxu0 0.0
          %3223 = vmatpush1.msra.mxu0 %v3047
          %3224 = vmatprep.subr.mxu0 0.0
          %3225 = vmatpush1.msra.mxu0 %v3048
          %3226 = vmatprep.subr.mxu0 0.0
          %3227 = vmatpush1.msra.mxu0 %v3049
          %3228 = vmatprep.subr.mxu0 0.0
          %3229 = vmatpush1.msra.mxu0 %v3050
          %3230 = vmatprep.subr.mxu0 0.0
          %3231 = vmatpush1.msra.mxu0 %v3051
          %3232 = vmatprep.subr.mxu0 0.0
          %3233 = vmatpush1.msra.mxu0 %v3052
          %3234 = vmatprep.subr.mxu0 0.0
          %3235 = vmatpush1.msra.mxu0 %v3053
          %3236 = vmatprep.subr.mxu0 0.0
          %3237 = vmatpush1.msra.mxu0 %v3054
          %3238 = vmatprep.subr.mxu0 0.0
          %3239 = vmatpush1.msra.mxu0 %v3055
          %3240 = vmatprep.subr.mxu0 0.0
          %3241 = vmatpush1.msra.mxu0 %v3056
          %3242 = vmatprep.subr.mxu0 0.0
          %3243 = vmatpush1.msra.mxu0 %v3057
          %3244 = vmatprep.subr.mxu0 0.0
          %3245 = vmatpush1.msra.mxu0 %v3058
          %3246 = vmatprep.subr.mxu0 0.0
          %3247 = vmatpush1.msra.mxu0 %v3059
          %3248 = vmatprep.subr.mxu0 0.0
          %3249 = vmatpush1.msra.mxu0 %v3060
          %3250 = vmatprep.subr.mxu0 0.0
          %3251 = vmatpush1.msra.mxu0 %v3061
          %3252 = vmatprep.subr.mxu0 0.0
          %3253 = vmatpush1.msra.mxu0 %v3062
          %3254 = vmatprep.subr.mxu0 0.0
          %3255 = vmatpush1.msra.mxu0 %v3063
          %3256 = vmatprep.subr.mxu0 0.0
          %3257 = vmatpush1.msra.mxu0 %v3064
          %3258 = vmatprep.subr.mxu0 0.0
          %3259 = vmatpush1.msra.mxu0 %v3065
          %3260 = vmatprep.subr.mxu0 0.0
          %3261 = vmatpush1.msra.mxu0 %v3066
          %3262 = vmatprep.subr.mxu0 0.0
          %3263 = vmatpush1.msra.mxu0 %v3067
          %3264 = vmatprep.subr.mxu0 0.0
          %3265 = vmatpush1.msra.mxu0 %v3068
          %3266 = vmatprep.subr.mxu0 0.0
          %3267 = vmatpush1.msra.mxu0 %v3069
          %3268 = vmatprep.subr.mxu0 0.0
          %3269 = vmatpush1.msra.mxu0 %v3070
          %3270 = vmatprep.subr.mxu0 0.0
          %3271 = vmatpush1.msra.mxu0 %v3071
          %3272 = vmatprep.subr.mxu0 0.0
          %3273 = vmatpush1.msra.mxu0 %v3072
          %3274 = vmatprep.subr.mxu0 0.0
          %3275 = vmatpush1.msra.mxu0 %v3073
          %3276 = vmatprep.subr.mxu0 0.0
          %3277 = vmatpush1.msra.mxu0 %v3074
          %3278 = vmatprep.subr.mxu0 0.0
          %3279 = vmatpush1.msra.mxu0 %v3075
          %3280 = vmatprep.subr.mxu0 0.0
          %3281 = vmatpush1.msra.mxu0 %v3076
          %3282 = vmatprep.mubr.f32.mxu0 %v3008
          %3283 = vmatmul.mubr.f32.gmra.mrb[0].mxu0 %v3007
          %v3284 = vpop.f32.mrb[0].mxu0
          %v3285 = vadd.f32 %v3215, %v3284
          %v3286 = vpop.f32.mrb[0].mxu0
          %3287 = vdwg.mxu0
          %3288 = vmatprep.subr.mxu0 0.0
          %3289 = vmatpush1.msra.mxu0 %v3077
          %3290 = vmatprep.subr.mxu0 0.0
          %3291 = vmatpush1.msra.mxu0 %v3078
          %3292 = vmatprep.subr.mxu0 0.0
          %3293 = vmatpush1.msra.mxu0 %v3079
          %3294 = vmatprep.subr.mxu0 0.0
          %3295 = vmatpush1.msra.mxu0 %v3080
          %3296 = vmatprep.subr.mxu0 0.0
          %3297 = vmatpush1.msra.mxu0 %v3081
          %3298 = vmatprep.subr.mxu0 0.0
          %3299 = vmatpush1.msra.mxu0 %v3082
          %3300 = vmatprep.subr.mxu0 0.0
          %3301 = vmatpush1.msra.mxu0 %v3083
          %3302 = vmatprep.subr.mxu0 0.0
          %3303 = vmatpush1.msra.mxu0 %v3084
          %3304 = vmatprep.subr.mxu0 0.0
          %3305 = vmatpush1.msra.mxu0 %v3085
          %3306 = vmatprep.subr.mxu0 0.0
          %3307 = vmatpush1.msra.mxu0 %v3086
          %3308 = vmatprep.subr.mxu0 0.0
          %3309 = vmatpush1.msra.mxu0 %v3087
          %3310 = vmatprep.subr.mxu0 0.0
          %3311 = vmatpush1.msra.mxu0 %v3088
          %3312 = vmatprep.subr.mxu0 0.0
          %3313 = vmatpush1.msra.mxu0 %v3089
          %3314 = vmatprep.subr.mxu0 0.0
          %3315 = vmatpush1.msra.mxu0 %v3090
          %3316 = vmatprep.subr.mxu0 0.0
          %3317 = vmatpush1.msra.mxu0 %v3091
          %3318 = vmatprep.subr.mxu0 0.0
          %3319 = vmatpush1.msra.mxu0 %v3092
          %3320 = vmatprep.subr.mxu0 0.0
          %3321 = vmatpush1.msra.mxu0 %v3093
          %3322 = vmatprep.subr.mxu0 0.0
          %3323 = vmatpush1.msra.mxu0 %v3094
          %3324 = vmatprep.subr.mxu0 0.0
          %3325 = vmatpush1.msra.mxu0 %v3095
          %3326 = vmatprep.subr.mxu0 0.0
          %3327 = vmatpush1.msra.mxu0 %v3096
          %3328 = vmatprep.subr.mxu0 0.0
          %3329 = vmatpush1.msra.mxu0 %v3097
          %3330 = vmatprep.subr.mxu0 0.0
          %3331 = vmatpush1.msra.mxu0 %v3098
          %3332 = vmatprep.subr.mxu0 0.0
          %3333 = vmatpush1.msra.mxu0 %v3099
          %3334 = vmatprep.subr.mxu0 0.0
          %3335 = vmatpush1.msra.mxu0 %v3100
          %3336 = vmatprep.subr.mxu0 0.0
          %3337 = vmatpush1.msra.mxu0 %v3101
          %3338 = vmatprep.subr.mxu0 0.0
          %3339 = vmatpush1.msra.mxu0 %v3102
          %3340 = vmatprep.subr.mxu0 0.0
          %3341 = vmatpush1.msra.mxu0 %v3103
          %3342 = vmatprep.subr.mxu0 0.0
          %3343 = vmatpush1.msra.mxu0 %v3104
          %3344 = vmatprep.subr.mxu0 0.0
          %3345 = vmatpush1.msra.mxu0 %v3105
          %3346 = vmatprep.subr.mxu0 0.0
          %3347 = vmatpush1.msra.mxu0 %v3106
          %3348 = vmatprep.subr.mxu0 0.0
          %3349 = vmatpush1.msra.mxu0 %v3107
          %3350 = vmatprep.subr.mxu0 0.0
          %3351 = vmatpush1.msra.mxu0 %v3108
          %3352 = vmatprep.mubr.f32.mxu0 %v3010
          %3353 = vmatmul.mubr.f32.gmra.mrb[0].mxu0 %v3009
          %v3354 = vpop.f32.mrb[0].mxu0
          %v3355 = vadd.f32 %v3285, %v3354
          %v3356 = vpop.f32.mrb[0].mxu0
          %3357 = vdwg.mxu0
          %3358 = vmatprep.subr.mxu0 0.0
          %3359 = vmatpush1.msra.mxu0 %v3109
          %3360 = vmatprep.subr.mxu0 0.0
          %3361 = vmatpush1.msra.mxu0 %v3110
          %3362 = vmatprep.subr.mxu0 0.0
          %3363 = vmatpush1.msra.mxu0 %v3111
          %3364 = vmatprep.subr.mxu0 0.0
          %3365 = vmatpush1.msra.mxu0 %v3112
          %3366 = vmatprep.subr.mxu0 0.0
          %3367 = vmatpush1.msra.mxu0 %v3113
          %3368 = vmatprep.subr.mxu0 0.0
          %3369 = vmatpush1.msra.mxu0 %v3114
          %3370 = vmatprep.subr.mxu0 0.0
          %3371 = vmatpush1.msra.mxu0 %v3115
          %3372 = vmatprep.subr.mxu0 0.0
          %3373 = vmatpush1.msra.mxu0 %v3116
          %3374 = vmatprep.subr.mxu0 0.0
          %3375 = vmatpush1.msra.mxu0 %v3117
          %3376 = vmatprep.subr.mxu0 0.0
          %3377 = vmatpush1.msra.mxu0 %v3118
          %3378 = vmatprep.subr.mxu0 0.0
          %3379 = vmatpush1.msra.mxu0 %v3119
          %3380 = vmatprep.subr.mxu0 0.0
          %3381 = vmatpush1.msra.mxu0 %v3120
          %3382 = vmatprep.subr.mxu0 0.0
          %3383 = vmatpush1.msra.mxu0 %v3121
          %3384 = vmatprep.subr.mxu0 0.0
          %3385 = vmatpush1.msra.mxu0 %v3122
          %3386 = vmatprep.subr.mxu0 0.0
          %3387 = vmatpush1.msra.mxu0 %v3123
          %3388 = vmatprep.subr.mxu0 0.0
          %3389 = vmatpush1.msra.mxu0 %v3124
          %3390 = vmatprep.subr.mxu0 0.0
          %3391 = vmatpush1.msra.mxu0 %v3125
          %3392 = vmatprep.subr.mxu0 0.0
          %3393 = vmatpush1.msra.mxu0 %v3126
          %3394 = vmatprep.subr.mxu0 0.0
          %3395 = vmatpush1.msra.mxu0 %v3127
          %3396 = vmatprep.subr.mxu0 0.0
          %3397 = vmatpush1.msra.mxu0 %v3128
          %3398 = vmatprep.subr.mxu0 0.0
          %3399 = vmatpush1.msra.mxu0 %v3129
          %3400 = vmatprep.subr.mxu0 0.0
          %3401 = vmatpush1.msra.mxu0 %v3130
          %3402 = vmatprep.subr.mxu0 0.0
          %3403 = vmatpush1.msra.mxu0 %v3131
          %3404 = vmatprep.subr.mxu0 0.0
          %3405 = vmatpush1.msra.mxu0 %v3132
          %3406 = vmatprep.subr.mxu0 0.0
          %3407 = vmatpush1.msra.mxu0 %v3133
          %3408 = vmatprep.subr.mxu0 0.0
          %3409 = vmatpush1.msra.mxu0 %v3134
          %3410 = vmatprep.subr.mxu0 0.0
          %3411 = vmatpush1.msra.mxu0 %v3135
          %3412 = vmatprep.subr.mxu0 0.0
          %3413 = vmatpush1.msra.mxu0 %v3136
          %3414 = vmatprep.subr.mxu0 0.0
          %3415 = vmatpush1.msra.mxu0 %v3137
          %3416 = vmatprep.subr.mxu0 0.0
          %3417 = vmatpush1.msra.mxu0 %v3138
          %3418 = vmatprep.subr.mxu0 0.0
          %3419 = vmatpush1.msra.mxu0 %v3139
          %3420 = vmatprep.subr.mxu0 0.0
          %3421 = vmatpush1.msra.mxu0 %v3140
          %3422 = vmatprep.mubr.f32.mxu0 %v3012
          %3423 = vmatmul.mubr.f32.gmra.mrb[0].mxu0 %v3011
          %v3424 = vpop.f32.mrb[0].mxu0
          %v3425 = vadd.f32 %v3355, %v3424
          %v3426 = vpop.f32.mrb[0].mxu0
          %3427 = vdwg.mxu0
          %v3428 = vld [vmem:[#allocation19] sm:$0x1]
          %v3430 = vlaneseq
          %v3431 = vshrl.u32 %v3430, 7
          %v3432 = vsub.s32 0, %v3431
          %v3433 = vrot.slane %v3428, %v3432
          %v3435 = vmul.f32 %v3425, %v3433
          %v3436 = vld [vmem:[#allocation20] sm:$0x1]
          %v3438 = vlaneseq
          %v3439 = vshrl.u32 %v3438, 7
          %v3440 = vsub.s32 0, %v3439
          %v3441 = vrot.slane %v3436, %v3440
          %v3443 = vadd.f32 %v3435, %v3441
          %v3444 = vtanh.pop %v3443
          %v3445 = vmul.f32 %v3444, %v3444
          %3446 = vadd.xlane.f32.xlu0 %v3445
          %v3447 = vpop.xlane.xlu0 %3446
          %v3448 = vmax.f32 %v3447, 1e-24
          %v3449 = vrsqrt.pop %v3448
          %v3450 = vmul.f32 %v3444, %v3449
          %3451 = vst [vmem:[%s449] sm:$0xff] %v3450
        $region119: #{tpu_custom_call.1} parent=55 // pred_fallthru
          _
        %s3452 = sand.u32 %s251, 1
        %s3453 = scalar_lea.sflag [#allocation10], %s3452
        %s3454 = sand.u32 %s251, 1
        %s3455 = smul.addr %s3454, 8
        %s3456 = scalar_lea.vmem [#allocation22], %s3455
        // Predicated region
        $region120: #{tpu_custom_call.1} parent=55 // pred_check
          %p3457 = pneg %p261
        $region121: #{tpu_custom_call.1} parent=55 // pred_check_branch
          %3459 = sbr.rel (%p3457) target = $region123
        $region122: #{tpu_custom_call.1} parent=55 // pred_region
          %s3461 = ssub.s32 128, 128
          %3462 = vsyncadd %s3453, %s3461
          %s3463 = smul.addr %s41, 128
          %s3464 = scalar_lea.hbm %s12, %s3463
          %s3466 = sshll.u32 %s3456, 4
          %s3467 = int_to_ptr.vmem [resolvable:$true] %s3466
          %3469 = dma.vmem_to_hbm [thread:$0]  %s3467, 128, %s3464, %s3453
        $region123: #{tpu_custom_call.1} parent=55 // pred_fallthru
          _
      $region56: #{tpu_custom_call.1} parent=5 // pred_fallthru
        _
      %p3470 = scmp.le.s32.totalorder 2, %s32
      // Predicated region
      $region124: #{tpu_custom_call.1} parent=5 // pred_check
        %p3471 = pneg %p3470
      $region125: #{tpu_custom_call.1} parent=5 // pred_check_branch
        %3473 = sbr.rel (%p3471) target = $region127
      $region126: #{tpu_custom_call.1} parent=5 // pred_region
        %s3474 = ssub.s32 %s32, 2
        // Predicated region
        $region128: #{tpu_custom_call.1} parent=126 // pred_check
          %p3475 = pneg %p267
        $region129: #{tpu_custom_call.1} parent=126 // pred_check_branch
          %3477 = sbr.rel (%p3475) target = $region131
        $region130: #{tpu_custom_call.1} parent=126 // pred_region
          %s3478 = sand.u32 %s252, 1
          %s3479 = scalar_lea.sflag [#allocation10], %s3478
          %s3480 = sand.u32 %s252, 1
          %s3481 = smul.addr %s3480, 8
          %s3482 = scalar_lea.vmem [#allocation22], %s3481
          %3483 = dma.done %s3479, 128
        $region131: #{tpu_custom_call.1} parent=126 // pred_fallthru
          _
      $region127: #{tpu_custom_call.1} parent=5 // pred_fallthru
        _
    $region6: #{tpu_custom_call.1} parent=1 // loop_footer
      %s36 = sadd.s32 1, %s32
    $region7: #{tpu_custom_call.1} parent=1 // loop_footer_branch
      %31 = sbr.rel target = $region3
    $region8: #{tpu_custom_call.1} parent=1 // loop_exit
      _
    %3484 = vsyncpa [#allocation9], 1
    %s3485 = scalar_lea.sflag [#allocation9], 1
    %3486 = vsyncpa %s3485, 1
    %3487 = vsyncpa [#allocation12], 1
    %3488 = vsyncpa [#allocation15], 1
    %3489 = vsyncpa [#allocation18], 1
    %3490 = vsyncpa [#allocation21], 1
    %3491 = vsyncpa [#allocation10], 1
    %s3492 = scalar_lea.sflag [#allocation10], 1
    %3493 = vsyncpa %s3492, 1
  %3494 = vsyncmov [#allocation4]
  %s3495 = vpop.sfrf %3494
  %p3496 = scmp.eq.s32.totalorder %s3495, 0
  %p3497 = pneg %p3496
  %3499 = shalt.err (%p3497)
  %s3500 = scalar_lea.sflag [#allocation4], 1
  %3501 = vsyncmov %s3500
  %s3502 = vpop.sfrf %3501
  %p3503 = scmp.eq.s32.totalorder %s3502, 0
  %p3504 = pneg %p3503
  %3506 = shalt.err (%p3504)

</llo_original>
